<compile_context>
chip_gen: v7x
topology: tpu7x:2x2x1
jax: 0.10.0
libtpu: 0.0.40
codegen_flags: <defaults>
</compile_context>

<pallas_src>
import math

import jax
import jax.numpy as jnp
from jax.experimental import pallas as pl
from jax.experimental.pallas import tpu as pltpu

# ---- synthetic tiny-BERT config (BertModel.from_pretrained replaced by random init) ----
VOCAB = 64
TYPE_VOCAB = 2
MAX_POS = 16
HIDDEN = 32
NUM_HEADS = 4
HEAD_DIM = HIDDEN // NUM_HEADS
INTERMEDIATE = 64
NUM_LAYERS = 2
OUT_DIM = 32          # params['out_dim'], add_linear=True
SEQ = 8
BATCH = 2
LN_EPS = 1e-12


# ----------------------------- in-kernel helpers -----------------------------
def _layer_norm(x, gamma, beta):
    mu = jnp.mean(x, axis=-1, keepdims=True)
    var = jnp.mean(jnp.square(x - mu), axis=-1, keepdims=True)
    return (x - mu) * jax.lax.rsqrt(var + LN_EPS) * gamma + beta


def _gelu(x):
    # tanh-approx GELU (matches HF "gelu_new"; exact-erf gelu differs by <1e-3)
    c = math.sqrt(2.0 / math.pi)
    return 0.5 * x * (1.0 + jnp.tanh(c * (x + 0.044715 * x * x * x)))


# ----------------------------- Pallas kernels -----------------------------
def bert_layers_kernel(x_in_ref, nb_ref,
                       wqkv_ref, bqkv_ref, wo_ref, bo_ref, g1_ref, be1_ref,
                       w1_ref, b1_ref, w2_ref, b2_ref, g2_ref, be2_ref,
                       out_ref, x_scr, ctx_scr):
    """All BERT encoder layers fused; grid axis = layer, activations carried in VMEM."""
    l = pl.program_id(0)

    @pl.when(l == 0)
    def _():
        x_scr[...] = x_in_ref[...]

    x3 = x_scr[...]                                    # (BB, S, H) f32
    BB, S, H = x3.shape
    x2 = x3.reshape(BB * S, H)
    nb = nb_ref[...]                                   # (BB, 1, S) additive attention bias

    # --- fused QKV projection: one (BB*S, H) @ (H, 3H) MXU op ---
    qkv = jnp.dot(x2.astype(jnp.bfloat16), wqkv_ref[0],
                  preferred_element_type=jnp.float32) + bqkv_ref[0]      # (BB*S, 3H)
    q3 = qkv[:, 0:H].reshape(BB, S, H)
    k3 = qkv[:, H:2 * H].reshape(BB, S, H)
    v3 = qkv[:, 2 * H:3 * H].reshape(BB, S, H)

    # --- multi-head attention; per-head contexts land in disjoint lane slices ---
    scale = 1.0 / math.sqrt(HEAD_DIM)
    for h in range(NUM_HEADS):                          # static loop over heads
        lo = h * HEAD_DIM
        qh = q3[:, :, lo:lo + HEAD_DIM].astype(jnp.bfloat16)
        kh = k3[:, :, lo:lo + HEAD_DIM].astype(jnp.bfloat16)
        vh = v3[:, :, lo:lo + HEAD_DIM].astype(jnp.bfloat16)
        s = jnp.einsum('bqd,bkd->bqk', qh, kh,
                       preferred_element_type=jnp.float32) * scale + nb  # (BB, S, S)
        s = s - jnp.max(s, axis=-1, keepdims=True)
        p = jnp.exp(s)
        p = p * pl.reciprocal(jnp.sum(p, axis=-1, keepdims=True), approx=True)
        ctx = jnp.einsum('bqk,bkd->bqd', p.astype(jnp.bfloat16), vh,
                         preferred_element_type=jnp.float32)             # (BB, S, HD)
        ctx_scr[:, lo:lo + HEAD_DIM] = ctx.reshape(BB * S, HEAD_DIM)

    # --- output projection hoisted out of the head loop: one (BB*S,H)@(H,H) matmul ---
    attn = jnp.dot(ctx_scr[...].astype(jnp.bfloat16), wo_ref[0],
                   preferred_element_type=jnp.float32) + bo_ref[0]       # (BB*S, H)

    h1 = _layer_norm(x2 + attn, g1_ref[0], be1_ref[0])
    ff = jnp.dot(h1.astype(jnp.bfloat16), w1_ref[0],
                 preferred_element_type=jnp.float32) + b1_ref[0]
    ff = _gelu(ff)
    ff = jnp.dot(ff.astype(jnp.bfloat16), w2_ref[0],
                 preferred_element_type=jnp.float32) + b2_ref[0]
    y2 = _layer_norm(h1 + ff, g2_ref[0], be2_ref[0])
    y3 = y2.reshape(BB, S, H)

    x_scr[...] = y3                                     # carry to next layer (VMEM-resident)

    @pl.when(l == pl.num_programs(0) - 1)
    def _():
        out_ref[...] = y3


def head_score_kernel(cls_ref, wp_ref, bp_ref, wac_ref, bac_ref, wae_ref, bae_ref,
                      scores_ref, loss_ref):
    """pooler(tanh) -> dropout(id, eval) -> per-encoder additional_linear -> scores -> CE."""
    cls = cls_ref[...]                                  # (2B, H), ctxt rows first
    BB = cls.shape[0]
    B = BB // 2
    pooled = jnp.tanh(jnp.dot(cls.astype(jnp.bfloat16), wp_ref[...],
                              preferred_element_type=jnp.float32) + bp_ref[...])
    emb_ctxt = jnp.dot(pooled[:B].astype(jnp.bfloat16), wac_ref[...],
                       preferred_element_type=jnp.float32) + bac_ref[...]
    emb_cand = jnp.dot(pooled[B:].astype(jnp.bfloat16), wae_ref[...],
                       preferred_element_type=jnp.float32) + bae_ref[...]

    scores = jax.lax.dot_general(emb_ctxt, emb_cand, (((1,), (1,)), ((), ())),
                                 preferred_element_type=jnp.float32)     # (B, B)
    scores_ref[...] = scores

    m = jnp.max(scores, axis=-1, keepdims=True)
    lse = jnp.log(jnp.sum(jnp.exp(scores - m), axis=-1, keepdims=True)) + m
    row = jax.lax.broadcasted_iota(jnp.int32, scores.shape, 0)
    col = jax.lax.broadcasted_iota(jnp.int32, scores.shape, 1)
    diag = jnp.sum(jnp.where(row == col, scores, 0.0), axis=-1, keepdims=True)
    loss_ref[...] = jnp.mean(lse - diag, keepdims=True)                  # (1, 1)


# ----------------------------- wrappers -----------------------------
def _const_spec(arr):
    nd = arr.ndim
    return pl.BlockSpec(arr.shape, lambda i, _nd=nd: (0,) * _nd)


def bert_layers(x, neg_bias, lp):
    BB, S, H = x.shape
    L = lp['wqkv'].shape[0]
    weights = (lp['wqkv'], lp['bqkv'], lp['wo'], lp['bo'], lp['ln1_g'], lp['ln1_b'],
               lp['w1'], lp['b1'], lp['w2'], lp['b2'], lp['ln2_g'], lp['ln2_b'])

    def wspec(arr):
        nd = arr.ndim
        return pl.BlockSpec((1,) + arr.shape[1:],
                            lambda l, _n=nd: (l,) + (0,) * (_n - 1))

    in_specs = [pl.BlockSpec((BB, S, H), lambda l: (0, 0, 0)),
                pl.BlockSpec(neg_bias.shape, lambda l: (0, 0, 0))] + \
               [wspec(w) for w in weights]
    return pl.pallas_call(
        bert_layers_kernel,
        out_shape=jax.ShapeDtypeStruct((BB, S, H), jnp.float32),
        grid=(L,),
        in_specs=in_specs,
        out_specs=pl.BlockSpec((BB, S, H), lambda l: (0, 0, 0)),
        scratch_shapes=[pltpu.VMEM((BB, S, H), jnp.float32),     # activation carry
                        pltpu.VMEM((BB * S, H), jnp.float32)],   # per-head context buffer
        compiler_params=pltpu.CompilerParams(
            dimension_semantics=("arbitrary",)),                 # carried state across layers
    )(x, neg_bias, *weights)


def head_and_score(cls_all, hp):
    BB, _ = cls_all.shape
    B = BB // 2
    args = (cls_all, hp['wp'], hp['bp'], hp['wa_c'], hp['ba_c'], hp['wa_e'], hp['ba_e'])
    scores, loss = pl.pallas_call(
        head_score_kernel,
        out_shape=(jax.ShapeDtypeStruct((B, B), jnp.float32),
                   jax.ShapeDtypeStruct((1, 1), jnp.float32)),
        grid=(1,),
        in_specs=[_const_spec(a) for a in args],
        out_specs=(pl.BlockSpec((B, B), lambda i: (0, 0)),
                   pl.BlockSpec((1, 1), lambda i: (0, 0))),
    )(*args)
    return scores, loss[0, 0]


# ----------------------------- glue (embeddings / plumbing) -----------------------------
def _layer_norm_jax(x, gamma, beta):
    mu = jnp.mean(x, axis=-1, keepdims=True)
    var = jnp.mean(jnp.square(x - mu), axis=-1, keepdims=True)
    return (x - mu) * jax.lax.rsqrt(var + LN_EPS) * gamma + beta


def bert_embeddings(token_ids, token_type_ids, p):
    # TODO(synk): embedding-table gathers stay in plain JAX glue (no clean tiny-table Pallas gather).
    B, S = token_ids.shape
    we = jnp.take(p['word_emb'], token_ids, axis=0)          # (B, S, H)
    pe = p['pos_emb'][:S][None, :, :]                        # (1, S, H)
    te = jnp.take(p['type_emb'], token_type_ids, axis=0)     # (B, S, H)
    return _layer_norm_jax(we + pe + te, p['emb_ln_g'], p['emb_ln_b'])


def biencoder_ranker_forward(params,
                             mention_input_ids, mention_attention_mask, mention_token_type_ids,
                             entity_input_ids, entity_attention_mask, entity_token_type_ids,
                             label_input=None):
    # Shared BERT weights -> run both encoders as one concatenated batch (ctxt rows first).
    ids = jnp.concatenate([mention_input_ids, entity_input_ids], axis=0)
    types = jnp.concatenate([mention_token_type_ids, entity_token_type_ids], axis=0)
    mask = jnp.concatenate([mention_attention_mask, entity_attention_mask], axis=0)

    x = bert_embeddings(ids, types, params['bert'])                      # (2B, S, H)
    neg_bias = (1.0 - mask.astype(jnp.float32))[:, None, :] * -10000.0   # (2B, 1, S)
    hidden = bert_layers(x, neg_bias, params['bert']['layers'])
    cls_all = hidden[:, 0, :]                                            # (2B, H) CLS hidden
    scores, loss = head_and_score(cls_all, params['heads'])
    # TODO(synk): label_input branch (BCEWithLogitsLoss) not implemented.
    return loss, scores


# ----------------------------- deterministic parameter init -----------------------------
def init_params(key):
    kit = iter(jax.random.split(key, 32))

    def w(shape, dtype=jnp.float32):
        return (jax.random.normal(next(kit), shape, jnp.float32) * 0.02).astype(dtype)

    def zeros(shape):
        return jnp.zeros(shape, jnp.float32)

    L = NUM_LAYERS
    # Per-layer weights stacked along a leading layer axis; matmul weights stored bf16
    # (MXU inputs), biases / LayerNorm params f32.
    layers = dict(
        wqkv=w((L, HIDDEN, 3 * HIDDEN), jnp.bfloat16), bqkv=zeros((L, 1, 3 * HIDDEN)),
        wo=w((L, HIDDEN, HIDDEN), jnp.bfloat16), bo=zeros((L, 1, HIDDEN)),
        ln1_g=jnp.ones((L, 1, HIDDEN), jnp.float32), ln1_b=zeros((L, 1, HIDDEN)),
        w1=w((L, HIDDEN, INTERMEDIATE), jnp.bfloat16), b1=zeros((L, 1, INTERMEDIATE)),
        w2=w((L, INTERMEDIATE, HIDDEN), jnp.bfloat16), b2=zeros((L, 1, HIDDEN)),
        ln2_g=jnp.ones((L, 1, HIDDEN), jnp.float32), ln2_b=zeros((L, 1, HIDDEN)),
    )
    bert = dict(
        word_emb=w((VOCAB, HIDDEN)),
        pos_emb=w((MAX_POS, HIDDEN)),
        type_emb=w((TYPE_VOCAB, HIDDEN)),
        emb_ln_g=jnp.ones((1, HIDDEN), jnp.float32), emb_ln_b=zeros((1, HIDDEN)),
        layers=layers,
    )
    # ctxt_bert and cand_bert are both from_pretrained(same model) -> identical weights at
    # init (shared here); each BertEncoder has its own randomly-initialized additional_linear.
    heads = dict(
        wp=w((HIDDEN, HIDDEN), jnp.bfloat16), bp=zeros((1, HIDDEN)),
        wa_c=w((HIDDEN, OUT_DIM), jnp.bfloat16), ba_c=zeros((1, OUT_DIM)),
        wa_e=w((HIDDEN, OUT_DIM), jnp.bfloat16), ba_e=zeros((1, OUT_DIM)),
    )
    return dict(bert=bert, heads=heads)


# ----------------------------- main -----------------------------
if __name__ == "__main__":
    key = jax.random.PRNGKey(0)
    pkey, dkey = jax.random.split(key)
    params = init_params(pkey)

    k1, k2 = jax.random.split(dkey)
    mention_input_ids = jax.random.randint(k1, (BATCH, SEQ), 1, VOCAB, dtype=jnp.int32)
    entity_input_ids = jax.random.randint(k2, (BATCH, SEQ), 1, VOCAB, dtype=jnp.int32)
    # second mention padded in last two positions to exercise the attention mask
    mention_attention_mask = jnp.concatenate(
        [jnp.ones((BATCH, SEQ - 2), jnp.int32),
         jnp.array([[1, 1], [0, 0]], jnp.int32)], axis=1)
    entity_attention_mask = jnp.ones((BATCH, SEQ), jnp.int32)
    mention_token_type_ids = jnp.zeros((BATCH, SEQ), jnp.int32)
    entity_token_type_ids = jnp.zeros((BATCH, SEQ), jnp.int32)

    loss, scores = biencoder_ranker_forward(
        params,
        mention_input_ids, mention_attention_mask, mention_token_type_ids,
        entity_input_ids, entity_attention_mask, entity_token_type_ids,
        label_input=None)

    jax.block_until_ready(loss)
    jax.block_until_ready(scores)
    assert scores.shape == (BATCH, BATCH)
    assert loss.shape == ()
    assert bool(jnp.isfinite(loss))
    print("KERNEL_OK")
</pallas_src>

<mosaic_0001>
module attributes {stable_mosaic.version = 11 : i64} {
  func.func @bert_layers_kernel(%arg0: i32, %arg1: memref<4x8x32xf32, #tpu.memory_space<vmem>>, %arg2: memref<4x1x8xf32, #tpu.memory_space<vmem>>, %arg3: memref<1x32x96xbf16, #tpu.memory_space<vmem>>, %arg4: memref<1x1x96xf32, #tpu.memory_space<vmem>>, %arg5: memref<1x32x32xbf16, #tpu.memory_space<vmem>>, %arg6: memref<1x1x32xf32, #tpu.memory_space<vmem>>, %arg7: memref<1x1x32xf32, #tpu.memory_space<vmem>>, %arg8: memref<1x1x32xf32, #tpu.memory_space<vmem>>, %arg9: memref<1x32x64xbf16, #tpu.memory_space<vmem>>, %arg10: memref<1x1x64xf32, #tpu.memory_space<vmem>>, %arg11: memref<1x64x32xbf16, #tpu.memory_space<vmem>>, %arg12: memref<1x1x32xf32, #tpu.memory_space<vmem>>, %arg13: memref<1x1x32xf32, #tpu.memory_space<vmem>>, %arg14: memref<1x1x32xf32, #tpu.memory_space<vmem>>, %arg15: memref<4x8x32xf32, #tpu.memory_space<vmem>>, %arg16: memref<4x8x32xf32, #tpu.memory_space<vmem>>, %arg17: memref<32x32xf32, #tpu.memory_space<vmem>>) attributes {dimension_semantics = [#tpu.dimension_semantics<arbitrary>], iteration_bounds = array<i64: 2>, scalar_prefetch = 0 : i64, scratch_operands = 2 : i64, tpu.core_type = #tpu.core_type<tc>, window_params = [{pipeline_mode = #tpu.pipeline_mode<synchronous>, transform_indices = @transform_0, window_bounds = array<i64: 4, 8, 32>}, {pipeline_mode = #tpu.pipeline_mode<synchronous>, transform_indices = @transform_1, window_bounds = array<i64: 4, 1, 8>}, {transform_indices = @transform_2, window_bounds = array<i64: 1, 32, 96>}, {transform_indices = @transform_3, window_bounds = array<i64: 1, 1, 96>}, {transform_indices = @transform_4, window_bounds = array<i64: 1, 32, 32>}, {transform_indices = @transform_5, window_bounds = array<i64: 1, 1, 32>}, {transform_indices = @transform_6, window_bounds = array<i64: 1, 1, 32>}, {transform_indices = @transform_7, window_bounds = array<i64: 1, 1, 32>}, {transform_indices = @transform_8, window_bounds = array<i64: 1, 32, 64>}, {transform_indices = @transform_9, window_bounds = array<i64: 1, 1, 64>}, {transform_indices = @transform_10, window_bounds = array<i64: 1, 64, 32>}, {transform_indices = @transform_11, window_bounds = array<i64: 1, 1, 32>}, {transform_indices = @transform_12, window_bounds = array<i64: 1, 1, 32>}, {transform_indices = @transform_13, window_bounds = array<i64: 1, 1, 32>}, {pipeline_mode = #tpu.pipeline_mode<synchronous>, transform_indices = @transform_14, window_bounds = array<i64: 4, 8, 32>}]} {
    %c0_i32 = arith.constant 0 : i32
    %0 = arith.cmpi eq, %arg0, %c0_i32 : i32
    %1 = arith.extui %0 : i1 to i32
    %c0_i32_0 = arith.constant 0 : i32
    %2 = arith.cmpi ne, %1, %c0_i32_0 : i32
    scf.if %2 {
      %c0_90 = arith.constant 0 : index
      %c0_91 = arith.constant 0 : index
      %c0_92 = arith.constant 0 : index
      %217 = vector.load %arg1[%c0_90, %c0_91, %c0_92] : memref<4x8x32xf32, #tpu.memory_space<vmem>>, vector<4x8x32xf32>
      %c0_93 = arith.constant 0 : index
      %c0_94 = arith.constant 0 : index
      %c0_95 = arith.constant 0 : index
      %218 = vector.load %arg16[%c0_93, %c0_94, %c0_95] : memref<4x8x32xf32, #tpu.memory_space<vmem>>, vector<4x8x32xf32>
      tpu.vector_store %arg16[%c0_93, %c0_94, %c0_95], %217 {strides = array<i32>} : memref<4x8x32xf32, #tpu.memory_space<vmem>>, vector<4x8x32xf32>,
    } else {
    }
    %c0 = arith.constant 0 : index
    %c0_1 = arith.constant 0 : index
    %c0_2 = arith.constant 0 : index
    %3 = vector.load %arg16[%c0, %c0_1, %c0_2] : memref<4x8x32xf32, #tpu.memory_space<vmem>>, vector<4x8x32xf32>
    %4 = vector.shape_cast %3 : vector<4x8x32xf32> to vector<32x32xf32>
    %c0_3 = arith.constant 0 : index
    %c0_4 = arith.constant 0 : index
    %c0_5 = arith.constant 0 : index
    %5 = vector.load %arg2[%c0_3, %c0_4, %c0_5] : memref<4x1x8xf32, #tpu.memory_space<vmem>>, vector<4x1x8xf32>
    %6 = arith.truncf %4 : vector<32x32xf32> to vector<32x32xbf16>
    %c0_6 = arith.constant 0 : index
    %c0_7 = arith.constant 0 : index
    %c0_8 = arith.constant 0 : index
    %7 = vector.load %arg3[%c0_6, %c0_7, %c0_8] : memref<1x32x96xbf16, #tpu.memory_space<vmem>>, vector<1x32x96xbf16>
    %8 = vector.shape_cast %7 : vector<1x32x96xbf16> to vector<32x96xbf16>
    %cst = arith.constant dense<0.000000e+00> : vector<32x96xf32>
    %9 = tpu.matmul %6, %8, %cst {dimension_numbers = #tpu.dot_dimension_numbers<[1], [0], [0], [1], [0, 0, 1, 1], [], []>} : vector<32x32xbf16>, vector<32x96xbf16>, vector<32x96xf32> -> vector<32x96xf32>
    %c0_9 = arith.constant 0 : index
    %c0_10 = arith.constant 0 : index
    %c0_11 = arith.constant 0 : index
    %10 = vector.load %arg4[%c0_9, %c0_10, %c0_11] : memref<1x1x96xf32, #tpu.memory_space<vmem>>, vector<1x1x96xf32>
    %11 = vector.shape_cast %10 : vector<1x1x96xf32> to vector<1x96xf32>
    %12 = vector.broadcast %11 : vector<1x96xf32> to vector<32x96xf32>
    %13 = arith.addf %9, %12 : vector<32x96xf32>
    %14 = vector.extract_strided_slice %13 {offsets = [0, 0], sizes = [32, 32], strides = [1, 1]} : vector<32x96xf32> to vector<32x32xf32>
    %15 = vector.shape_cast %14 : vector<32x32xf32> to vector<4x8x32xf32>
    %16 = vector.extract_strided_slice %13 {offsets = [0, 32], sizes = [32, 32], strides = [1, 1]} : vector<32x96xf32> to vector<32x32xf32>
    %17 = vector.shape_cast %16 : vector<32x32xf32> to vector<4x8x32xf32>
    %18 = vector.extract_strided_slice %13 {offsets = [0, 64], sizes = [32, 32], strides = [1, 1]} : vector<32x96xf32> to vector<32x32xf32>
    %19 = vector.shape_cast %18 : vector<32x32xf32> to vector<4x8x32xf32>
    %20 = vector.extract_strided_slice %15 {offsets = [0, 0, 0], sizes = [4, 8, 8], strides = [1, 1, 1]} : vector<4x8x32xf32> to vector<4x8x8xf32>
    %21 = arith.truncf %20 : vector<4x8x8xf32> to vector<4x8x8xbf16>
    %22 = vector.extract_strided_slice %17 {offsets = [0, 0, 0], sizes = [4, 8, 8], strides = [1, 1, 1]} : vector<4x8x32xf32> to vector<4x8x8xf32>
    %23 = arith.truncf %22 : vector<4x8x8xf32> to vector<4x8x8xbf16>
    %24 = vector.extract_strided_slice %19 {offsets = [0, 0, 0], sizes = [4, 8, 8], strides = [1, 1, 1]} : vector<4x8x32xf32> to vector<4x8x8xf32>
    %25 = arith.truncf %24 : vector<4x8x8xf32> to vector<4x8x8xbf16>
    "tpu.trace_start"() <{level = 10 : i32, message = "bqd,bkd->bqk"}> : () -> ()
    %cst_12 = arith.constant dense<0.000000e+00> : vector<4x8x8xf32>
    %26 = tpu.matmul %21, %23, %cst_12 {dimension_numbers = #tpu.dot_dimension_numbers<[2], [2], [1], [1], [0, 0, 0, 1, 1, 1], [0], [0]>} : vector<4x8x8xbf16>, vector<4x8x8xbf16>, vector<4x8x8xf32> -> vector<4x8x8xf32>
    "tpu.trace_stop"() : () -> ()
    %cst_13 = arith.constant 0.353553385 : f32
    %27 = vector.broadcast %cst_13 : f32 to vector<4x8x8xf32>
    %28 = arith.mulf %26, %27 : vector<4x8x8xf32>
    %29 = vector.broadcast %5 : vector<4x1x8xf32> to vector<4x8x8xf32>
    %30 = arith.addf %28, %29 : vector<4x8x8xf32>
    %cst_14 = arith.constant dense<0xFF800000> : vector<4x8xf32>
    %31 = vector.multi_reduction <maximumf>, %30, %cst_14 [2] : vector<4x8x8xf32> to vector<4x8xf32>
    %32 = vector.shape_cast %31 : vector<4x8xf32> to vector<4x8x1xf32>
    %33 = vector.broadcast %32 : vector<4x8x1xf32> to vector<4x8x8xf32>
    %34 = arith.subf %30, %33 : vector<4x8x8xf32>
    %35 = math.exp %34 : vector<4x8x8xf32>
    %cst_15 = arith.constant dense<0.000000e+00> : vector<4x8xf32>
    %36 = vector.multi_reduction <add>, %35, %cst_15 [2] : vector<4x8x8xf32> to vector<4x8xf32>
    %37 = vector.shape_cast %36 : vector<4x8xf32> to vector<4x8x1xf32>
    %38 = tpu.reciprocal %37 {approx = true} : vector<4x8x1xf32> -> vector<4x8x1xf32>
    %39 = vector.broadcast %38 : vector<4x8x1xf32> to vector<4x8x8xf32>
    %40 = arith.mulf %35, %39 : vector<4x8x8xf32>
    %41 = arith.truncf %40 : vector<4x8x8xf32> to vector<4x8x8xbf16>
    "tpu.trace_start"() <{level = 10 : i32, message = "bqk,bkd->bqd"}> : () -> ()
    %cst_16 = arith.constant dense<0.000000e+00> : vector<4x8x8xf32>
    %42 = tpu.matmul %41, %25, %cst_16 {dimension_numbers = #tpu.dot_dimension_numbers<[2], [1], [1], [2], [0, 0, 0, 1, 1, 2], [0], [0]>} : vector<4x8x8xbf16>, vector<4x8x8xbf16>, vector<4x8x8xf32> -> vector<4x8x8xf32>
    "tpu.trace_stop"() : () -> ()
    %43 = vector.shape_cast %42 : vector<4x8x8xf32> to vector<32x8xf32>
    %c0_17 = arith.constant 0 : index
    %c0_18 = arith.constant 0 : index
    %44 = vector.load %arg17[%c0_17, %c0_18] : memref<32x32xf32, #tpu.memory_space<vmem>>, vector<32x8xf32>
    tpu.vector_store %arg17[%c0_17, %c0_18], %43 {strides = array<i32>} : memref<32x32xf32, #tpu.memory_space<vmem>>, vector<32x8xf32>,
    %45 = vector.extract_strided_slice %15 {offsets = [0, 0, 8], sizes = [4, 8, 8], strides = [1, 1, 1]} : vector<4x8x32xf32> to vector<4x8x8xf32>
    %46 = arith.truncf %45 : vector<4x8x8xf32> to vector<4x8x8xbf16>
    %47 = vector.extract_strided_slice %17 {offsets = [0, 0, 8], sizes = [4, 8, 8], strides = [1, 1, 1]} : vector<4x8x32xf32> to vector<4x8x8xf32>
    %48 = arith.truncf %47 : vector<4x8x8xf32> to vector<4x8x8xbf16>
    %49 = vector.extract_strided_slice %19 {offsets = [0, 0, 8], sizes = [4, 8, 8], strides = [1, 1, 1]} : vector<4x8x32xf32> to vector<4x8x8xf32>
    %50 = arith.truncf %49 : vector<4x8x8xf32> to vector<4x8x8xbf16>
    "tpu.trace_start"() <{level = 10 : i32, message = "bqd,bkd->bqk"}> : () -> ()
    %cst_19 = arith.constant dense<0.000000e+00> : vector<4x8x8xf32>
    %51 = tpu.matmul %46, %48, %cst_19 {dimension_numbers = #tpu.dot_dimension_numbers<[2], [2], [1], [1], [0, 0, 0, 1, 1, 1], [0], [0]>} : vector<4x8x8xbf16>, vector<4x8x8xbf16>, vector<4x8x8xf32> -> vector<4x8x8xf32>
    "tpu.trace_stop"() : () -> ()
    %cst_20 = arith.constant 0.353553385 : f32
    %52 = vector.broadcast %cst_20 : f32 to vector<4x8x8xf32>
    %53 = arith.mulf %51, %52 : vector<4x8x8xf32>
    %54 = vector.broadcast %5 : vector<4x1x8xf32> to vector<4x8x8xf32>
    %55 = arith.addf %53, %54 : vector<4x8x8xf32>
    %cst_21 = arith.constant dense<0xFF800000> : vector<4x8xf32>
    %56 = vector.multi_reduction <maximumf>, %55, %cst_21 [2] : vector<4x8x8xf32> to vector<4x8xf32>
    %57 = vector.shape_cast %56 : vector<4x8xf32> to vector<4x8x1xf32>
    %58 = vector.broadcast %57 : vector<4x8x1xf32> to vector<4x8x8xf32>
    %59 = arith.subf %55, %58 : vector<4x8x8xf32>
    %60 = math.exp %59 : vector<4x8x8xf32>
    %cst_22 = arith.constant dense<0.000000e+00> : vector<4x8xf32>
    %61 = vector.multi_reduction <add>, %60, %cst_22 [2] : vector<4x8x8xf32> to vector<4x8xf32>
    %62 = vector.shape_cast %61 : vector<4x8xf32> to vector<4x8x1xf32>
    %63 = tpu.reciprocal %62 {approx = true} : vector<4x8x1xf32> -> vector<4x8x1xf32>
    %64 = vector.broadcast %63 : vector<4x8x1xf32> to vector<4x8x8xf32>
    %65 = arith.mulf %60, %64 : vector<4x8x8xf32>
    %66 = arith.truncf %65 : vector<4x8x8xf32> to vector<4x8x8xbf16>
    "tpu.trace_start"() <{level = 10 : i32, message = "bqk,bkd->bqd"}> : () -> ()
    %cst_23 = arith.constant dense<0.000000e+00> : vector<4x8x8xf32>
    %67 = tpu.matmul %66, %50, %cst_23 {dimension_numbers = #tpu.dot_dimension_numbers<[2], [1], [1], [2], [0, 0, 0, 1, 1, 2], [0], [0]>} : vector<4x8x8xbf16>, vector<4x8x8xbf16>, vector<4x8x8xf32> -> vector<4x8x8xf32>
    "tpu.trace_stop"() : () -> ()
    %68 = vector.shape_cast %67 : vector<4x8x8xf32> to vector<32x8xf32>
    %c0_24 = arith.constant 0 : index
    %c8 = arith.constant 8 : index
    %69 = vector.load %arg17[%c0_24, %c8] : memref<32x32xf32, #tpu.memory_space<vmem>>, vector<32x8xf32>
    tpu.vector_store %arg17[%c0_24, %c8], %68 {strides = array<i32>} : memref<32x32xf32, #tpu.memory_space<vmem>>, vector<32x8xf32>,
    %70 = vector.extract_strided_slice %15 {offsets = [0, 0, 16], sizes = [4, 8, 8], strides = [1, 1, 1]} : vector<4x8x32xf32> to vector<4x8x8xf32>
    %71 = arith.truncf %70 : vector<4x8x8xf32> to vector<4x8x8xbf16>
    %72 = vector.extract_strided_slice %17 {offsets = [0, 0, 16], sizes = [4, 8, 8], strides = [1, 1, 1]} : vector<4x8x32xf32> to vector<4x8x8xf32>
    %73 = arith.truncf %72 : vector<4x8x8xf32> to vector<4x8x8xbf16>
    %74 = vector.extract_strided_slice %19 {offsets = [0, 0, 16], sizes = [4, 8, 8], strides = [1, 1, 1]} : vector<4x8x32xf32> to vector<4x8x8xf32>
    %75 = arith.truncf %74 : vector<4x8x8xf32> to vector<4x8x8xbf16>
    "tpu.trace_start"() <{level = 10 : i32, message = "bqd,bkd->bqk"}> : () -> ()
    %cst_25 = arith.constant dense<0.000000e+00> : vector<4x8x8xf32>
    %76 = tpu.matmul %71, %73, %cst_25 {dimension_numbers = #tpu.dot_dimension_numbers<[2], [2], [1], [1], [0, 0, 0, 1, 1, 1], [0], [0]>} : vector<4x8x8xbf16>, vector<4x8x8xbf16>, vector<4x8x8xf32> -> vector<4x8x8xf32>
    "tpu.trace_stop"() : () -> ()
    %cst_26 = arith.constant 0.353553385 : f32
    %77 = vector.broadcast %cst_26 : f32 to vector<4x8x8xf32>
    %78 = arith.mulf %76, %77 : vector<4x8x8xf32>
    %79 = vector.broadcast %5 : vector<4x1x8xf32> to vector<4x8x8xf32>
    %80 = arith.addf %78, %79 : vector<4x8x8xf32>
    %cst_27 = arith.constant dense<0xFF800000> : vector<4x8xf32>
    %81 = vector.multi_reduction <maximumf>, %80, %cst_27 [2] : vector<4x8x8xf32> to vector<4x8xf32>
    %82 = vector.shape_cast %81 : vector<4x8xf32> to vector<4x8x1xf32>
    %83 = vector.broadcast %82 : vector<4x8x1xf32> to vector<4x8x8xf32>
    %84 = arith.subf %80, %83 : vector<4x8x8xf32>
    %85 = math.exp %84 : vector<4x8x8xf32>
    %cst_28 = arith.constant dense<0.000000e+00> : vector<4x8xf32>
    %86 = vector.multi_reduction <add>, %85, %cst_28 [2] : vector<4x8x8xf32> to vector<4x8xf32>
    %87 = vector.shape_cast %86 : vector<4x8xf32> to vector<4x8x1xf32>
    %88 = tpu.reciprocal %87 {approx = true} : vector<4x8x1xf32> -> vector<4x8x1xf32>
    %89 = vector.broadcast %88 : vector<4x8x1xf32> to vector<4x8x8xf32>
    %90 = arith.mulf %85, %89 : vector<4x8x8xf32>
    %91 = arith.truncf %90 : vector<4x8x8xf32> to vector<4x8x8xbf16>
    "tpu.trace_start"() <{level = 10 : i32, message = "bqk,bkd->bqd"}> : () -> ()
    %cst_29 = arith.constant dense<0.000000e+00> : vector<4x8x8xf32>
    %92 = tpu.matmul %91, %75, %cst_29 {dimension_numbers = #tpu.dot_dimension_numbers<[2], [1], [1], [2], [0, 0, 0, 1, 1, 2], [0], [0]>} : vector<4x8x8xbf16>, vector<4x8x8xbf16>, vector<4x8x8xf32> -> vector<4x8x8xf32>
    "tpu.trace_stop"() : () -> ()
    %93 = vector.shape_cast %92 : vector<4x8x8xf32> to vector<32x8xf32>
    %c0_30 = arith.constant 0 : index
    %c16 = arith.constant 16 : index
    %94 = vector.load %arg17[%c0_30, %c16] : memref<32x32xf32, #tpu.memory_space<vmem>>, vector<32x8xf32>
    tpu.vector_store %arg17[%c0_30, %c16], %93 {strides = array<i32>} : memref<32x32xf32, #tpu.memory_space<vmem>>, vector<32x8xf32>,
    %95 = vector.extract_strided_slice %15 {offsets = [0, 0, 24], sizes = [4, 8, 8], strides = [1, 1, 1]} : vector<4x8x32xf32> to vector<4x8x8xf32>
    %96 = arith.truncf %95 : vector<4x8x8xf32> to vector<4x8x8xbf16>
    %97 = vector.extract_strided_slice %17 {offsets = [0, 0, 24], sizes = [4, 8, 8], strides = [1, 1, 1]} : vector<4x8x32xf32> to vector<4x8x8xf32>
    %98 = arith.truncf %97 : vector<4x8x8xf32> to vector<4x8x8xbf16>
    %99 = vector.extract_strided_slice %19 {offsets = [0, 0, 24], sizes = [4, 8, 8], strides = [1, 1, 1]} : vector<4x8x32xf32> to vector<4x8x8xf32>
    %100 = arith.truncf %99 : vector<4x8x8xf32> to vector<4x8x8xbf16>
    "tpu.trace_start"() <{level = 10 : i32, message = "bqd,bkd->bqk"}> : () -> ()
    %cst_31 = arith.constant dense<0.000000e+00> : vector<4x8x8xf32>
    %101 = tpu.matmul %96, %98, %cst_31 {dimension_numbers = #tpu.dot_dimension_numbers<[2], [2], [1], [1], [0, 0, 0, 1, 1, 1], [0], [0]>} : vector<4x8x8xbf16>, vector<4x8x8xbf16>, vector<4x8x8xf32> -> vector<4x8x8xf32>
    "tpu.trace_stop"() : () -> ()
    %cst_32 = arith.constant 0.353553385 : f32
    %102 = vector.broadcast %cst_32 : f32 to vector<4x8x8xf32>
    %103 = arith.mulf %101, %102 : vector<4x8x8xf32>
    %104 = vector.broadcast %5 : vector<4x1x8xf32> to vector<4x8x8xf32>
    %105 = arith.addf %103, %104 : vector<4x8x8xf32>
    %cst_33 = arith.constant dense<0xFF800000> : vector<4x8xf32>
    %106 = vector.multi_reduction <maximumf>, %105, %cst_33 [2] : vector<4x8x8xf32> to vector<4x8xf32>
    %107 = vector.shape_cast %106 : vector<4x8xf32> to vector<4x8x1xf32>
    %108 = vector.broadcast %107 : vector<4x8x1xf32> to vector<4x8x8xf32>
    %109 = arith.subf %105, %108 : vector<4x8x8xf32>
    %110 = math.exp %109 : vector<4x8x8xf32>
    %cst_34 = arith.constant dense<0.000000e+00> : vector<4x8xf32>
    %111 = vector.multi_reduction <add>, %110, %cst_34 [2] : vector<4x8x8xf32> to vector<4x8xf32>
    %112 = vector.shape_cast %111 : vector<4x8xf32> to vector<4x8x1xf32>
    %113 = tpu.reciprocal %112 {approx = true} : vector<4x8x1xf32> -> vector<4x8x1xf32>
    %114 = vector.broadcast %113 : vector<4x8x1xf32> to vector<4x8x8xf32>
    %115 = arith.mulf %110, %114 : vector<4x8x8xf32>
    %116 = arith.truncf %115 : vector<4x8x8xf32> to vector<4x8x8xbf16>
    "tpu.trace_start"() <{level = 10 : i32, message = "bqk,bkd->bqd"}> : () -> ()
    %cst_35 = arith.constant dense<0.000000e+00> : vector<4x8x8xf32>
    %117 = tpu.matmul %116, %100, %cst_35 {dimension_numbers = #tpu.dot_dimension_numbers<[2], [1], [1], [2], [0, 0, 0, 1, 1, 2], [0], [0]>} : vector<4x8x8xbf16>, vector<4x8x8xbf16>, vector<4x8x8xf32> -> vector<4x8x8xf32>
    "tpu.trace_stop"() : () -> ()
    %118 = vector.shape_cast %117 : vector<4x8x8xf32> to vector<32x8xf32>
    %c0_36 = arith.constant 0 : index
    %c24 = arith.constant 24 : index
    %119 = vector.load %arg17[%c0_36, %c24] : memref<32x32xf32, #tpu.memory_space<vmem>>, vector<32x8xf32>
    tpu.vector_store %arg17[%c0_36, %c24], %118 {strides = array<i32>} : memref<32x32xf32, #tpu.memory_space<vmem>>, vector<32x8xf32>,
    %c0_37 = arith.constant 0 : index
    %c0_38 = arith.constant 0 : index
    %120 = vector.load %arg17[%c0_37, %c0_38] : memref<32x32xf32, #tpu.memory_space<vmem>>, vector<32x32xf32>
    %121 = arith.truncf %120 : vector<32x32xf32> to vector<32x32xbf16>
    %c0_39 = arith.constant 0 : index
    %c0_40 = arith.constant 0 : index
    %c0_41 = arith.constant 0 : index
    %122 = vector.load %arg5[%c0_39, %c0_40, %c0_41] : memref<1x32x32xbf16, #tpu.memory_space<vmem>>, vector<1x32x32xbf16>
    %123 = vector.shape_cast %122 : vector<1x32x32xbf16> to vector<32x32xbf16>
    %cst_42 = arith.constant dense<0.000000e+00> : vector<32x32xf32>
    %124 = tpu.matmul %121, %123, %cst_42 {dimension_numbers = #tpu.dot_dimension_numbers<[1], [0], [0], [1], [0, 0, 1, 1], [], []>} : vector<32x32xbf16>, vector<32x32xbf16>, vector<32x32xf32> -> vector<32x32xf32>
    %c0_43 = arith.constant 0 : index
    %c0_44 = arith.constant 0 : index
    %c0_45 = arith.constant 0 : index
    %125 = vector.load %arg6[%c0_43, %c0_44, %c0_45] : memref<1x1x32xf32, #tpu.memory_space<vmem>>, vector<1x1x32xf32>
    %126 = vector.shape_cast %125 : vector<1x1x32xf32> to vector<1x32xf32>
    %127 = vector.broadcast %126 : vector<1x32xf32> to vector<32x32xf32>
    %128 = arith.addf %124, %127 : vector<32x32xf32>
    %129 = arith.addf %4, %128 : vector<32x32xf32>
    %c0_46 = arith.constant 0 : index
    %c0_47 = arith.constant 0 : index
    %c0_48 = arith.constant 0 : index
    %130 = vector.load %arg7[%c0_46, %c0_47, %c0_48] : memref<1x1x32xf32, #tpu.memory_space<vmem>>, vector<1x1x32xf32>
    %131 = vector.shape_cast %130 : vector<1x1x32xf32> to vector<1x32xf32>
    %c0_49 = arith.constant 0 : index
    %c0_50 = arith.constant 0 : index
    %c0_51 = arith.constant 0 : index
    %132 = vector.load %arg8[%c0_49, %c0_50, %c0_51] : memref<1x1x32xf32, #tpu.memory_space<vmem>>, vector<1x1x32xf32>
    %133 = vector.shape_cast %132 : vector<1x1x32xf32> to vector<1x32xf32>
    %cst_52 = arith.constant dense<0.000000e+00> : vector<32xf32>
    %134 = vector.multi_reduction <add>, %129, %cst_52 [1] : vector<32x32xf32> to vector<32xf32>
    %135 = vector.shape_cast %134 : vector<32xf32> to vector<32x1xf32>
    %cst_53 = arith.constant 3.200000e+01 : f32
    %136 = vector.broadcast %cst_53 : f32 to vector<32x1xf32>
    %137 = arith.divf %135, %136 : vector<32x1xf32>
    %138 = vector.broadcast %137 : vector<32x1xf32> to vector<32x32xf32>
    %139 = arith.subf %129, %138 : vector<32x32xf32>
    %140 = arith.mulf %139, %139 : vector<32x32xf32>
    %cst_54 = arith.constant dense<0.000000e+00> : vector<32xf32>
    %141 = vector.multi_reduction <add>, %140, %cst_54 [1] : vector<32x32xf32> to vector<32xf32>
    %142 = vector.shape_cast %141 : vector<32xf32> to vector<32x1xf32>
    %cst_55 = arith.constant 3.200000e+01 : f32
    %143 = vector.broadcast %cst_55 : f32 to vector<32x1xf32>
    %144 = arith.divf %142, %143 : vector<32x1xf32>
    %145 = vector.broadcast %137 : vector<32x1xf32> to vector<32x32xf32>
    %146 = arith.subf %129, %145 : vector<32x32xf32>
    %cst_56 = arith.constant 9.99999996E-13 : f32
    %147 = vector.broadcast %cst_56 : f32 to vector<32x1xf32>
    %148 = arith.addf %144, %147 : vector<32x1xf32>
    %149 = math.rsqrt %148 : vector<32x1xf32>
    %150 = vector.broadcast %149 : vector<32x1xf32> to vector<32x32xf32>
    %151 = arith.mulf %146, %150 : vector<32x32xf32>
    %152 = vector.broadcast %131 : vector<1x32xf32> to vector<32x32xf32>
    %153 = arith.mulf %151, %152 : vector<32x32xf32>
    %154 = vector.broadcast %133 : vector<1x32xf32> to vector<32x32xf32>
    %155 = arith.addf %153, %154 : vector<32x32xf32>
    %156 = arith.truncf %155 : vector<32x32xf32> to vector<32x32xbf16>
    %c0_57 = arith.constant 0 : index
    %c0_58 = arith.constant 0 : index
    %c0_59 = arith.constant 0 : index
    %157 = vector.load %arg9[%c0_57, %c0_58, %c0_59] : memref<1x32x64xbf16, #tpu.memory_space<vmem>>, vector<1x32x64xbf16>
    %158 = vector.shape_cast %157 : vector<1x32x64xbf16> to vector<32x64xbf16>
    %cst_60 = arith.constant dense<0.000000e+00> : vector<32x64xf32>
    %159 = tpu.matmul %156, %158, %cst_60 {dimension_numbers = #tpu.dot_dimension_numbers<[1], [0], [0], [1], [0, 0, 1, 1], [], []>} : vector<32x32xbf16>, vector<32x64xbf16>, vector<32x64xf32> -> vector<32x64xf32>
    %c0_61 = arith.constant 0 : index
    %c0_62 = arith.constant 0 : index
    %c0_63 = arith.constant 0 : index
    %160 = vector.load %arg10[%c0_61, %c0_62, %c0_63] : memref<1x1x64xf32, #tpu.memory_space<vmem>>, vector<1x1x64xf32>
    %161 = vector.shape_cast %160 : vector<1x1x64xf32> to vector<1x64xf32>
    %162 = vector.broadcast %161 : vector<1x64xf32> to vector<32x64xf32>
    %163 = arith.addf %159, %162 : vector<32x64xf32>
    %cst_64 = arith.constant 5.000000e-01 : f32
    %164 = vector.broadcast %cst_64 : f32 to vector<32x64xf32>
    %165 = arith.mulf %164, %163 : vector<32x64xf32>
    %cst_65 = arith.constant 4.471500e-02 : f32
    %166 = vector.broadcast %cst_65 : f32 to vector<32x64xf32>
    %167 = arith.mulf %166, %163 : vector<32x64xf32>
    %168 = arith.mulf %167, %163 : vector<32x64xf32>
    %169 = arith.mulf %168, %163 : vector<32x64xf32>
    %170 = arith.addf %163, %169 : vector<32x64xf32>
    %cst_66 = arith.constant 0.797884583 : f32
    %171 = vector.broadcast %cst_66 : f32 to vector<32x64xf32>
    %172 = arith.mulf %171, %170 : vector<32x64xf32>
    %173 = math.tanh %172 : vector<32x64xf32>
    %cst_67 = arith.constant 1.000000e+00 : f32
    %174 = vector.broadcast %cst_67 : f32 to vector<32x64xf32>
    %175 = arith.addf %174, %173 : vector<32x64xf32>
    %176 = arith.mulf %165, %175 : vector<32x64xf32>
    %177 = arith.truncf %176 : vector<32x64xf32> to vector<32x64xbf16>
    %c0_68 = arith.constant 0 : index
    %c0_69 = arith.constant 0 : index
    %c0_70 = arith.constant 0 : index
    %178 = vector.load %arg11[%c0_68, %c0_69, %c0_70] : memref<1x64x32xbf16, #tpu.memory_space<vmem>>, vector<1x64x32xbf16>
    %179 = vector.shape_cast %178 : vector<1x64x32xbf16> to vector<64x32xbf16>
    %cst_71 = arith.constant dense<0.000000e+00> : vector<32x32xf32>
    %180 = tpu.matmul %177, %179, %cst_71 {dimension_numbers = #tpu.dot_dimension_numbers<[1], [0], [0], [1], [0, 0, 1, 1], [], []>} : vector<32x64xbf16>, vector<64x32xbf16>, vector<32x32xf32> -> vector<32x32xf32>
    %c0_72 = arith.constant 0 : index
    %c0_73 = arith.constant 0 : index
    %c0_74 = arith.constant 0 : index
    %181 = vector.load %arg12[%c0_72, %c0_73, %c0_74] : memref<1x1x32xf32, #tpu.memory_space<vmem>>, vector<1x1x32xf32>
    %182 = vector.shape_cast %181 : vector<1x1x32xf32> to vector<1x32xf32>
    %183 = vector.broadcast %182 : vector<1x32xf32> to vector<32x32xf32>
    %184 = arith.addf %180, %183 : vector<32x32xf32>
    %185 = arith.addf %155, %184 : vector<32x32xf32>
    %c0_75 = arith.constant 0 : index
    %c0_76 = arith.constant 0 : index
    %c0_77 = arith.constant 0 : index
    %186 = vector.load %arg13[%c0_75, %c0_76, %c0_77] : memref<1x1x32xf32, #tpu.memory_space<vmem>>, vector<1x1x32xf32>
    %187 = vector.shape_cast %186 : vector<1x1x32xf32> to vector<1x32xf32>
    %c0_78 = arith.constant 0 : index
    %c0_79 = arith.constant 0 : index
    %c0_80 = arith.constant 0 : index
    %188 = vector.load %arg14[%c0_78, %c0_79, %c0_80] : memref<1x1x32xf32, #tpu.memory_space<vmem>>, vector<1x1x32xf32>
    %189 = vector.shape_cast %188 : vector<1x1x32xf32> to vector<1x32xf32>
    %cst_81 = arith.constant dense<0.000000e+00> : vector<32xf32>
    %190 = vector.multi_reduction <add>, %185, %cst_81 [1] : vector<32x32xf32> to vector<32xf32>
    %191 = vector.shape_cast %190 : vector<32xf32> to vector<32x1xf32>
    %cst_82 = arith.constant 3.200000e+01 : f32
    %192 = vector.broadcast %cst_82 : f32 to vector<32x1xf32>
    %193 = arith.divf %191, %192 : vector<32x1xf32>
    %194 = vector.broadcast %193 : vector<32x1xf32> to vector<32x32xf32>
    %195 = arith.subf %185, %194 : vector<32x32xf32>
    %196 = arith.mulf %195, %195 : vector<32x32xf32>
    %cst_83 = arith.constant dense<0.000000e+00> : vector<32xf32>
    %197 = vector.multi_reduction <add>, %196, %cst_83 [1] : vector<32x32xf32> to vector<32xf32>
    %198 = vector.shape_cast %197 : vector<32xf32> to vector<32x1xf32>
    %cst_84 = arith.constant 3.200000e+01 : f32
    %199 = vector.broadcast %cst_84 : f32 to vector<32x1xf32>
    %200 = arith.divf %198, %199 : vector<32x1xf32>
    %201 = vector.broadcast %193 : vector<32x1xf32> to vector<32x32xf32>
    %202 = arith.subf %185, %201 : vector<32x32xf32>
    %cst_85 = arith.constant 9.99999996E-13 : f32
    %203 = vector.broadcast %cst_85 : f32 to vector<32x1xf32>
    %204 = arith.addf %200, %203 : vector<32x1xf32>
    %205 = math.rsqrt %204 : vector<32x1xf32>
    %206 = vector.broadcast %205 : vector<32x1xf32> to vector<32x32xf32>
    %207 = arith.mulf %202, %206 : vector<32x32xf32>
    %208 = vector.broadcast %187 : vector<1x32xf32> to vector<32x32xf32>
    %209 = arith.mulf %207, %208 : vector<32x32xf32>
    %210 = vector.broadcast %189 : vector<1x32xf32> to vector<32x32xf32>
    %211 = arith.addf %209, %210 : vector<32x32xf32>
    %212 = vector.shape_cast %211 : vector<32x32xf32> to vector<4x8x32xf32>
    %c0_86 = arith.constant 0 : index
    %c0_87 = arith.constant 0 : index
    %c0_88 = arith.constant 0 : index
    %213 = vector.load %arg16[%c0_86, %c0_87, %c0_88] : memref<4x8x32xf32, #tpu.memory_space<vmem>>, vector<4x8x32xf32>
    tpu.vector_store %arg16[%c0_86, %c0_87, %c0_88], %212 {strides = array<i32>} : memref<4x8x32xf32, #tpu.memory_space<vmem>>, vector<4x8x32xf32>,
    %c1_i32 = arith.constant 1 : i32
    %214 = arith.cmpi eq, %arg0, %c1_i32 : i32
    %215 = arith.extui %214 : i1 to i32
    %c0_i32_89 = arith.constant 0 : i32
    %216 = arith.cmpi ne, %215, %c0_i32_89 : i32
    scf.if %216 {
      %c0_90 = arith.constant 0 : index
      %c0_91 = arith.constant 0 : index
      %c0_92 = arith.constant 0 : index
      %217 = vector.load %arg15[%c0_90, %c0_91, %c0_92] : memref<4x8x32xf32, #tpu.memory_space<vmem>>, vector<4x8x32xf32>
      tpu.vector_store %arg15[%c0_90, %c0_91, %c0_92], %212 {strides = array<i32>} : memref<4x8x32xf32, #tpu.memory_space<vmem>>, vector<4x8x32xf32>,
    } else {
    }
    return
  }
  func.func @transform_0(%arg0: i32) -> (i32, i32, i32) {
    %c0_i32 = arith.constant 0 : i32
    %c0_i32_0 = arith.constant 0 : i32
    %c0_i32_1 = arith.constant 0 : i32
    %c0_i32_2 = arith.constant 0 : i32
    return %c0_i32, %c0_i32_0, %c0_i32_1 : i32, i32, i32
  }
  func.func @transform_1(%arg0: i32) -> (i32, i32, i32) {
    %c0_i32 = arith.constant 0 : i32
    %c0_i32_0 = arith.constant 0 : i32
    %c0_i32_1 = arith.constant 0 : i32
    %c0_i32_2 = arith.constant 0 : i32
    return %c0_i32, %c0_i32_0, %c0_i32_1 : i32, i32, i32
  }
  func.func @transform_2(%arg0: i32) -> (i32, i32, i32) {
    %c0_i32 = arith.constant 0 : i32
    %c0_i32_0 = arith.constant 0 : i32
    %c0_i32_1 = arith.constant 0 : i32
    return %arg0, %c0_i32, %c0_i32_0 : i32, i32, i32
  }
  func.func @transform_3(%arg0: i32) -> (i32, i32, i32) {
    %c0_i32 = arith.constant 0 : i32
    %c0_i32_0 = arith.constant 0 : i32
    %c0_i32_1 = arith.constant 0 : i32
    return %arg0, %c0_i32, %c0_i32_0 : i32, i32, i32
  }
  func.func @transform_4(%arg0: i32) -> (i32, i32, i32) {
    %c0_i32 = arith.constant 0 : i32
    %c0_i32_0 = arith.constant 0 : i32
    %c0_i32_1 = arith.constant 0 : i32
    return %arg0, %c0_i32, %c0_i32_0 : i32, i32, i32
  }
  func.func @transform_5(%arg0: i32) -> (i32, i32, i32) {
    %c0_i32 = arith.constant 0 : i32
    %c0_i32_0 = arith.constant 0 : i32
    %c0_i32_1 = arith.constant 0 : i32
    return %arg0, %c0_i32, %c0_i32_0 : i32, i32, i32
  }
  func.func @transform_6(%arg0: i32) -> (i32, i32, i32) {
    %c0_i32 = arith.constant 0 : i32
    %c0_i32_0 = arith.constant 0 : i32
    %c0_i32_1 = arith.constant 0 : i32
    return %arg0, %c0_i32, %c0_i32_0 : i32, i32, i32
  }
  func.func @transform_7(%arg0: i32) -> (i32, i32, i32) {
    %c0_i32 = arith.constant 0 : i32
    %c0_i32_0 = arith.constant 0 : i32
    %c0_i32_1 = arith.constant 0 : i32
    return %arg0, %c0_i32, %c0_i32_0 : i32, i32, i32
  }
  func.func @transform_8(%arg0: i32) -> (i32, i32, i32) {
    %c0_i32 = arith.constant 0 : i32
    %c0_i32_0 = arith.constant 0 : i32
    %c0_i32_1 = arith.constant 0 : i32
    return %arg0, %c0_i32, %c0_i32_0 : i32, i32, i32
  }
  func.func @transform_9(%arg0: i32) -> (i32, i32, i32) {
    %c0_i32 = arith.constant 0 : i32
    %c0_i32_0 = arith.constant 0 : i32
    %c0_i32_1 = arith.constant 0 : i32
    return %arg0, %c0_i32, %c0_i32_0 : i32, i32, i32
  }
  func.func @transform_10(%arg0: i32) -> (i32, i32, i32) {
    %c0_i32 = arith.constant 0 : i32
    %c0_i32_0 = arith.constant 0 : i32
    %c0_i32_1 = arith.constant 0 : i32
    return %arg0, %c0_i32, %c0_i32_0 : i32, i32, i32
  }
  func.func @transform_11(%arg0: i32) -> (i32, i32, i32) {
    %c0_i32 = arith.constant 0 : i32
    %c0_i32_0 = arith.constant 0 : i32
    %c0_i32_1 = arith.constant 0 : i32
    return %arg0, %c0_i32, %c0_i32_0 : i32, i32, i32
  }
  func.func @transform_12(%arg0: i32) -> (i32, i32, i32) {
    %c0_i32 = arith.constant 0 : i32
    %c0_i32_0 = arith.constant 0 : i32
    %c0_i32_1 = arith.constant 0 : i32
    return %arg0, %c0_i32, %c0_i32_0 : i32, i32, i32
  }
  func.func @transform_13(%arg0: i32) -> (i32, i32, i32) {
    %c0_i32 = arith.constant 0 : i32
    %c0_i32_0 = arith.constant 0 : i32
    %c0_i32_1 = arith.constant 0 : i32
    return %arg0, %c0_i32, %c0_i32_0 : i32, i32, i32
  }
  func.func @transform_14(%arg0: i32) -> (i32, i32, i32) {
    %c0_i32 = arith.constant 0 : i32
    %c0_i32_0 = arith.constant 0 : i32
    %c0_i32_1 = arith.constant 0 : i32
    %c0_i32_2 = arith.constant 0 : i32
    return %c0_i32, %c0_i32_0, %c0_i32_1 : i32, i32, i32
  }
}

</mosaic_0001>

<llo_original>
// kernel: tpu_custom_call.1
$region0: #{tpu_custom_call.1}
  #allocation0 [shape = 'u32[]', space=smem, size = 0x4, offset = 0x4, fixed_abs, tag = 'smem constant byte address 0x4 - core index']
  #allocation1 [shape = 'u32[144,128]{1,0:T(1,128)}', space=vmem, size = 0x12000, scoped, tag = 'internal scratch']
  #allocation2 [shape = 'f32[4,8,32]{2,1,0:T(8,128)}', space=vmem, size = 0x4000, scoped, tag = 'scratch operand']
  #allocation3 [shape = 'f32[32,32]{1,0:T(8,128)}', space=vmem, size = 0x4000, scoped, tag = 'scratch operand']
  %s0 = inlined_call_operand.vmem [shape: f32[4,8,32], index: 0, kind: input, shape index: {}]
  %s1 = inlined_call_operand.hbm [shape: f32[4,1,8], index: 1, kind: input, shape index: {}]
  %s2 = inlined_call_operand.vmem [shape: bf16[2,32,96], index: 2, kind: input, shape index: {}]
  %s3 = inlined_call_operand.vmem [shape: f32[2,1,96], index: 3, kind: input, shape index: {}]
  %s4 = inlined_call_operand.vmem [shape: bf16[2,32,32], index: 4, kind: input, shape index: {}]
  %s5 = inlined_call_operand.vmem [shape: f32[2,1,32], index: 5, kind: input, shape index: {}]
  %s6 = inlined_call_operand.hbm [shape: f32[2,1,32], index: 6, kind: input, shape index: {}]
  %s7 = inlined_call_operand.hbm [shape: f32[2,1,32], index: 7, kind: input, shape index: {}]
  %s8 = inlined_call_operand.hbm [shape: bf16[2,32,64], index: 8, kind: input, shape index: {}]
  %s9 = inlined_call_operand.hbm [shape: f32[2,1,64], index: 9, kind: input, shape index: {}]
  %s10 = inlined_call_operand.vmem [shape: bf16[2,64,32], index: 10, kind: input, shape index: {}]
  %s11 = inlined_call_operand.vmem [shape: f32[2,1,32], index: 11, kind: input, shape index: {}]
  %s12 = inlined_call_operand.vmem [shape: f32[2,1,32], index: 12, kind: input, shape index: {}]
  %s13 = inlined_call_operand.vmem [shape: f32[2,1,32], index: 13, kind: input, shape index: {}]
  %s14 = inlined_call_operand.hbm [shape: f32[4,8,32], index: 14, kind: output, shape index: {}]
  %s15 = sld [smem:[#allocation0]]
  $region117: #{tpu_custom_call.1} parent=0
    _
  %s17 = ssub.s32 1, %s15
  %s18 = scalar_select 0, %s17, %s15
  $region1: #{tpu_custom_call.1} parent=0
    #allocation4 [shape = 'u8[2048]{0}', space=vmem, size = 0x800, scoped, tag = 'input window, operand 1, single buffered']
    #allocation5 [shape = 's32[2]{0}', space=sflag, size = 0x8, scoped, tag = 'scoped memory for tpu_custom_call.1']
    #allocation6 [shape = 's32[2]{0}', space=sflag, size = 0x8, scoped, tag = 'scoped memory for tpu_custom_call.1']
    #allocation7 [shape = 'u8[1024]{0}', space=vmem, size = 0x400, scoped, tag = 'input window, operand 6']
    #allocation8 [shape = 's32[2]{0}', space=sflag, size = 0x8, scoped, tag = 'scoped memory for tpu_custom_call.1']
    #allocation9 [shape = 'u8[1024]{0}', space=vmem, size = 0x400, scoped, tag = 'input window, operand 7']
    #allocation10 [shape = 'u8[16384]{0}', space=vmem, size = 0x4000, scoped, tag = 'input window, operand 8']
    #allocation11 [shape = 's32[2]{0}', space=sflag, size = 0x8, scoped, tag = 'scoped memory for tpu_custom_call.1']
    #allocation12 [shape = 'u8[1024]{0}', space=vmem, size = 0x400, scoped, tag = 'input window, operand 9']
    #allocation13 [shape = 'u8[16384]{0}', space=vmem, size = 0x4000, scoped, tag = 'output window, operand 0, single buffered']
    %19 = vsyncpa [#allocation5], 0
    %20 = vsyncpa [#allocation8], 0
    %s21 = scalar_lea.sflag [#allocation8], 1
    %22 = vsyncpa %s21, 0
    %23 = vsyncpa [#allocation11], 0
    %s24 = scalar_lea.sflag [#allocation11], 1
    %25 = vsyncpa %s24, 0
    %26 = vsyncpa [#allocation6], 0
    loop: start=0, step=1, limit=4
    $region2: #{tpu_custom_call.1} parent=1 // loop_pre_header
      _
    $region3: #{tpu_custom_call.1} parent=1 // loop_header
      %s28 = sphi 0, %s32
      %p29 = scmp.ge.s32.totalorder %s28, 4
      %s36 = sphi 0, %s36
      %s38 = sphi 0, %s36
      %s39 = sphi 0, %s38
      %s53 = sphi 0, %s39
      %s57 = sphi 0, %s57
      %s59 = sphi 0, %s57
      %s60 = sphi 0, %s59
      %s74 = sphi 0, %s60
      %s80 = sphi 0, %s82
      %s83 = sphi 0, %s80
      %s84 = sphi 0, %s83
      %s100 = sphi 0, %s84
      %s106 = sphi 0, %s108
      %s109 = sphi 0, %s106
      %s110 = sphi 0, %s109
      %s126 = sphi 0, %s110
      %s132 = sphi 0, %s134
      %s135 = sphi 0, %s132
      %s136 = sphi 0, %s135
      %s152 = sphi 0, %s136
      %s158 = sphi 0, %s160
      %s161 = sphi 0, %s158
      %s162 = sphi 0, %s161
      %s178 = sphi 0, %s162
      %s184 = sphi 0, %s186
      %s187 = sphi 0, %s184
      %s188 = sphi 0, %s187
      %s204 = sphi 0, %s188
      %s210 = sphi 0, %s212
      %s213 = sphi 0, %s210
      %s214 = sphi 0, %s213
      %s230 = sphi 0, %s214
      %s236 = sphi 0, %s238
      %s239 = sphi 0, %s236
      %s240 = sphi 0, %s239
      %s256 = sphi 0, %s240
      %s262 = sphi 0, %s264
      %s265 = sphi 0, %s262
      %s266 = sphi 0, %s265
      %s282 = sphi 0, %s266
      %s288 = sphi 0, %s290
      %s291 = sphi 0, %s288
      %s292 = sphi 0, %s291
      %s308 = sphi 0, %s292
      %s314 = sphi 0, %s316
      %s317 = sphi 0, %s314
      %s318 = sphi 0, %s317
      %s334 = sphi 0, %s318
      %s340 = sphi 0, %s342
      %s343 = sphi 0, %s340
      %s344 = sphi 0, %s343
      %s360 = sphi 0, %s344
      %s366 = sphi 0, %s368
      %s369 = sphi 0, %s366
      %s370 = sphi 0, %s369
      %s386 = sphi 0, %s370
      %s390 = sphi 0, %s390
      %s392 = sphi 0, %s390
      %s393 = sphi 0, %s392
      %s407 = sphi 0, %s393
    $region4: #{tpu_custom_call.1} parent=1 // loop_header_branch
      %31 = sbr.rel (%p29) target = $region8
    $region5: #{tpu_custom_call.1} parent=1 // loop_body
      %s33 = ssub.s32 %s28, 1
      %s34 = ssub.s32 %s28, 2
      %s35 = sadd.s32 %s28, 1
      %s37 = sadd.s32 %s36, 1
      %p40 = scmp.eq.s32.totalorder %s28, 1
      %p41 = scmp.ne.s32.totalorder %s36, %s38
      %p42 = scmp.eq.s32.totalorder %s28, 0
      %p43 = por %p41, %p42
      %p44 = scmp.ne.s32.totalorder %s36, %s38
      %p45 = scmp.eq.s32.totalorder %s33, 1
      %p46 = por %p44, %p45
      %p47 = scmp.ne.s32.totalorder %s38, %s39
      %p48 = scmp.eq.s32.totalorder %s33, 0
      %p49 = por %p47, %p48
      %p50 = scmp.ne.s32.totalorder %s38, %s39
      %p51 = scmp.eq.s32.totalorder %s34, 1
      %p52 = por %p50, %p51
      %p54 = scmp.ne.s32.totalorder %s39, %s53
      %p55 = scmp.eq.s32.totalorder %s34, 0
      %p56 = por %p54, %p55
      %s58 = sadd.s32 %s57, 1
      %p61 = scmp.eq.s32.totalorder %s28, 1
      %p62 = scmp.ne.s32.totalorder %s57, %s59
      %p63 = scmp.eq.s32.totalorder %s28, 0
      %p64 = por %p62, %p63
      %p65 = scmp.ne.s32.totalorder %s57, %s59
      %p66 = scmp.eq.s32.totalorder %s33, 1
      %p67 = por %p65, %p66
      %p68 = scmp.ne.s32.totalorder %s59, %s60
      %p69 = scmp.eq.s32.totalorder %s33, 0
      %p70 = por %p68, %p69
      %p71 = scmp.ne.s32.totalorder %s59, %s60
      %p72 = scmp.eq.s32.totalorder %s34, 1
      %p73 = por %p71, %p72
      %p75 = scmp.ne.s32.totalorder %s60, %s74
      %p76 = scmp.eq.s32.totalorder %s34, 0
      %p77 = por %p75, %p76
      %s78 = ssub.s32 %s28, %s35
      %p79 = scmp.eq.s32.totalorder %s78, 0
      %s81 = sadd.s32 %s80, 1
      %s82 = scalar_select %p79, %s80, %s81
      %p85 = pneg %p79
      %p86 = scmp.eq.s32.totalorder %s28, 1
      %p87 = por %p85, %p86
      %p88 = scmp.ne.s32.totalorder %s80, %s83
      %p89 = scmp.eq.s32.totalorder %s28, 0
      %p90 = por %p88, %p89
      %p91 = scmp.ne.s32.totalorder %s80, %s83
      %p92 = scmp.eq.s32.totalorder %s33, 1
      %p93 = por %p91, %p92
      %p94 = scmp.ne.s32.totalorder %s83, %s84
      %p95 = scmp.eq.s32.totalorder %s33, 0
      %p96 = por %p94, %p95
      %p97 = scmp.ne.s32.totalorder %s83, %s84
      %p98 = scmp.eq.s32.totalorder %s34, 1
      %p99 = por %p97, %p98
      %p101 = scmp.ne.s32.totalorder %s84, %s100
      %p102 = scmp.eq.s32.totalorder %s34, 0
      %p103 = por %p101, %p102
      %s104 = ssub.s32 %s28, %s35
      %p105 = scmp.eq.s32.totalorder %s104, 0
      %s107 = sadd.s32 %s106, 1
      %s108 = scalar_select %p105, %s106, %s107
      %p111 = pneg %p105
      %p112 = scmp.eq.s32.totalorder %s28, 1
      %p113 = por %p111, %p112
      %p114 = scmp.ne.s32.totalorder %s106, %s109
      %p115 = scmp.eq.s32.totalorder %s28, 0
      %p116 = por %p114, %p115
      %p117 = scmp.ne.s32.totalorder %s106, %s109
      %p118 = scmp.eq.s32.totalorder %s33, 1
      %p119 = por %p117, %p118
      %p120 = scmp.ne.s32.totalorder %s109, %s110
      %p121 = scmp.eq.s32.totalorder %s33, 0
      %p122 = por %p120, %p121
      %p123 = scmp.ne.s32.totalorder %s109, %s110
      %p124 = scmp.eq.s32.totalorder %s34, 1
      %p125 = por %p123, %p124
      %p127 = scmp.ne.s32.totalorder %s110, %s126
      %p128 = scmp.eq.s32.totalorder %s34, 0
      %p129 = por %p127, %p128
      %s130 = ssub.s32 %s28, %s35
      %p131 = scmp.eq.s32.totalorder %s130, 0
      %s133 = sadd.s32 %s132, 1
      %s134 = scalar_select %p131, %s132, %s133
      %p137 = pneg %p131
      %p138 = scmp.eq.s32.totalorder %s28, 1
      %p139 = por %p137, %p138
      %p140 = scmp.ne.s32.totalorder %s132, %s135
      %p141 = scmp.eq.s32.totalorder %s28, 0
      %p142 = por %p140, %p141
      %p143 = scmp.ne.s32.totalorder %s132, %s135
      %p144 = scmp.eq.s32.totalorder %s33, 1
      %p145 = por %p143, %p144
      %p146 = scmp.ne.s32.totalorder %s135, %s136
      %p147 = scmp.eq.s32.totalorder %s33, 0
      %p148 = por %p146, %p147
      %p149 = scmp.ne.s32.totalorder %s135, %s136
      %p150 = scmp.eq.s32.totalorder %s34, 1
      %p151 = por %p149, %p150
      %p153 = scmp.ne.s32.totalorder %s136, %s152
      %p154 = scmp.eq.s32.totalorder %s34, 0
      %p155 = por %p153, %p154
      %s156 = ssub.s32 %s28, %s35
      %p157 = scmp.eq.s32.totalorder %s156, 0
      %s159 = sadd.s32 %s158, 1
      %s160 = scalar_select %p157, %s158, %s159
      %p163 = pneg %p157
      %p164 = scmp.eq.s32.totalorder %s28, 1
      %p165 = por %p163, %p164
      %p166 = scmp.ne.s32.totalorder %s158, %s161
      %p167 = scmp.eq.s32.totalorder %s28, 0
      %p168 = por %p166, %p167
      %p169 = scmp.ne.s32.totalorder %s158, %s161
      %p170 = scmp.eq.s32.totalorder %s33, 1
      %p171 = por %p169, %p170
      %p172 = scmp.ne.s32.totalorder %s161, %s162
      %p173 = scmp.eq.s32.totalorder %s33, 0
      %p174 = por %p172, %p173
      %p175 = scmp.ne.s32.totalorder %s161, %s162
      %p176 = scmp.eq.s32.totalorder %s34, 1
      %p177 = por %p175, %p176
      %p179 = scmp.ne.s32.totalorder %s162, %s178
      %p180 = scmp.eq.s32.totalorder %s34, 0
      %p181 = por %p179, %p180
      %s182 = ssub.s32 %s28, %s35
      %p183 = scmp.eq.s32.totalorder %s182, 0
      %s185 = sadd.s32 %s184, 1
      %s186 = scalar_select %p183, %s184, %s185
      %p189 = pneg %p183
      %p190 = scmp.eq.s32.totalorder %s28, 1
      %p191 = por %p189, %p190
      %p192 = scmp.ne.s32.totalorder %s184, %s187
      %p193 = scmp.eq.s32.totalorder %s28, 0
      %p194 = por %p192, %p193
      %p195 = scmp.ne.s32.totalorder %s184, %s187
      %p196 = scmp.eq.s32.totalorder %s33, 1
      %p197 = por %p195, %p196
      %p198 = scmp.ne.s32.totalorder %s187, %s188
      %p199 = scmp.eq.s32.totalorder %s33, 0
      %p200 = por %p198, %p199
      %p201 = scmp.ne.s32.totalorder %s187, %s188
      %p202 = scmp.eq.s32.totalorder %s34, 1
      %p203 = por %p201, %p202
      %p205 = scmp.ne.s32.totalorder %s188, %s204
      %p206 = scmp.eq.s32.totalorder %s34, 0
      %p207 = por %p205, %p206
      %s208 = ssub.s32 %s28, %s35
      %p209 = scmp.eq.s32.totalorder %s208, 0
      %s211 = sadd.s32 %s210, 1
      %s212 = scalar_select %p209, %s210, %s211
      %p215 = pneg %p209
      %p216 = scmp.eq.s32.totalorder %s28, 1
      %p217 = por %p215, %p216
      %p218 = scmp.ne.s32.totalorder %s210, %s213
      %p219 = scmp.eq.s32.totalorder %s28, 0
      %p220 = por %p218, %p219
      %p221 = scmp.ne.s32.totalorder %s210, %s213
      %p222 = scmp.eq.s32.totalorder %s33, 1
      %p223 = por %p221, %p222
      %p224 = scmp.ne.s32.totalorder %s213, %s214
      %p225 = scmp.eq.s32.totalorder %s33, 0
      %p226 = por %p224, %p225
      %p227 = scmp.ne.s32.totalorder %s213, %s214
      %p228 = scmp.eq.s32.totalorder %s34, 1
      %p229 = por %p227, %p228
      %p231 = scmp.ne.s32.totalorder %s214, %s230
      %p232 = scmp.eq.s32.totalorder %s34, 0
      %p233 = por %p231, %p232
      %s234 = ssub.s32 %s28, %s35
      %p235 = scmp.eq.s32.totalorder %s234, 0
      %s237 = sadd.s32 %s236, 1
      %s238 = scalar_select %p235, %s236, %s237
      %p241 = pneg %p235
      %p242 = scmp.eq.s32.totalorder %s28, 1
      %p243 = por %p241, %p242
      %p244 = scmp.ne.s32.totalorder %s236, %s239
      %p245 = scmp.eq.s32.totalorder %s28, 0
      %p246 = por %p244, %p245
      %p247 = scmp.ne.s32.totalorder %s236, %s239
      %p248 = scmp.eq.s32.totalorder %s33, 1
      %p249 = por %p247, %p248
      %p250 = scmp.ne.s32.totalorder %s239, %s240
      %p251 = scmp.eq.s32.totalorder %s33, 0
      %p252 = por %p250, %p251
      %p253 = scmp.ne.s32.totalorder %s239, %s240
      %p254 = scmp.eq.s32.totalorder %s34, 1
      %p255 = por %p253, %p254
      %p257 = scmp.ne.s32.totalorder %s240, %s256
      %p258 = scmp.eq.s32.totalorder %s34, 0
      %p259 = por %p257, %p258
      %s260 = ssub.s32 %s28, %s35
      %p261 = scmp.eq.s32.totalorder %s260, 0
      %s263 = sadd.s32 %s262, 1
      %s264 = scalar_select %p261, %s262, %s263
      %p267 = pneg %p261
      %p268 = scmp.eq.s32.totalorder %s28, 1
      %p269 = por %p267, %p268
      %p270 = scmp.ne.s32.totalorder %s262, %s265
      %p271 = scmp.eq.s32.totalorder %s28, 0
      %p272 = por %p270, %p271
      %p273 = scmp.ne.s32.totalorder %s262, %s265
      %p274 = scmp.eq.s32.totalorder %s33, 1
      %p275 = por %p273, %p274
      %p276 = scmp.ne.s32.totalorder %s265, %s266
      %p277 = scmp.eq.s32.totalorder %s33, 0
      %p278 = por %p276, %p277
      %p279 = scmp.ne.s32.totalorder %s265, %s266
      %p280 = scmp.eq.s32.totalorder %s34, 1
      %p281 = por %p279, %p280
      %p283 = scmp.ne.s32.totalorder %s266, %s282
      %p284 = scmp.eq.s32.totalorder %s34, 0
      %p285 = por %p283, %p284
      %s286 = ssub.s32 %s28, %s35
      %p287 = scmp.eq.s32.totalorder %s286, 0
      %s289 = sadd.s32 %s288, 1
      %s290 = scalar_select %p287, %s288, %s289
      %p293 = pneg %p287
      %p294 = scmp.eq.s32.totalorder %s28, 1
      %p295 = por %p293, %p294
      %p296 = scmp.ne.s32.totalorder %s288, %s291
      %p297 = scmp.eq.s32.totalorder %s28, 0
      %p298 = por %p296, %p297
      %p299 = scmp.ne.s32.totalorder %s288, %s291
      %p300 = scmp.eq.s32.totalorder %s33, 1
      %p301 = por %p299, %p300
      %p302 = scmp.ne.s32.totalorder %s291, %s292
      %p303 = scmp.eq.s32.totalorder %s33, 0
      %p304 = por %p302, %p303
      %p305 = scmp.ne.s32.totalorder %s291, %s292
      %p306 = scmp.eq.s32.totalorder %s34, 1
      %p307 = por %p305, %p306
      %p309 = scmp.ne.s32.totalorder %s292, %s308
      %p310 = scmp.eq.s32.totalorder %s34, 0
      %p311 = por %p309, %p310
      %s312 = ssub.s32 %s28, %s35
      %p313 = scmp.eq.s32.totalorder %s312, 0
      %s315 = sadd.s32 %s314, 1
      %s316 = scalar_select %p313, %s314, %s315
      %p319 = pneg %p313
      %p320 = scmp.eq.s32.totalorder %s28, 1
      %p321 = por %p319, %p320
      %p322 = scmp.ne.s32.totalorder %s314, %s317
      %p323 = scmp.eq.s32.totalorder %s28, 0
      %p324 = por %p322, %p323
      %p325 = scmp.ne.s32.totalorder %s314, %s317
      %p326 = scmp.eq.s32.totalorder %s33, 1
      %p327 = por %p325, %p326
      %p328 = scmp.ne.s32.totalorder %s317, %s318
      %p329 = scmp.eq.s32.totalorder %s33, 0
      %p330 = por %p328, %p329
      %p331 = scmp.ne.s32.totalorder %s317, %s318
      %p332 = scmp.eq.s32.totalorder %s34, 1
      %p333 = por %p331, %p332
      %p335 = scmp.ne.s32.totalorder %s318, %s334
      %p336 = scmp.eq.s32.totalorder %s34, 0
      %p337 = por %p335, %p336
      %s338 = ssub.s32 %s28, %s35
      %p339 = scmp.eq.s32.totalorder %s338, 0
      %s341 = sadd.s32 %s340, 1
      %s342 = scalar_select %p339, %s340, %s341
      %p345 = pneg %p339
      %p346 = scmp.eq.s32.totalorder %s28, 1
      %p347 = por %p345, %p346
      %p348 = scmp.ne.s32.totalorder %s340, %s343
      %p349 = scmp.eq.s32.totalorder %s28, 0
      %p350 = por %p348, %p349
      %p351 = scmp.ne.s32.totalorder %s340, %s343
      %p352 = scmp.eq.s32.totalorder %s33, 1
      %p353 = por %p351, %p352
      %p354 = scmp.ne.s32.totalorder %s343, %s344
      %p355 = scmp.eq.s32.totalorder %s33, 0
      %p356 = por %p354, %p355
      %p357 = scmp.ne.s32.totalorder %s343, %s344
      %p358 = scmp.eq.s32.totalorder %s34, 1
      %p359 = por %p357, %p358
      %p361 = scmp.ne.s32.totalorder %s344, %s360
      %p362 = scmp.eq.s32.totalorder %s34, 0
      %p363 = por %p361, %p362
      %s364 = ssub.s32 %s28, %s35
      %p365 = scmp.eq.s32.totalorder %s364, 0
      %s367 = sadd.s32 %s366, 1
      %s368 = scalar_select %p365, %s366, %s367
      %p371 = pneg %p365
      %p372 = scmp.eq.s32.totalorder %s28, 1
      %p373 = por %p371, %p372
      %p374 = scmp.ne.s32.totalorder %s366, %s369
      %p375 = scmp.eq.s32.totalorder %s28, 0
      %p376 = por %p374, %p375
      %p377 = scmp.ne.s32.totalorder %s366, %s369
      %p378 = scmp.eq.s32.totalorder %s33, 1
      %p379 = por %p377, %p378
      %p380 = scmp.ne.s32.totalorder %s369, %s370
      %p381 = scmp.eq.s32.totalorder %s33, 0
      %p382 = por %p380, %p381
      %p383 = scmp.ne.s32.totalorder %s369, %s370
      %p384 = scmp.eq.s32.totalorder %s34, 1
      %p385 = por %p383, %p384
      %p387 = scmp.ne.s32.totalorder %s370, %s386
      %p388 = scmp.eq.s32.totalorder %s34, 0
      %p389 = por %p387, %p388
      %s391 = sadd.s32 %s390, 1
      %p394 = scmp.eq.s32.totalorder %s28, 1
      %p395 = scmp.ne.s32.totalorder %s390, %s392
      %p396 = scmp.eq.s32.totalorder %s28, 0
      %p397 = por %p395, %p396
      %p398 = scmp.ne.s32.totalorder %s390, %s392
      %p399 = scmp.eq.s32.totalorder %s33, 1
      %p400 = por %p398, %p399
      %p401 = scmp.ne.s32.totalorder %s392, %s393
      %p402 = scmp.eq.s32.totalorder %s33, 0
      %p403 = por %p401, %p402
      %p404 = scmp.ne.s32.totalorder %s392, %s393
      %p405 = scmp.eq.s32.totalorder %s34, 1
      %p406 = por %p404, %p405
      %p408 = scmp.ne.s32.totalorder %s393, %s407
      %p409 = scmp.eq.s32.totalorder %s34, 0
      %p410 = por %p408, %p409
      %p411 = scmp.le.s32.totalorder 1, %s28
      %p412 = scmp.lt.s32.totalorder %s28, 3
      %p413 = pnand %p411, %p412
      %p414 = pneg %p413
      // Predicated region
      $region9: #{tpu_custom_call.1} parent=5 // pred_check
        _
      $region10: #{tpu_custom_call.1} parent=5 // pred_check_branch
        %416 = sbr.rel (%p413) target = $region12
      $region11: #{tpu_custom_call.1} parent=5 // pred_region
        %s417 = ssub.s32 %s28, 1
        // Predicated region
        $region13: #{tpu_custom_call.1} parent=11 // pred_check
          %p418 = pneg %p49
        $region14: #{tpu_custom_call.1} parent=11 // pred_check_branch
          %420 = sbr.rel (%p418) target = $region16
        $region15: #{tpu_custom_call.1} parent=11 // pred_region
          _
        $region16: #{tpu_custom_call.1} parent=11 // pred_fallthru
          _
        // Predicated region
        $region17: #{tpu_custom_call.1} parent=11 // pred_check
          %p421 = pneg %p70
        $region18: #{tpu_custom_call.1} parent=11 // pred_check_branch
          %423 = sbr.rel (%p421) target = $region20
        $region19: #{tpu_custom_call.1} parent=11 // pred_region
          %s425 = ssub.s32 64, 64
          %426 = vsyncadd [#allocation5], %s425
          %s427 = sshll.u32 [#allocation4], 4
          %s428 = int_to_ptr.vmem [resolvable:$true] %s427
          %433 = dma.hbm_to_vmem [thread:$0]  %s1, 64, %s428, [#allocation5], 16, 16, 1
        $region20: #{tpu_custom_call.1} parent=11 // pred_fallthru
          _
      $region12: #{tpu_custom_call.1} parent=5 // pred_fallthru
        _
      %p434 = scmp.lt.s32.totalorder %s28, 2
      // Predicated region
      $region21: #{tpu_custom_call.1} parent=5 // pred_check
        %p435 = pneg %p434
      $region22: #{tpu_custom_call.1} parent=5 // pred_check_branch
        %437 = sbr.rel (%p435) target = $region24
      $region23: #{tpu_custom_call.1} parent=5 // pred_region
        // Predicated region
        $region25: #{tpu_custom_call.1} parent=23 // pred_check
          %p438 = pneg %p90
        $region26: #{tpu_custom_call.1} parent=23 // pred_check_branch
          %440 = sbr.rel (%p438) target = $region28
        $region27: #{tpu_custom_call.1} parent=23 // pred_region
          %p441 = scmp.lt.s32.totalorder %s28, 1
          %s442 = scalar_select %p441, %s28, 1
          %s443 = smul.addr %s442, 4
          %s444 = smul.addr %s443, 4
          %s445 = scalar_lea.vmem %s2, %s444
        $region28: #{tpu_custom_call.1} parent=23 // pred_fallthru
          _
        // Predicated region
        $region29: #{tpu_custom_call.1} parent=23 // pred_check
          %p446 = pneg %p116
        $region30: #{tpu_custom_call.1} parent=23 // pred_check_branch
          %448 = sbr.rel (%p446) target = $region32
        $region31: #{tpu_custom_call.1} parent=23 // pred_region
          %p449 = scmp.lt.s32.totalorder %s28, 1
          %s450 = scalar_select %p449, %s28, 1
          %s451 = scalar_lea.vmem %s3, %s450
        $region32: #{tpu_custom_call.1} parent=23 // pred_fallthru
          _
        // Predicated region
        $region33: #{tpu_custom_call.1} parent=23 // pred_check
          %p452 = pneg %p142
        $region34: #{tpu_custom_call.1} parent=23 // pred_check_branch
          %454 = sbr.rel (%p452) target = $region36
        $region35: #{tpu_custom_call.1} parent=23 // pred_region
          %p455 = scmp.lt.s32.totalorder %s28, 1
          %s456 = scalar_select %p455, %s28, 1
          %s457 = smul.addr %s456, 4
          %s458 = smul.addr %s457, 4
          %s459 = scalar_lea.vmem %s4, %s458
        $region36: #{tpu_custom_call.1} parent=23 // pred_fallthru
          _
        // Predicated region
        $region37: #{tpu_custom_call.1} parent=23 // pred_check
          %p460 = pneg %p168
        $region38: #{tpu_custom_call.1} parent=23 // pred_check_branch
          %462 = sbr.rel (%p460) target = $region40
        $region39: #{tpu_custom_call.1} parent=23 // pred_region
          %p463 = scmp.lt.s32.totalorder %s28, 1
          %s464 = scalar_select %p463, %s28, 1
          %s465 = scalar_lea.vmem %s5, %s464
        $region40: #{tpu_custom_call.1} parent=23 // pred_fallthru
          _
        // Predicated region
        $region41: #{tpu_custom_call.1} parent=23 // pred_check
          %p466 = pneg %p194
        $region42: #{tpu_custom_call.1} parent=23 // pred_check_branch
          %468 = sbr.rel (%p466) target = $region44
        $region43: #{tpu_custom_call.1} parent=23 // pred_region
          %s469 = sand.u32 %s28, 1
          %s470 = scalar_lea.sflag [#allocation8], %s469
          %s471 = sand.u32 %s184, 1
          %s472 = scalar_lea.vmem [#allocation7], %s471
          %s474 = ssub.s32 16, 16
          %475 = vsyncadd %s470, %s474
          %s476 = smul.addr %s28, 16
          %s477 = scalar_lea.hbm %s6, %s476
          %s479 = sshll.u32 %s472, 4
          %s480 = int_to_ptr.vmem [resolvable:$true] %s479
          %482 = dma.hbm_to_vmem [thread:$0]  %s477, 16, %s480, %s470
        $region44: #{tpu_custom_call.1} parent=23 // pred_fallthru
          _
        // Predicated region
        $region45: #{tpu_custom_call.1} parent=23 // pred_check
          %p483 = pneg %p220
        $region46: #{tpu_custom_call.1} parent=23 // pred_check_branch
          %485 = sbr.rel (%p483) target = $region48
        $region47: #{tpu_custom_call.1} parent=23 // pred_region
          %s486 = sand.u32 %s28, 1
          %s487 = scalar_lea.sflag [#allocation8], %s486
          %s488 = sand.u32 %s210, 1
          %s489 = scalar_lea.vmem [#allocation9], %s488
          %s491 = ssub.s32 16, 16
          %492 = vsyncadd %s487, %s491
          %s493 = smul.addr %s28, 16
          %s494 = scalar_lea.hbm %s7, %s493
          %s496 = sshll.u32 %s489, 4
          %s497 = int_to_ptr.vmem [resolvable:$true] %s496
          %499 = dma.hbm_to_vmem [thread:$0]  %s494, 16, %s497, %s487
        $region48: #{tpu_custom_call.1} parent=23 // pred_fallthru
          _
        // Predicated region
        $region49: #{tpu_custom_call.1} parent=23 // pred_check
          %p500 = pneg %p246
        $region50: #{tpu_custom_call.1} parent=23 // pred_check_branch
          %502 = sbr.rel (%p500) target = $region52
        $region51: #{tpu_custom_call.1} parent=23 // pred_region
          %s503 = sand.u32 %s28, 1
          %s504 = scalar_lea.sflag [#allocation11], %s503
          %s505 = sand.u32 %s236, 1
          %s506 = smul.addr %s505, 16
          %s507 = scalar_lea.vmem [#allocation10], %s506
          %s509 = ssub.s32 256, 256
          %510 = vsyncadd %s504, %s509
          %s511 = smul.addr %s28, 4
          %s512 = smul.addr %s511, 64
          %s513 = scalar_lea.hbm %s8, %s512
          %s514 = sshll.u32 %s507, 4
          %s515 = int_to_ptr.vmem [resolvable:$true] %s514
          %520 = dma.hbm_to_vmem [thread:$0]  %s513, 256, %s515, %s504, 64, 64, 4
        $region52: #{tpu_custom_call.1} parent=23 // pred_fallthru
          _
        // Predicated region
        $region53: #{tpu_custom_call.1} parent=23 // pred_check
          %p521 = pneg %p272
        $region54: #{tpu_custom_call.1} parent=23 // pred_check_branch
          %523 = sbr.rel (%p521) target = $region56
        $region55: #{tpu_custom_call.1} parent=23 // pred_region
          %s524 = sand.u32 %s28, 1
          %s525 = scalar_lea.sflag [#allocation11], %s524
          %s526 = sand.u32 %s262, 1
          %s527 = scalar_lea.vmem [#allocation12], %s526
          %s529 = ssub.s32 16, 16
          %530 = vsyncadd %s525, %s529
          %s531 = smul.addr %s28, 16
          %s532 = scalar_lea.hbm %s9, %s531
          %s534 = sshll.u32 %s527, 4
          %s535 = int_to_ptr.vmem [resolvable:$true] %s534
          %537 = dma.hbm_to_vmem [thread:$0]  %s532, 16, %s535, %s525
        $region56: #{tpu_custom_call.1} parent=23 // pred_fallthru
          _
        // Predicated region
        $region57: #{tpu_custom_call.1} parent=23 // pred_check
          %p538 = pneg %p298
        $region58: #{tpu_custom_call.1} parent=23 // pred_check_branch
          %540 = sbr.rel (%p538) target = $region60
        $region59: #{tpu_custom_call.1} parent=23 // pred_region
          %p541 = scmp.lt.s32.totalorder %s28, 1
          %s542 = scalar_select %p541, %s28, 1
          %s543 = smul.addr %s542, 8
          %s544 = smul.addr %s543, 4
          %s545 = scalar_lea.vmem %s10, %s544
        $region60: #{tpu_custom_call.1} parent=23 // pred_fallthru
          _
        // Predicated region
        $region61: #{tpu_custom_call.1} parent=23 // pred_check
          %p546 = pneg %p324
        $region62: #{tpu_custom_call.1} parent=23 // pred_check_branch
          %548 = sbr.rel (%p546) target = $region64
        $region63: #{tpu_custom_call.1} parent=23 // pred_region
          %p549 = scmp.lt.s32.totalorder %s28, 1
          %s550 = scalar_select %p549, %s28, 1
          %s551 = scalar_lea.vmem %s11, %s550
        $region64: #{tpu_custom_call.1} parent=23 // pred_fallthru
          _
        // Predicated region
        $region65: #{tpu_custom_call.1} parent=23 // pred_check
          %p552 = pneg %p350
        $region66: #{tpu_custom_call.1} parent=23 // pred_check_branch
          %554 = sbr.rel (%p552) target = $region68
        $region67: #{tpu_custom_call.1} parent=23 // pred_region
          %p555 = scmp.lt.s32.totalorder %s28, 1
          %s556 = scalar_select %p555, %s28, 1
          %s557 = scalar_lea.vmem %s12, %s556
        $region68: #{tpu_custom_call.1} parent=23 // pred_fallthru
          _
        // Predicated region
        $region69: #{tpu_custom_call.1} parent=23 // pred_check
          %p558 = pneg %p376
        $region70: #{tpu_custom_call.1} parent=23 // pred_check_branch
          %560 = sbr.rel (%p558) target = $region72
        $region71: #{tpu_custom_call.1} parent=23 // pred_region
          %p561 = scmp.lt.s32.totalorder %s28, 1
          %s562 = scalar_select %p561, %s28, 1
          %s563 = scalar_lea.vmem %s13, %s562
        $region72: #{tpu_custom_call.1} parent=23 // pred_fallthru
          _
      $region24: #{tpu_custom_call.1} parent=5 // pred_fallthru
        _
      %p564 = scmp.le.s32.totalorder 1, %s28
      %p565 = scmp.lt.s32.totalorder %s28, 3
      %p566 = pnand %p564, %p565
      %p567 = pneg %p566
      // Predicated region
      $region73: #{tpu_custom_call.1} parent=5 // pred_check
        _
      $region74: #{tpu_custom_call.1} parent=5 // pred_check_branch
        %569 = sbr.rel (%p566) target = $region76
      $region75: #{tpu_custom_call.1} parent=5 // pred_region
        %s570 = ssub.s32 %s28, 1
        // Predicated region
        $region77: #{tpu_custom_call.1} parent=75 // pred_check
          %p571 = pneg %p70
        $region78: #{tpu_custom_call.1} parent=75 // pred_check_branch
          %573 = sbr.rel (%p571) target = $region80
        $region79: #{tpu_custom_call.1} parent=75 // pred_region
          %574 = dma.done [#allocation5], 64
        $region80: #{tpu_custom_call.1} parent=75 // pred_fallthru
          _
        %s575 = sand.u32 %s33, 1
        %s576 = scalar_lea.sflag [#allocation8], %s575
        %s577 = sand.u32 %s187, 1
        %s578 = scalar_lea.vmem [#allocation7], %s577
        // Predicated region
        $region81: #{tpu_custom_call.1} parent=75 // pred_check
          %p579 = pneg %p200
        $region82: #{tpu_custom_call.1} parent=75 // pred_check_branch
          %581 = sbr.rel (%p579) target = $region84
        $region83: #{tpu_custom_call.1} parent=75 // pred_region
          %582 = dma.done %s576, 16
        $region84: #{tpu_custom_call.1} parent=75 // pred_fallthru
          _
        %s583 = sand.u32 %s33, 1
        %s584 = scalar_lea.sflag [#allocation8], %s583
        %s585 = sand.u32 %s213, 1
        %s586 = scalar_lea.vmem [#allocation9], %s585
        // Predicated region
        $region85: #{tpu_custom_call.1} parent=75 // pred_check
          %p587 = pneg %p226
        $region86: #{tpu_custom_call.1} parent=75 // pred_check_branch
          %589 = sbr.rel (%p587) target = $region88
        $region87: #{tpu_custom_call.1} parent=75 // pred_region
          %590 = dma.done %s584, 16
        $region88: #{tpu_custom_call.1} parent=75 // pred_fallthru
          _
        %s591 = sand.u32 %s33, 1
        %s592 = scalar_lea.sflag [#allocation11], %s591
        %s593 = sand.u32 %s239, 1
        %s594 = smul.addr %s593, 16
        %s595 = scalar_lea.vmem [#allocation10], %s594
        // Predicated region
        $region89: #{tpu_custom_call.1} parent=75 // pred_check
          %p596 = pneg %p252
        $region90: #{tpu_custom_call.1} parent=75 // pred_check_branch
          %598 = sbr.rel (%p596) target = $region92
        $region91: #{tpu_custom_call.1} parent=75 // pred_region
          %599 = dma.done %s592, 256
        $region92: #{tpu_custom_call.1} parent=75 // pred_fallthru
          _
        %s600 = sand.u32 %s33, 1
        %s601 = scalar_lea.sflag [#allocation11], %s600
        %s602 = sand.u32 %s265, 1
        %s603 = scalar_lea.vmem [#allocation12], %s602
        // Predicated region
        $region93: #{tpu_custom_call.1} parent=75 // pred_check
          %p604 = pneg %p278
        $region94: #{tpu_custom_call.1} parent=75 // pred_check_branch
          %606 = sbr.rel (%p604) target = $region96
        $region95: #{tpu_custom_call.1} parent=75 // pred_region
          %607 = dma.done %s601, 16
        $region96: #{tpu_custom_call.1} parent=75 // pred_fallthru
          _
        %p608 = pneg %p49
        %p609 = pneg %p46
        %p610 = pneg %p70
        %p611 = pneg %p67
        %p612 = scmp.lt.s32.totalorder %s33, 1
        %s613 = scalar_select %p612, %s33, 1
        %s614 = smul.addr %s613, 4
        %s615 = smul.addr %s614, 4
        %s616 = scalar_lea.vmem %s2, %s615
        %p617 = pneg %p96
        %p618 = pneg %p93
        %p619 = scmp.lt.s32.totalorder %s33, 1
        %s620 = scalar_select %p619, %s33, 1
        %s621 = scalar_lea.vmem %s3, %s620
        %p622 = pneg %p122
        %p623 = pneg %p119
        %p624 = scmp.lt.s32.totalorder %s33, 1
        %s625 = scalar_select %p624, %s33, 1
        %s626 = smul.addr %s625, 4
        %s627 = smul.addr %s626, 4
        %s628 = scalar_lea.vmem %s4, %s627
        %p629 = pneg %p148
        %p630 = pneg %p145
        %p631 = scmp.lt.s32.totalorder %s33, 1
        %s632 = scalar_select %p631, %s33, 1
        %s633 = scalar_lea.vmem %s5, %s632
        %p634 = pneg %p174
        %p635 = pneg %p171
        %s636 = sand.u32 %s33, 1
        %s637 = scalar_lea.sflag [#allocation8], %s636
        %s638 = sand.u32 %s187, 1
        %s639 = scalar_lea.vmem [#allocation7], %s638
        %p640 = pneg %p200
        %p641 = pneg %p197
        %s642 = sand.u32 %s33, 1
        %s643 = scalar_lea.sflag [#allocation8], %s642
        %s644 = sand.u32 %s213, 1
        %s645 = scalar_lea.vmem [#allocation9], %s644
        %p646 = pneg %p226
        %p647 = pneg %p223
        %s648 = sand.u32 %s33, 1
        %s649 = scalar_lea.sflag [#allocation11], %s648
        %s650 = sand.u32 %s239, 1
        %s651 = smul.addr %s650, 16
        %s652 = scalar_lea.vmem [#allocation10], %s651
        %p653 = pneg %p252
        %p654 = pneg %p249
        %s655 = sand.u32 %s33, 1
        %s656 = scalar_lea.sflag [#allocation11], %s655
        %s657 = sand.u32 %s265, 1
        %s658 = scalar_lea.vmem [#allocation12], %s657
        %p659 = pneg %p278
        %p660 = pneg %p275
        %p661 = scmp.lt.s32.totalorder %s33, 1
        %s662 = scalar_select %p661, %s33, 1
        %s663 = smul.addr %s662, 8
        %s664 = smul.addr %s663, 4
        %s665 = scalar_lea.vmem %s10, %s664
        %p666 = pneg %p304
        %p667 = pneg %p301
        %p668 = scmp.lt.s32.totalorder %s33, 1
        %s669 = scalar_select %p668, %s33, 1
        %s670 = scalar_lea.vmem %s11, %s669
        %p671 = pneg %p330
        %p672 = pneg %p327
        %p673 = scmp.lt.s32.totalorder %s33, 1
        %s674 = scalar_select %p673, %s33, 1
        %s675 = scalar_lea.vmem %s12, %s674
        %p676 = pneg %p356
        %p677 = pneg %p353
        %p678 = scmp.lt.s32.totalorder %s33, 1
        %s679 = scalar_select %p678, %s33, 1
        %s680 = scalar_lea.vmem %s13, %s679
        %p681 = pneg %p382
        %p682 = pneg %p379
        %p683 = pneg %p403
        %p684 = pneg %p400
        %p685 = scmp.lt.s32.totalorder %s33, 1
        %s686 = scalar_select %p685, %s33, 1
        %s687 = smul.addr %s686, 4
        %s688 = smul.addr %s687, 4
        %s689 = scalar_lea.vmem %s2, %s688
        %p690 = scmp.lt.s32.totalorder %s33, 1
        %s691 = scalar_select %p690, %s33, 1
        %s692 = scalar_lea.vmem %s3, %s691
        %p693 = scmp.lt.s32.totalorder %s33, 1
        %s694 = scalar_select %p693, %s33, 1
        %s695 = smul.addr %s694, 4
        %s696 = smul.addr %s695, 4
        %s697 = scalar_lea.vmem %s4, %s696
        %p698 = scmp.lt.s32.totalorder %s33, 1
        %s699 = scalar_select %p698, %s33, 1
        %s700 = scalar_lea.vmem %s5, %s699
        %p701 = scmp.lt.s32.totalorder %s33, 1
        %s702 = scalar_select %p701, %s33, 1
        %s703 = smul.addr %s702, 8
        %s704 = smul.addr %s703, 4
        %s705 = scalar_lea.vmem %s10, %s704
        %p706 = scmp.lt.s32.totalorder %s33, 1
        %s707 = scalar_select %p706, %s33, 1
        %s708 = scalar_lea.vmem %s11, %s707
        %p709 = scmp.lt.s32.totalorder %s33, 1
        %s710 = scalar_select %p709, %s33, 1
        %s711 = scalar_lea.vmem %s12, %s710
        %p712 = scmp.lt.s32.totalorder %s33, 1
        %s713 = scalar_select %p712, %s33, 1
        %s714 = scalar_lea.vmem %s13, %s713
        %p716 = scmp.eq.s32.totalorder %s33, 0
        // Predicated region
        $region97: #{tpu_custom_call.1} parent=75 // pred_check
          %p717 = pneg %p716
        $region98: #{tpu_custom_call.1} parent=75 // pred_check_branch
          %719 = sbr.rel (%p717) target = $region100
        $region99: #{tpu_custom_call.1} parent=75 // pred_region
          %v720 = vld [vmem:[%s0] sm:$0xff]
          %v721 = vld [vmem:[%s0 + $0x8] sm:$0xff]
          %v722 = vld [vmem:[%s0 + $0x10] sm:$0xff]
          %v723 = vld [vmem:[%s0 + $0x18] sm:$0xff]
          %vm724 = vcmask 261120
          %725 = vst.msk [vmem:[#allocation2] sm:$0xff] %vm724, %v720
          %726 = vst.msk [vmem:[#allocation2 + $0x8] sm:$0xff] %vm724, %v721
          %727 = vst.msk [vmem:[#allocation2 + $0x10] sm:$0xff] %vm724, %v722
          %728 = vst.msk [vmem:[#allocation2 + $0x18] sm:$0xff] %vm724, %v723
        $region100: #{tpu_custom_call.1} parent=75 // pred_fallthru
          _
        %v729 = vld [vmem:[#allocation2] sm:$0xff]
        %v730 = vld [vmem:[#allocation2 + $0x8] sm:$0xff]
        %v731 = vld [vmem:[#allocation2 + $0x10] sm:$0xff]
        %v732 = vld [vmem:[#allocation2 + $0x18] sm:$0xff]
        %v733 = vld [vmem:[#allocation4] sm:$0x1]
        %v734 = vld [vmem:[#allocation4 + $0x1] sm:$0x1]
        %v735 = vld [vmem:[#allocation4 + $0x2] sm:$0x1]
        %v736 = vld [vmem:[#allocation4 + $0x3] sm:$0x1]
        %v737 = vpack.c.bf16 %v730, %v729
        %v738 = vpack.c.bf16 %v732, %v731
        %v739 = vld [vmem:[%s689] sm:$0xf]
        %v740 = vld [vmem:[%s689 + $0x4] sm:$0xf]
        %v741 = vld [vmem:[%s689 + $0x8] sm:$0xf]
        %v742 = vld [vmem:[%s689 + $0xc] sm:$0xf]
        %v743 = vld [vmem:[%s692] sm:$0x1]
        %v745 = vlaneseq
        %v746 = vshrl.u32 %v745, 7
        %v747 = vsub.s32 0, %v746
        %v748 = vrot.slane %v743, %v747
        %v754 = vunpack.c.l.b16 %v739
        %v755 = vunpack.c.l.b16 %v740
        %v756 = vunpack.c.l.b16 %v741
        %v757 = vunpack.c.l.b16 %v742
        %v758 = vpack.c.b16 %v755, %v754
        %v759 = vpack.c.b16 %v757, %v756
        %vm762 = vcmask 261120
        %v764 = vsel %vm762, %v737, 0
        %v767 = vsel %vm762, %v738, 0
        %769 = vmatprep.subr.bf16.mxu0 0
        %770 = vmatpush1.bf16.msra.mxu0 %v758
        %771 = vmatprep.subr.bf16.mxu0 0
        %772 = vmatpush1.bf16.msra.mxu0 %v759
        %773 = vmatprep.subr.bf16.mxu0 0
        %774 = vmatpush1.bf16.msra.mxu0 0
        %775 = vmatprep.subr.bf16.mxu0 0
        %776 = vmatpush1.bf16.msra.mxu0 0
        %777 = vmatprep.subr.bf16.mxu0 0
        %778 = vmatpush1.bf16.msra.mxu0 0
        %779 = vmatprep.subr.bf16.mxu0 0
        %780 = vmatpush1.bf16.msra.mxu0 0
        %781 = vmatprep.subr.bf16.mxu0 0
        %782 = vmatpush1.bf16.msra.mxu0 0
        %783 = vmatprep.subr.bf16.mxu0 0
        %784 = vmatpush1.bf16.msra.mxu0 0
        %785 = vmatprep.subr.bf16.mxu0 0
        %786 = vmatpush1.bf16.msra.mxu0 0
        %787 = vmatprep.subr.bf16.mxu0 0
        %788 = vmatpush1.bf16.msra.mxu0 0
        %789 = vmatprep.subr.bf16.mxu0 0
        %790 = vmatpush1.bf16.msra.mxu0 0
        %791 = vmatprep.subr.bf16.mxu0 0
        %792 = vmatpush1.bf16.msra.mxu0 0
        %793 = vmatprep.subr.bf16.mxu0 0
        %794 = vmatpush1.bf16.msra.mxu0 0
        %795 = vmatprep.subr.bf16.mxu0 0
        %796 = vmatpush1.bf16.msra.mxu0 0
        %797 = vmatprep.subr.bf16.mxu0 0
        %798 = vmatpush1.bf16.msra.mxu0 0
        %799 = vmatprep.subr.bf16.mxu0 0
        %800 = vmatpush1.bf16.msra.mxu0 0
        %801 = vmatprep.mubr.bf16.mxu0 0
        %802 = vmatmul.mubr.bf16.gmra.mrb[0].mxu0 %v764
        %v803 = vpop.f32.mrb[0].mxu0
        %v804 = vadd.f32 %v748, %v803
        %v805 = vpop.f32.mrb[0].mxu0
        %v806 = vpop.f32.mrb[0].mxu0
        %v807 = vadd.f32 %v748, %v806
        %v808 = vpop.f32.mrb[0].mxu0
        %809 = vmatprep.mubr.bf16.mxu0 0
        %810 = vmatmul.mubr.bf16.gmra.mrb[0].mxu0 %v767
        %v811 = vpop.f32.mrb[0].mxu0
        %v812 = vadd.f32 %v748, %v811
        %v813 = vpop.f32.mrb[0].mxu0
        %v814 = vpop.f32.mrb[0].mxu0
        %v815 = vadd.f32 %v748, %v814
        %v816 = vpop.f32.mrb[0].mxu0
        %817 = vdwg.mxu0
        %v818 = vpack.c.bf16 %v804, %v804
        %v819 = vpack.c.bf16 %v807, %v807
        %v820 = vpack.c.bf16 %v812, %v812
        %v821 = vpack.c.bf16 %v815, %v815
        %823 = vrot.lane.b32.xlu0 %v818, 96
        %v824 = vpop.permute.xlu0 %823
        %vm825 = vcmask 64512
        %v827 = vsel %vm825, %v818, 0
        %v830 = vsel %vm825, %v824, 0
        %832 = vmatprep.subr.bf16.mxu0 0
        %833 = vmatpush1.bf16.xpose.msra.mxu0 %v830
        %834 = vmatprep.subr.bf16.mxu0 0
        %835 = vmatpush1.bf16.xpose.msra.mxu0 0
        %836 = vmatprep.subr.bf16.mxu0 0
        %837 = vmatpush1.bf16.xpose.msra.mxu0 0
        %838 = vmatprep.subr.bf16.mxu0 0
        %839 = vmatpush1.bf16.xpose.msra.mxu0 0
        %840 = vmatprep.subr.bf16.mxu0 0
        %841 = vmatpush1.bf16.xpose.msra.mxu0 0
        %842 = vmatprep.subr.bf16.mxu0 0
        %843 = vmatpush1.bf16.xpose.msra.mxu0 0
        %844 = vmatprep.subr.bf16.mxu0 0
        %845 = vmatpush1.bf16.xpose.msra.mxu0 0
        %846 = vmatprep.subr.bf16.mxu0 0
        %847 = vmatpush1.bf16.xpose.msra.mxu0 0
        %848 = vmatprep.subr.bf16.mxu0 0
        %849 = vmatpush1.bf16.xpose.msra.mxu0 0
        %850 = vmatprep.subr.bf16.mxu0 0
        %851 = vmatpush1.bf16.xpose.msra.mxu0 0
        %852 = vmatprep.subr.bf16.mxu0 0
        %853 = vmatpush1.bf16.xpose.msra.mxu0 0
        %854 = vmatprep.subr.bf16.mxu0 0
        %855 = vmatpush1.bf16.xpose.msra.mxu0 0
        %856 = vmatprep.subr.bf16.mxu0 0
        %857 = vmatpush1.bf16.xpose.msra.mxu0 0
        %858 = vmatprep.subr.bf16.mxu0 0
        %859 = vmatpush1.bf16.xpose.msra.mxu0 0
        %860 = vmatprep.subr.bf16.mxu0 0
        %861 = vmatpush1.bf16.xpose.msra.mxu0 0
        %862 = vmatprep.subr.bf16.mxu0 0
        %863 = vmatpush1.bf16.xpose.msra.mxu0 0
        %864 = vmatprep.mubr.bf16.mxu0 0
        %865 = vmatmul.mubr.bf16.gmra.mrb[0].mxu0 %v827
        %v866 = vpop.f32.mrb[0].mxu0
        %v867 = vadd.f32 0.0, %v866
        %v868 = vpop.f32.mrb[0].mxu0
        %v869 = vpop.f32.mrb[0].mxu0
        %v870 = vpop.f32.mrb[0].mxu0
        %871 = vdwg.mxu0
        %873 = vrot.lane.b32.xlu0 %v819, 96
        %v874 = vpop.permute.xlu0 %873
        %v876 = vsel %vm825, %v819, 0
        %v879 = vsel %vm825, %v874, 0
        %881 = vmatprep.subr.bf16.mxu0 0
        %882 = vmatpush1.bf16.xpose.msra.mxu0 %v879
        %883 = vmatprep.subr.bf16.mxu0 0
        %884 = vmatpush1.bf16.xpose.msra.mxu0 0
        %885 = vmatprep.subr.bf16.mxu0 0
        %886 = vmatpush1.bf16.xpose.msra.mxu0 0
        %887 = vmatprep.subr.bf16.mxu0 0
        %888 = vmatpush1.bf16.xpose.msra.mxu0 0
        %889 = vmatprep.subr.bf16.mxu0 0
        %890 = vmatpush1.bf16.xpose.msra.mxu0 0
        %891 = vmatprep.subr.bf16.mxu0 0
        %892 = vmatpush1.bf16.xpose.msra.mxu0 0
        %893 = vmatprep.subr.bf16.mxu0 0
        %894 = vmatpush1.bf16.xpose.msra.mxu0 0
        %895 = vmatprep.subr.bf16.mxu0 0
        %896 = vmatpush1.bf16.xpose.msra.mxu0 0
        %897 = vmatprep.subr.bf16.mxu0 0
        %898 = vmatpush1.bf16.xpose.msra.mxu0 0
        %899 = vmatprep.subr.bf16.mxu0 0
        %900 = vmatpush1.bf16.xpose.msra.mxu0 0
        %901 = vmatprep.subr.bf16.mxu0 0
        %902 = vmatpush1.bf16.xpose.msra.mxu0 0
        %903 = vmatprep.subr.bf16.mxu0 0
        %904 = vmatpush1.bf16.xpose.msra.mxu0 0
        %905 = vmatprep.subr.bf16.mxu0 0
        %906 = vmatpush1.bf16.xpose.msra.mxu0 0
        %907 = vmatprep.subr.bf16.mxu0 0
        %908 = vmatpush1.bf16.xpose.msra.mxu0 0
        %909 = vmatprep.subr.bf16.mxu0 0
        %910 = vmatpush1.bf16.xpose.msra.mxu0 0
        %911 = vmatprep.subr.bf16.mxu0 0
        %912 = vmatpush1.bf16.xpose.msra.mxu0 0
        %913 = vmatprep.mubr.bf16.mxu0 0
        %914 = vmatmul.mubr.bf16.gmra.mrb[0].mxu0 %v876
        %v915 = vpop.f32.mrb[0].mxu0
        %v916 = vadd.f32 0.0, %v915
        %v917 = vpop.f32.mrb[0].mxu0
        %v918 = vpop.f32.mrb[0].mxu0
        %v919 = vpop.f32.mrb[0].mxu0
        %920 = vdwg.mxu0
        %922 = vrot.lane.b32.xlu0 %v820, 96
        %v923 = vpop.permute.xlu0 %922
        %v925 = vsel %vm825, %v820, 0
        %v928 = vsel %vm825, %v923, 0
        %930 = vmatprep.subr.bf16.mxu0 0
        %931 = vmatpush1.bf16.xpose.msra.mxu0 %v928
        %932 = vmatprep.subr.bf16.mxu0 0
        %933 = vmatpush1.bf16.xpose.msra.mxu0 0
        %934 = vmatprep.subr.bf16.mxu0 0
        %935 = vmatpush1.bf16.xpose.msra.mxu0 0
        %936 = vmatprep.subr.bf16.mxu0 0
        %937 = vmatpush1.bf16.xpose.msra.mxu0 0
        %938 = vmatprep.subr.bf16.mxu0 0
        %939 = vmatpush1.bf16.xpose.msra.mxu0 0
        %940 = vmatprep.subr.bf16.mxu0 0
        %941 = vmatpush1.bf16.xpose.msra.mxu0 0
        %942 = vmatprep.subr.bf16.mxu0 0
        %943 = vmatpush1.bf16.xpose.msra.mxu0 0
        %944 = vmatprep.subr.bf16.mxu0 0
        %945 = vmatpush1.bf16.xpose.msra.mxu0 0
        %946 = vmatprep.subr.bf16.mxu0 0
        %947 = vmatpush1.bf16.xpose.msra.mxu0 0
        %948 = vmatprep.subr.bf16.mxu0 0
        %949 = vmatpush1.bf16.xpose.msra.mxu0 0
        %950 = vmatprep.subr.bf16.mxu0 0
        %951 = vmatpush1.bf16.xpose.msra.mxu0 0
        %952 = vmatprep.subr.bf16.mxu0 0
        %953 = vmatpush1.bf16.xpose.msra.mxu0 0
        %954 = vmatprep.subr.bf16.mxu0 0
        %955 = vmatpush1.bf16.xpose.msra.mxu0 0
        %956 = vmatprep.subr.bf16.mxu0 0
        %957 = vmatpush1.bf16.xpose.msra.mxu0 0
        %958 = vmatprep.subr.bf16.mxu0 0
        %959 = vmatpush1.bf16.xpose.msra.mxu0 0
        %960 = vmatprep.subr.bf16.mxu0 0
        %961 = vmatpush1.bf16.xpose.msra.mxu0 0
        %962 = vmatprep.mubr.bf16.mxu0 0
        %963 = vmatmul.mubr.bf16.gmra.mrb[0].mxu0 %v925
        %v964 = vpop.f32.mrb[0].mxu0
        %v965 = vadd.f32 0.0, %v964
        %v966 = vpop.f32.mrb[0].mxu0
        %v967 = vpop.f32.mrb[0].mxu0
        %v968 = vpop.f32.mrb[0].mxu0
        %969 = vdwg.mxu0
        %971 = vrot.lane.b32.xlu0 %v821, 96
        %v972 = vpop.permute.xlu0 %971
        %v974 = vsel %vm825, %v821, 0
        %v977 = vsel %vm825, %v972, 0
        %979 = vmatprep.subr.bf16.mxu0 0
        %980 = vmatpush1.bf16.xpose.msra.mxu0 %v977
        %981 = vmatprep.subr.bf16.mxu0 0
        %982 = vmatpush1.bf16.xpose.msra.mxu0 0
        %983 = vmatprep.subr.bf16.mxu0 0
        %984 = vmatpush1.bf16.xpose.msra.mxu0 0
        %985 = vmatprep.subr.bf16.mxu0 0
        %986 = vmatpush1.bf16.xpose.msra.mxu0 0
        %987 = vmatprep.subr.bf16.mxu0 0
        %988 = vmatpush1.bf16.xpose.msra.mxu0 0
        %989 = vmatprep.subr.bf16.mxu0 0
        %990 = vmatpush1.bf16.xpose.msra.mxu0 0
        %991 = vmatprep.subr.bf16.mxu0 0
        %992 = vmatpush1.bf16.xpose.msra.mxu0 0
        %993 = vmatprep.subr.bf16.mxu0 0
        %994 = vmatpush1.bf16.xpose.msra.mxu0 0
        %995 = vmatprep.subr.bf16.mxu0 0
        %996 = vmatpush1.bf16.xpose.msra.mxu0 0
        %997 = vmatprep.subr.bf16.mxu0 0
        %998 = vmatpush1.bf16.xpose.msra.mxu0 0
        %999 = vmatprep.subr.bf16.mxu0 0
        %1000 = vmatpush1.bf16.xpose.msra.mxu0 0
        %1001 = vmatprep.subr.bf16.mxu0 0
        %1002 = vmatpush1.bf16.xpose.msra.mxu0 0
        %1003 = vmatprep.subr.bf16.mxu0 0
        %1004 = vmatpush1.bf16.xpose.msra.mxu0 0
        %1005 = vmatprep.subr.bf16.mxu0 0
        %1006 = vmatpush1.bf16.xpose.msra.mxu0 0
        %1007 = vmatprep.subr.bf16.mxu0 0
        %1008 = vmatpush1.bf16.xpose.msra.mxu0 0
        %1009 = vmatprep.subr.bf16.mxu0 0
        %1010 = vmatpush1.bf16.xpose.msra.mxu0 0
        %1011 = vmatprep.mubr.bf16.mxu0 0
        %1012 = vmatmul.mubr.bf16.gmra.mrb[0].mxu0 %v974
        %v1013 = vpop.f32.mrb[0].mxu0
        %v1014 = vadd.f32 0.0, %v1013
        %v1015 = vpop.f32.mrb[0].mxu0
        %v1016 = vpop.f32.mrb[0].mxu0
        %v1017 = vpop.f32.mrb[0].mxu0
        %1018 = vdwg.mxu0
        %v1019 = vmul.f32 %v867, 0.35355338
        %v1020 = vmul.f32 %v916, 0.35355338
        %v1021 = vmul.f32 %v965, 0.35355338
        %v1022 = vmul.f32 %v1014, 0.35355338
        %v1027 = vlaneseq
        %v1028 = vshrl.u32 %v1027, 7
        %v1029 = vsub.s32 0, %v1028
        %v1030 = vrot.slane %v733, %v1029
        %v1031 = vlaneseq
        %v1032 = vshrl.u32 %v1031, 7
        %v1033 = vsub.s32 0, %v1032
        %v1034 = vrot.slane %v734, %v1033
        %v1035 = vlaneseq
        %v1036 = vshrl.u32 %v1035, 7
        %v1037 = vsub.s32 0, %v1036
        %v1038 = vrot.slane %v735, %v1037
        %v1039 = vlaneseq
        %v1040 = vshrl.u32 %v1039, 7
        %v1041 = vsub.s32 0, %v1040
        %v1042 = vrot.slane %v736, %v1041
        %v1047 = vadd.f32 %v1019, %v1030
        %v1048 = vadd.f32 %v1020, %v1034
        %v1049 = vadd.f32 %v1021, %v1038
        %v1050 = vadd.f32 %v1022, %v1042
        %v1051 = vsel %vm825, %v1047, -inf
        %1052 = vmax.xlane.f32.xlu0 %v1051
        %v1053 = vpop.xlane.xlu0 %1052
        %v1054 = vsel %vm825, %v1048, -inf
        %1055 = vmax.xlane.f32.xlu0 %v1054
        %v1056 = vpop.xlane.xlu0 %1055
        %v1057 = vsel %vm825, %v1049, -inf
        %1058 = vmax.xlane.f32.xlu0 %v1057
        %v1059 = vpop.xlane.xlu0 %1058
        %v1060 = vsel %vm825, %v1050, -inf
        %1061 = vmax.xlane.f32.xlu0 %v1060
        %v1062 = vpop.xlane.xlu0 %1061
        %v1063 = vsub.f32 %v1047, %v1053
        %v1064 = vsub.f32 %v1048, %v1056
        %v1065 = vsub.f32 %v1049, %v1059
        %v1066 = vsub.f32 %v1050, %v1062
        %v1067 = vmul.f32 %v1063, 1.442695
        %v1068 = vpow.pop %v1067
        %v1069 = vmul.f32 %v1064, 1.442695
        %v1070 = vpow.pop %v1069
        %v1071 = vmul.f32 %v1065, 1.442695
        %v1072 = vpow.pop %v1071
        %v1073 = vmul.f32 %v1066, 1.442695
        %v1074 = vpow.pop %v1073
        %v1075 = vsel %vm825, %v1068, 0.0
        %1076 = vadd.xlane.f32.xlu0 %v1075
        %v1077 = vpop.xlane.xlu0 %1076
        %v1078 = vsel %vm825, %v1070, 0.0
        %1079 = vadd.xlane.f32.xlu0 %v1078
        %v1080 = vpop.xlane.xlu0 %1079
        %v1081 = vsel %vm825, %v1072, 0.0
        %1082 = vadd.xlane.f32.xlu0 %v1081
        %v1083 = vpop.xlane.xlu0 %1082
        %v1084 = vsel %vm825, %v1074, 0.0
        %1085 = vadd.xlane.f32.xlu0 %v1084
        %v1086 = vpop.xlane.xlu0 %1085
        %v1087 = vrcp.pop %v1077
        %v1088 = vrcp.pop %v1080
        %v1089 = vrcp.pop %v1083
        %v1090 = vrcp.pop %v1086
        %v1091 = vmul.f32 %v1068, %v1087
        %v1092 = vmul.f32 %v1070, %v1088
        %v1093 = vmul.f32 %v1072, %v1089
        %v1094 = vmul.f32 %v1074, %v1090
        %v1095 = vpack.c.bf16 %v1091, %v1091
        %v1096 = vpack.c.bf16 %v1092, %v1092
        %v1097 = vpack.c.bf16 %v1093, %v1093
        %v1098 = vpack.c.bf16 %v1094, %v1094
        %1099 = vrot.lane.b32.xlu0 %v818, 64
        %v1100 = vpop.permute.xlu0 %1099
        %v1102 = vsel %vm825, %v1095, 0
        %vm1104 = vcmask 1043456
        %v1106 = vsel %vm1104, %v1100, 0
        %1108 = vmatprep.subr.bf16.mxu0 0
        %1109 = vmatpush1.bf16.msra.mxu0 %v1106
        %1110 = vmatprep.subr.bf16.mxu0 0
        %1111 = vmatpush1.bf16.msra.mxu0 0
        %1112 = vmatprep.subr.bf16.mxu0 0
        %1113 = vmatpush1.bf16.msra.mxu0 0
        %1114 = vmatprep.subr.bf16.mxu0 0
        %1115 = vmatpush1.bf16.msra.mxu0 0
        %1116 = vmatprep.subr.bf16.mxu0 0
        %1117 = vmatpush1.bf16.msra.mxu0 0
        %1118 = vmatprep.subr.bf16.mxu0 0
        %1119 = vmatpush1.bf16.msra.mxu0 0
        %1120 = vmatprep.subr.bf16.mxu0 0
        %1121 = vmatpush1.bf16.msra.mxu0 0
        %1122 = vmatprep.subr.bf16.mxu0 0
        %1123 = vmatpush1.bf16.msra.mxu0 0
        %1124 = vmatprep.subr.bf16.mxu0 0
        %1125 = vmatpush1.bf16.msra.mxu0 0
        %1126 = vmatprep.subr.bf16.mxu0 0
        %1127 = vmatpush1.bf16.msra.mxu0 0
        %1128 = vmatprep.subr.bf16.mxu0 0
        %1129 = vmatpush1.bf16.msra.mxu0 0
        %1130 = vmatprep.subr.bf16.mxu0 0
        %1131 = vmatpush1.bf16.msra.mxu0 0
        %1132 = vmatprep.subr.bf16.mxu0 0
        %1133 = vmatpush1.bf16.msra.mxu0 0
        %1134 = vmatprep.subr.bf16.mxu0 0
        %1135 = vmatpush1.bf16.msra.mxu0 0
        %1136 = vmatprep.subr.bf16.mxu0 0
        %1137 = vmatpush1.bf16.msra.mxu0 0
        %1138 = vmatprep.subr.bf16.mxu0 0
        %1139 = vmatpush1.bf16.msra.mxu0 0
        %1140 = vmatprep.mubr.bf16.mxu0 0
        %1141 = vmatmul.mubr.bf16.gmra.mrb[0].mxu0 %v1102
        %v1142 = vpop.f32.mrb[0].mxu0
        %v1143 = vadd.f32 0.0, %v1142
        %v1144 = vpop.f32.mrb[0].mxu0
        %v1145 = vpop.f32.mrb[0].mxu0
        %v1146 = vpop.f32.mrb[0].mxu0
        %1147 = vdwg.mxu0
        %1148 = vrot.lane.b32.xlu0 %v819, 64
        %v1149 = vpop.permute.xlu0 %1148
        %v1151 = vsel %vm825, %v1096, 0
        %v1154 = vsel %vm1104, %v1149, 0
        %1156 = vmatprep.subr.bf16.mxu0 0
        %1157 = vmatpush1.bf16.msra.mxu0 %v1154
        %1158 = vmatprep.subr.bf16.mxu0 0
        %1159 = vmatpush1.bf16.msra.mxu0 0
        %1160 = vmatprep.subr.bf16.mxu0 0
        %1161 = vmatpush1.bf16.msra.mxu0 0
        %1162 = vmatprep.subr.bf16.mxu0 0
        %1163 = vmatpush1.bf16.msra.mxu0 0
        %1164 = vmatprep.subr.bf16.mxu0 0
        %1165 = vmatpush1.bf16.msra.mxu0 0
        %1166 = vmatprep.subr.bf16.mxu0 0
        %1167 = vmatpush1.bf16.msra.mxu0 0
        %1168 = vmatprep.subr.bf16.mxu0 0
        %1169 = vmatpush1.bf16.msra.mxu0 0
        %1170 = vmatprep.subr.bf16.mxu0 0
        %1171 = vmatpush1.bf16.msra.mxu0 0
        %1172 = vmatprep.subr.bf16.mxu0 0
        %1173 = vmatpush1.bf16.msra.mxu0 0
        %1174 = vmatprep.subr.bf16.mxu0 0
        %1175 = vmatpush1.bf16.msra.mxu0 0
        %1176 = vmatprep.subr.bf16.mxu0 0
        %1177 = vmatpush1.bf16.msra.mxu0 0
        %1178 = vmatprep.subr.bf16.mxu0 0
        %1179 = vmatpush1.bf16.msra.mxu0 0
        %1180 = vmatprep.subr.bf16.mxu0 0
        %1181 = vmatpush1.bf16.msra.mxu0 0
        %1182 = vmatprep.subr.bf16.mxu0 0
        %1183 = vmatpush1.bf16.msra.mxu0 0
        %1184 = vmatprep.subr.bf16.mxu0 0
        %1185 = vmatpush1.bf16.msra.mxu0 0
        %1186 = vmatprep.subr.bf16.mxu0 0
        %1187 = vmatpush1.bf16.msra.mxu0 0
        %1188 = vmatprep.mubr.bf16.mxu0 0
        %1189 = vmatmul.mubr.bf16.gmra.mrb[0].mxu0 %v1151
        %v1190 = vpop.f32.mrb[0].mxu0
        %v1191 = vadd.f32 0.0, %v1190
        %v1192 = vpop.f32.mrb[0].mxu0
        %v1193 = vpop.f32.mrb[0].mxu0
        %v1194 = vpop.f32.mrb[0].mxu0
        %1195 = vdwg.mxu0
        %1196 = vrot.lane.b32.xlu0 %v820, 64
        %v1197 = vpop.permute.xlu0 %1196
        %v1199 = vsel %vm825, %v1097, 0
        %v1202 = vsel %vm1104, %v1197, 0
        %1204 = vmatprep.subr.bf16.mxu0 0
        %1205 = vmatpush1.bf16.msra.mxu0 %v1202
        %1206 = vmatprep.subr.bf16.mxu0 0
        %1207 = vmatpush1.bf16.msra.mxu0 0
        %1208 = vmatprep.subr.bf16.mxu0 0
        %1209 = vmatpush1.bf16.msra.mxu0 0
        %1210 = vmatprep.subr.bf16.mxu0 0
        %1211 = vmatpush1.bf16.msra.mxu0 0
        %1212 = vmatprep.subr.bf16.mxu0 0
        %1213 = vmatpush1.bf16.msra.mxu0 0
        %1214 = vmatprep.subr.bf16.mxu0 0
        %1215 = vmatpush1.bf16.msra.mxu0 0
        %1216 = vmatprep.subr.bf16.mxu0 0
        %1217 = vmatpush1.bf16.msra.mxu0 0
        %1218 = vmatprep.subr.bf16.mxu0 0
        %1219 = vmatpush1.bf16.msra.mxu0 0
        %1220 = vmatprep.subr.bf16.mxu0 0
        %1221 = vmatpush1.bf16.msra.mxu0 0
        %1222 = vmatprep.subr.bf16.mxu0 0
        %1223 = vmatpush1.bf16.msra.mxu0 0
        %1224 = vmatprep.subr.bf16.mxu0 0
        %1225 = vmatpush1.bf16.msra.mxu0 0
        %1226 = vmatprep.subr.bf16.mxu0 0
        %1227 = vmatpush1.bf16.msra.mxu0 0
        %1228 = vmatprep.subr.bf16.mxu0 0
        %1229 = vmatpush1.bf16.msra.mxu0 0
        %1230 = vmatprep.subr.bf16.mxu0 0
        %1231 = vmatpush1.bf16.msra.mxu0 0
        %1232 = vmatprep.subr.bf16.mxu0 0
        %1233 = vmatpush1.bf16.msra.mxu0 0
        %1234 = vmatprep.subr.bf16.mxu0 0
        %1235 = vmatpush1.bf16.msra.mxu0 0
        %1236 = vmatprep.mubr.bf16.mxu0 0
        %1237 = vmatmul.mubr.bf16.gmra.mrb[0].mxu0 %v1199
        %v1238 = vpop.f32.mrb[0].mxu0
        %v1239 = vadd.f32 0.0, %v1238
        %v1240 = vpop.f32.mrb[0].mxu0
        %v1241 = vpop.f32.mrb[0].mxu0
        %v1242 = vpop.f32.mrb[0].mxu0
        %1243 = vdwg.mxu0
        %1244 = vrot.lane.b32.xlu0 %v821, 64
        %v1245 = vpop.permute.xlu0 %1244
        %v1247 = vsel %vm825, %v1098, 0
        %v1250 = vsel %vm1104, %v1245, 0
        %1252 = vmatprep.subr.bf16.mxu0 0
        %1253 = vmatpush1.bf16.msra.mxu0 %v1250
        %1254 = vmatprep.subr.bf16.mxu0 0
        %1255 = vmatpush1.bf16.msra.mxu0 0
        %1256 = vmatprep.subr.bf16.mxu0 0
        %1257 = vmatpush1.bf16.msra.mxu0 0
        %1258 = vmatprep.subr.bf16.mxu0 0
        %1259 = vmatpush1.bf16.msra.mxu0 0
        %1260 = vmatprep.subr.bf16.mxu0 0
        %1261 = vmatpush1.bf16.msra.mxu0 0
        %1262 = vmatprep.subr.bf16.mxu0 0
        %1263 = vmatpush1.bf16.msra.mxu0 0
        %1264 = vmatprep.subr.bf16.mxu0 0
        %1265 = vmatpush1.bf16.msra.mxu0 0
        %1266 = vmatprep.subr.bf16.mxu0 0
        %1267 = vmatpush1.bf16.msra.mxu0 0
        %1268 = vmatprep.subr.bf16.mxu0 0
        %1269 = vmatpush1.bf16.msra.mxu0 0
        %1270 = vmatprep.subr.bf16.mxu0 0
        %1271 = vmatpush1.bf16.msra.mxu0 0
        %1272 = vmatprep.subr.bf16.mxu0 0
        %1273 = vmatpush1.bf16.msra.mxu0 0
        %1274 = vmatprep.subr.bf16.mxu0 0
        %1275 = vmatpush1.bf16.msra.mxu0 0
        %1276 = vmatprep.subr.bf16.mxu0 0
        %1277 = vmatpush1.bf16.msra.mxu0 0
        %1278 = vmatprep.subr.bf16.mxu0 0
        %1279 = vmatpush1.bf16.msra.mxu0 0
        %1280 = vmatprep.subr.bf16.mxu0 0
        %1281 = vmatpush1.bf16.msra.mxu0 0
        %1282 = vmatprep.subr.bf16.mxu0 0
        %1283 = vmatpush1.bf16.msra.mxu0 0
        %1284 = vmatprep.mubr.bf16.mxu0 0
        %1285 = vmatmul.mubr.bf16.gmra.mrb[0].mxu0 %v1247
        %v1286 = vpop.f32.mrb[0].mxu0
        %v1287 = vadd.f32 0.0, %v1286
        %v1288 = vpop.f32.mrb[0].mxu0
        %v1289 = vpop.f32.mrb[0].mxu0
        %v1290 = vpop.f32.mrb[0].mxu0
        %1291 = vdwg.mxu0
        %1292 = vst.msk [vmem:[#allocation3] sm:$0xff] %vm825, %v1143
        %1293 = vst.msk [vmem:[#allocation3 + $0x8] sm:$0xff] %vm825, %v1191
        %1294 = vst.msk [vmem:[#allocation3 + $0x10] sm:$0xff] %vm825, %v1239
        %1295 = vst.msk [vmem:[#allocation3 + $0x18] sm:$0xff] %vm825, %v1287
        %1296 = vrot.lane.b32.xlu0 %v818, 120
        %v1297 = vpop.permute.xlu0 %1296
        %1298 = vrot.lane.b32.xlu0 %v818, 88
        %v1299 = vpop.permute.xlu0 %1298
        %v1301 = vsel %vm825, %v1297, 0
        %v1304 = vsel %vm825, %v1299, 0
        %1306 = vmatprep.subr.bf16.mxu0 0
        %1307 = vmatpush1.bf16.xpose.msra.mxu0 %v1304
        %1308 = vmatprep.subr.bf16.mxu0 0
        %1309 = vmatpush1.bf16.xpose.msra.mxu0 0
        %1310 = vmatprep.subr.bf16.mxu0 0
        %1311 = vmatpush1.bf16.xpose.msra.mxu0 0
        %1312 = vmatprep.subr.bf16.mxu0 0
        %1313 = vmatpush1.bf16.xpose.msra.mxu0 0
        %1314 = vmatprep.subr.bf16.mxu0 0
        %1315 = vmatpush1.bf16.xpose.msra.mxu0 0
        %1316 = vmatprep.subr.bf16.mxu0 0
        %1317 = vmatpush1.bf16.xpose.msra.mxu0 0
        %1318 = vmatprep.subr.bf16.mxu0 0
        %1319 = vmatpush1.bf16.xpose.msra.mxu0 0
        %1320 = vmatprep.subr.bf16.mxu0 0
        %1321 = vmatpush1.bf16.xpose.msra.mxu0 0
        %1322 = vmatprep.subr.bf16.mxu0 0
        %1323 = vmatpush1.bf16.xpose.msra.mxu0 0
        %1324 = vmatprep.subr.bf16.mxu0 0
        %1325 = vmatpush1.bf16.xpose.msra.mxu0 0
        %1326 = vmatprep.subr.bf16.mxu0 0
        %1327 = vmatpush1.bf16.xpose.msra.mxu0 0
        %1328 = vmatprep.subr.bf16.mxu0 0
        %1329 = vmatpush1.bf16.xpose.msra.mxu0 0
        %1330 = vmatprep.subr.bf16.mxu0 0
        %1331 = vmatpush1.bf16.xpose.msra.mxu0 0
        %1332 = vmatprep.subr.bf16.mxu0 0
        %1333 = vmatpush1.bf16.xpose.msra.mxu0 0
        %1334 = vmatprep.subr.bf16.mxu0 0
        %1335 = vmatpush1.bf16.xpose.msra.mxu0 0
        %1336 = vmatprep.subr.bf16.mxu0 0
        %1337 = vmatpush1.bf16.xpose.msra.mxu0 0
        %1338 = vmatprep.mubr.bf16.mxu0 0
        %1339 = vmatmul.mubr.bf16.gmra.mrb[0].mxu0 %v1301
        %v1340 = vpop.f32.mrb[0].mxu0
        %v1341 = vadd.f32 0.0, %v1340
        %v1342 = vpop.f32.mrb[0].mxu0
        %v1343 = vpop.f32.mrb[0].mxu0
        %v1344 = vpop.f32.mrb[0].mxu0
        %1345 = vdwg.mxu0
        %1346 = vrot.lane.b32.xlu0 %v819, 120
        %v1347 = vpop.permute.xlu0 %1346
        %1348 = vrot.lane.b32.xlu0 %v819, 88
        %v1349 = vpop.permute.xlu0 %1348
        %v1351 = vsel %vm825, %v1347, 0
        %v1354 = vsel %vm825, %v1349, 0
        %1356 = vmatprep.subr.bf16.mxu0 0
        %1357 = vmatpush1.bf16.xpose.msra.mxu0 %v1354
        %1358 = vmatprep.subr.bf16.mxu0 0
        %1359 = vmatpush1.bf16.xpose.msra.mxu0 0
        %1360 = vmatprep.subr.bf16.mxu0 0
        %1361 = vmatpush1.bf16.xpose.msra.mxu0 0
        %1362 = vmatprep.subr.bf16.mxu0 0
        %1363 = vmatpush1.bf16.xpose.msra.mxu0 0
        %1364 = vmatprep.subr.bf16.mxu0 0
        %1365 = vmatpush1.bf16.xpose.msra.mxu0 0
        %1366 = vmatprep.subr.bf16.mxu0 0
        %1367 = vmatpush1.bf16.xpose.msra.mxu0 0
        %1368 = vmatprep.subr.bf16.mxu0 0
        %1369 = vmatpush1.bf16.xpose.msra.mxu0 0
        %1370 = vmatprep.subr.bf16.mxu0 0
        %1371 = vmatpush1.bf16.xpose.msra.mxu0 0
        %1372 = vmatprep.subr.bf16.mxu0 0
        %1373 = vmatpush1.bf16.xpose.msra.mxu0 0
        %1374 = vmatprep.subr.bf16.mxu0 0
        %1375 = vmatpush1.bf16.xpose.msra.mxu0 0
        %1376 = vmatprep.subr.bf16.mxu0 0
        %1377 = vmatpush1.bf16.xpose.msra.mxu0 0
        %1378 = vmatprep.subr.bf16.mxu0 0
        %1379 = vmatpush1.bf16.xpose.msra.mxu0 0
        %1380 = vmatprep.subr.bf16.mxu0 0
        %1381 = vmatpush1.bf16.xpose.msra.mxu0 0
        %1382 = vmatprep.subr.bf16.mxu0 0
        %1383 = vmatpush1.bf16.xpose.msra.mxu0 0
        %1384 = vmatprep.subr.bf16.mxu0 0
        %1385 = vmatpush1.bf16.xpose.msra.mxu0 0
        %1386 = vmatprep.subr.bf16.mxu0 0
        %1387 = vmatpush1.bf16.xpose.msra.mxu0 0
        %1388 = vmatprep.mubr.bf16.mxu0 0
        %1389 = vmatmul.mubr.bf16.gmra.mrb[0].mxu0 %v1351
        %v1390 = vpop.f32.mrb[0].mxu0
        %v1391 = vadd.f32 0.0, %v1390
        %v1392 = vpop.f32.mrb[0].mxu0
        %v1393 = vpop.f32.mrb[0].mxu0
        %v1394 = vpop.f32.mrb[0].mxu0
        %1395 = vdwg.mxu0
        %1396 = vrot.lane.b32.xlu0 %v820, 120
        %v1397 = vpop.permute.xlu0 %1396
        %1398 = vrot.lane.b32.xlu0 %v820, 88
        %v1399 = vpop.permute.xlu0 %1398
        %v1401 = vsel %vm825, %v1397, 0
        %v1404 = vsel %vm825, %v1399, 0
        %1406 = vmatprep.subr.bf16.mxu0 0
        %1407 = vmatpush1.bf16.xpose.msra.mxu0 %v1404
        %1408 = vmatprep.subr.bf16.mxu0 0
        %1409 = vmatpush1.bf16.xpose.msra.mxu0 0
        %1410 = vmatprep.subr.bf16.mxu0 0
        %1411 = vmatpush1.bf16.xpose.msra.mxu0 0
        %1412 = vmatprep.subr.bf16.mxu0 0
        %1413 = vmatpush1.bf16.xpose.msra.mxu0 0
        %1414 = vmatprep.subr.bf16.mxu0 0
        %1415 = vmatpush1.bf16.xpose.msra.mxu0 0
        %1416 = vmatprep.subr.bf16.mxu0 0
        %1417 = vmatpush1.bf16.xpose.msra.mxu0 0
        %1418 = vmatprep.subr.bf16.mxu0 0
        %1419 = vmatpush1.bf16.xpose.msra.mxu0 0
        %1420 = vmatprep.subr.bf16.mxu0 0
        %1421 = vmatpush1.bf16.xpose.msra.mxu0 0
        %1422 = vmatprep.subr.bf16.mxu0 0
        %1423 = vmatpush1.bf16.xpose.msra.mxu0 0
        %1424 = vmatprep.subr.bf16.mxu0 0
        %1425 = vmatpush1.bf16.xpose.msra.mxu0 0
        %1426 = vmatprep.subr.bf16.mxu0 0
        %1427 = vmatpush1.bf16.xpose.msra.mxu0 0
        %1428 = vmatprep.subr.bf16.mxu0 0
        %1429 = vmatpush1.bf16.xpose.msra.mxu0 0
        %1430 = vmatprep.subr.bf16.mxu0 0
        %1431 = vmatpush1.bf16.xpose.msra.mxu0 0
        %1432 = vmatprep.subr.bf16.mxu0 0
        %1433 = vmatpush1.bf16.xpose.msra.mxu0 0
        %1434 = vmatprep.subr.bf16.mxu0 0
        %1435 = vmatpush1.bf16.xpose.msra.mxu0 0
        %1436 = vmatprep.subr.bf16.mxu0 0
        %1437 = vmatpush1.bf16.xpose.msra.mxu0 0
        %1438 = vmatprep.mubr.bf16.mxu0 0
        %1439 = vmatmul.mubr.bf16.gmra.mrb[0].mxu0 %v1401
        %v1440 = vpop.f32.mrb[0].mxu0
        %v1441 = vadd.f32 0.0, %v1440
        %v1442 = vpop.f32.mrb[0].mxu0
        %v1443 = vpop.f32.mrb[0].mxu0
        %v1444 = vpop.f32.mrb[0].mxu0
        %1445 = vdwg.mxu0
        %1446 = vrot.lane.b32.xlu0 %v821, 120
        %v1447 = vpop.permute.xlu0 %1446
        %1448 = vrot.lane.b32.xlu0 %v821, 88
        %v1449 = vpop.permute.xlu0 %1448
        %v1451 = vsel %vm825, %v1447, 0
        %v1454 = vsel %vm825, %v1449, 0
        %1456 = vmatprep.subr.bf16.mxu0 0
        %1457 = vmatpush1.bf16.xpose.msra.mxu0 %v1454
        %1458 = vmatprep.subr.bf16.mxu0 0
        %1459 = vmatpush1.bf16.xpose.msra.mxu0 0
        %1460 = vmatprep.subr.bf16.mxu0 0
        %1461 = vmatpush1.bf16.xpose.msra.mxu0 0
        %1462 = vmatprep.subr.bf16.mxu0 0
        %1463 = vmatpush1.bf16.xpose.msra.mxu0 0
        %1464 = vmatprep.subr.bf16.mxu0 0
        %1465 = vmatpush1.bf16.xpose.msra.mxu0 0
        %1466 = vmatprep.subr.bf16.mxu0 0
        %1467 = vmatpush1.bf16.xpose.msra.mxu0 0
        %1468 = vmatprep.subr.bf16.mxu0 0
        %1469 = vmatpush1.bf16.xpose.msra.mxu0 0
        %1470 = vmatprep.subr.bf16.mxu0 0
        %1471 = vmatpush1.bf16.xpose.msra.mxu0 0
        %1472 = vmatprep.subr.bf16.mxu0 0
        %1473 = vmatpush1.bf16.xpose.msra.mxu0 0
        %1474 = vmatprep.subr.bf16.mxu0 0
        %1475 = vmatpush1.bf16.xpose.msra.mxu0 0
        %1476 = vmatprep.subr.bf16.mxu0 0
        %1477 = vmatpush1.bf16.xpose.msra.mxu0 0
        %1478 = vmatprep.subr.bf16.mxu0 0
        %1479 = vmatpush1.bf16.xpose.msra.mxu0 0
        %1480 = vmatprep.subr.bf16.mxu0 0
        %1481 = vmatpush1.bf16.xpose.msra.mxu0 0
        %1482 = vmatprep.subr.bf16.mxu0 0
        %1483 = vmatpush1.bf16.xpose.msra.mxu0 0
        %1484 = vmatprep.subr.bf16.mxu0 0
        %1485 = vmatpush1.bf16.xpose.msra.mxu0 0
        %1486 = vmatprep.subr.bf16.mxu0 0
        %1487 = vmatpush1.bf16.xpose.msra.mxu0 0
        %1488 = vmatprep.mubr.bf16.mxu0 0
        %1489 = vmatmul.mubr.bf16.gmra.mrb[0].mxu0 %v1451
        %v1490 = vpop.f32.mrb[0].mxu0
        %v1491 = vadd.f32 0.0, %v1490
        %v1492 = vpop.f32.mrb[0].mxu0
        %v1493 = vpop.f32.mrb[0].mxu0
        %v1494 = vpop.f32.mrb[0].mxu0
        %1495 = vdwg.mxu0
        %v1496 = vmul.f32 %v1341, 0.35355338
        %v1497 = vmul.f32 %v1391, 0.35355338
        %v1498 = vmul.f32 %v1441, 0.35355338
        %v1499 = vmul.f32 %v1491, 0.35355338
        %v1500 = vadd.f32 %v1496, %v1030
        %v1501 = vadd.f32 %v1497, %v1034
        %v1502 = vadd.f32 %v1498, %v1038
        %v1503 = vadd.f32 %v1499, %v1042
        %v1504 = vsel %vm825, %v1500, -inf
        %1505 = vmax.xlane.f32.xlu0 %v1504
        %v1506 = vpop.xlane.xlu0 %1505
        %v1507 = vsel %vm825, %v1501, -inf
        %1508 = vmax.xlane.f32.xlu0 %v1507
        %v1509 = vpop.xlane.xlu0 %1508
        %v1510 = vsel %vm825, %v1502, -inf
        %1511 = vmax.xlane.f32.xlu0 %v1510
        %v1512 = vpop.xlane.xlu0 %1511
        %v1513 = vsel %vm825, %v1503, -inf
        %1514 = vmax.xlane.f32.xlu0 %v1513
        %v1515 = vpop.xlane.xlu0 %1514
        %v1516 = vsub.f32 %v1500, %v1506
        %v1517 = vsub.f32 %v1501, %v1509
        %v1518 = vsub.f32 %v1502, %v1512
        %v1519 = vsub.f32 %v1503, %v1515
        %v1520 = vmul.f32 %v1516, 1.442695
        %v1521 = vpow.pop %v1520
        %v1522 = vmul.f32 %v1517, 1.442695
        %v1523 = vpow.pop %v1522
        %v1524 = vmul.f32 %v1518, 1.442695
        %v1525 = vpow.pop %v1524
        %v1526 = vmul.f32 %v1519, 1.442695
        %v1527 = vpow.pop %v1526
        %v1528 = vsel %vm825, %v1521, 0.0
        %1529 = vadd.xlane.f32.xlu0 %v1528
        %v1530 = vpop.xlane.xlu0 %1529
        %v1531 = vsel %vm825, %v1523, 0.0
        %1532 = vadd.xlane.f32.xlu0 %v1531
        %v1533 = vpop.xlane.xlu0 %1532
        %v1534 = vsel %vm825, %v1525, 0.0
        %1535 = vadd.xlane.f32.xlu0 %v1534
        %v1536 = vpop.xlane.xlu0 %1535
        %v1537 = vsel %vm825, %v1527, 0.0
        %1538 = vadd.xlane.f32.xlu0 %v1537
        %v1539 = vpop.xlane.xlu0 %1538
        %v1540 = vrcp.pop %v1530
        %v1541 = vrcp.pop %v1533
        %v1542 = vrcp.pop %v1536
        %v1543 = vrcp.pop %v1539
        %v1544 = vmul.f32 %v1521, %v1540
        %v1545 = vmul.f32 %v1523, %v1541
        %v1546 = vmul.f32 %v1525, %v1542
        %v1547 = vmul.f32 %v1527, %v1543
        %v1548 = vpack.c.bf16 %v1544, %v1544
        %v1549 = vpack.c.bf16 %v1545, %v1545
        %v1550 = vpack.c.bf16 %v1546, %v1546
        %v1551 = vpack.c.bf16 %v1547, %v1547
        %1552 = vrot.lane.b32.xlu0 %v818, 56
        %v1553 = vpop.permute.xlu0 %1552
        %v1555 = vsel %vm825, %v1548, 0
        %v1558 = vsel %vm1104, %v1553, 0
        %1560 = vmatprep.subr.bf16.mxu0 0
        %1561 = vmatpush1.bf16.msra.mxu0 %v1558
        %1562 = vmatprep.subr.bf16.mxu0 0
        %1563 = vmatpush1.bf16.msra.mxu0 0
        %1564 = vmatprep.subr.bf16.mxu0 0
        %1565 = vmatpush1.bf16.msra.mxu0 0
        %1566 = vmatprep.subr.bf16.mxu0 0
        %1567 = vmatpush1.bf16.msra.mxu0 0
        %1568 = vmatprep.subr.bf16.mxu0 0
        %1569 = vmatpush1.bf16.msra.mxu0 0
        %1570 = vmatprep.subr.bf16.mxu0 0
        %1571 = vmatpush1.bf16.msra.mxu0 0
        %1572 = vmatprep.subr.bf16.mxu0 0
        %1573 = vmatpush1.bf16.msra.mxu0 0
        %1574 = vmatprep.subr.bf16.mxu0 0
        %1575 = vmatpush1.bf16.msra.mxu0 0
        %1576 = vmatprep.subr.bf16.mxu0 0
        %1577 = vmatpush1.bf16.msra.mxu0 0
        %1578 = vmatprep.subr.bf16.mxu0 0
        %1579 = vmatpush1.bf16.msra.mxu0 0
        %1580 = vmatprep.subr.bf16.mxu0 0
        %1581 = vmatpush1.bf16.msra.mxu0 0
        %1582 = vmatprep.subr.bf16.mxu0 0
        %1583 = vmatpush1.bf16.msra.mxu0 0
        %1584 = vmatprep.subr.bf16.mxu0 0
        %1585 = vmatpush1.bf16.msra.mxu0 0
        %1586 = vmatprep.subr.bf16.mxu0 0
        %1587 = vmatpush1.bf16.msra.mxu0 0
        %1588 = vmatprep.subr.bf16.mxu0 0
        %1589 = vmatpush1.bf16.msra.mxu0 0
        %1590 = vmatprep.subr.bf16.mxu0 0
        %1591 = vmatpush1.bf16.msra.mxu0 0
        %1592 = vmatprep.mubr.bf16.mxu0 0
        %1593 = vmatmul.mubr.bf16.gmra.mrb[0].mxu0 %v1555
        %v1594 = vpop.f32.mrb[0].mxu0
        %v1595 = vadd.f32 0.0, %v1594
        %v1596 = vpop.f32.mrb[0].mxu0
        %v1597 = vpop.f32.mrb[0].mxu0
        %v1598 = vpop.f32.mrb[0].mxu0
        %1599 = vdwg.mxu0
        %1600 = vrot.lane.b32.xlu0 %v819, 56
        %v1601 = vpop.permute.xlu0 %1600
        %v1603 = vsel %vm825, %v1549, 0
        %v1606 = vsel %vm1104, %v1601, 0
        %1608 = vmatprep.subr.bf16.mxu0 0
        %1609 = vmatpush1.bf16.msra.mxu0 %v1606
        %1610 = vmatprep.subr.bf16.mxu0 0
        %1611 = vmatpush1.bf16.msra.mxu0 0
        %1612 = vmatprep.subr.bf16.mxu0 0
        %1613 = vmatpush1.bf16.msra.mxu0 0
        %1614 = vmatprep.subr.bf16.mxu0 0
        %1615 = vmatpush1.bf16.msra.mxu0 0
        %1616 = vmatprep.subr.bf16.mxu0 0
        %1617 = vmatpush1.bf16.msra.mxu0 0
        %1618 = vmatprep.subr.bf16.mxu0 0
        %1619 = vmatpush1.bf16.msra.mxu0 0
        %1620 = vmatprep.subr.bf16.mxu0 0
        %1621 = vmatpush1.bf16.msra.mxu0 0
        %1622 = vmatprep.subr.bf16.mxu0 0
        %1623 = vmatpush1.bf16.msra.mxu0 0
        %1624 = vmatprep.subr.bf16.mxu0 0
        %1625 = vmatpush1.bf16.msra.mxu0 0
        %1626 = vmatprep.subr.bf16.mxu0 0
        %1627 = vmatpush1.bf16.msra.mxu0 0
        %1628 = vmatprep.subr.bf16.mxu0 0
        %1629 = vmatpush1.bf16.msra.mxu0 0
        %1630 = vmatprep.subr.bf16.mxu0 0
        %1631 = vmatpush1.bf16.msra.mxu0 0
        %1632 = vmatprep.subr.bf16.mxu0 0
        %1633 = vmatpush1.bf16.msra.mxu0 0
        %1634 = vmatprep.subr.bf16.mxu0 0
        %1635 = vmatpush1.bf16.msra.mxu0 0
        %1636 = vmatprep.subr.bf16.mxu0 0
        %1637 = vmatpush1.bf16.msra.mxu0 0
        %1638 = vmatprep.subr.bf16.mxu0 0
        %1639 = vmatpush1.bf16.msra.mxu0 0
        %1640 = vmatprep.mubr.bf16.mxu0 0
        %1641 = vmatmul.mubr.bf16.gmra.mrb[0].mxu0 %v1603
        %v1642 = vpop.f32.mrb[0].mxu0
        %v1643 = vadd.f32 0.0, %v1642
        %v1644 = vpop.f32.mrb[0].mxu0
        %v1645 = vpop.f32.mrb[0].mxu0
        %v1646 = vpop.f32.mrb[0].mxu0
        %1647 = vdwg.mxu0
        %1648 = vrot.lane.b32.xlu0 %v820, 56
        %v1649 = vpop.permute.xlu0 %1648
        %v1651 = vsel %vm825, %v1550, 0
        %v1654 = vsel %vm1104, %v1649, 0
        %1656 = vmatprep.subr.bf16.mxu0 0
        %1657 = vmatpush1.bf16.msra.mxu0 %v1654
        %1658 = vmatprep.subr.bf16.mxu0 0
        %1659 = vmatpush1.bf16.msra.mxu0 0
        %1660 = vmatprep.subr.bf16.mxu0 0
        %1661 = vmatpush1.bf16.msra.mxu0 0
        %1662 = vmatprep.subr.bf16.mxu0 0
        %1663 = vmatpush1.bf16.msra.mxu0 0
        %1664 = vmatprep.subr.bf16.mxu0 0
        %1665 = vmatpush1.bf16.msra.mxu0 0
        %1666 = vmatprep.subr.bf16.mxu0 0
        %1667 = vmatpush1.bf16.msra.mxu0 0
        %1668 = vmatprep.subr.bf16.mxu0 0
        %1669 = vmatpush1.bf16.msra.mxu0 0
        %1670 = vmatprep.subr.bf16.mxu0 0
        %1671 = vmatpush1.bf16.msra.mxu0 0
        %1672 = vmatprep.subr.bf16.mxu0 0
        %1673 = vmatpush1.bf16.msra.mxu0 0
        %1674 = vmatprep.subr.bf16.mxu0 0
        %1675 = vmatpush1.bf16.msra.mxu0 0
        %1676 = vmatprep.subr.bf16.mxu0 0
        %1677 = vmatpush1.bf16.msra.mxu0 0
        %1678 = vmatprep.subr.bf16.mxu0 0
        %1679 = vmatpush1.bf16.msra.mxu0 0
        %1680 = vmatprep.subr.bf16.mxu0 0
        %1681 = vmatpush1.bf16.msra.mxu0 0
        %1682 = vmatprep.subr.bf16.mxu0 0
        %1683 = vmatpush1.bf16.msra.mxu0 0
        %1684 = vmatprep.subr.bf16.mxu0 0
        %1685 = vmatpush1.bf16.msra.mxu0 0
        %1686 = vmatprep.subr.bf16.mxu0 0
        %1687 = vmatpush1.bf16.msra.mxu0 0
        %1688 = vmatprep.mubr.bf16.mxu0 0
        %1689 = vmatmul.mubr.bf16.gmra.mrb[0].mxu0 %v1651
        %v1690 = vpop.f32.mrb[0].mxu0
        %v1691 = vadd.f32 0.0, %v1690
        %v1692 = vpop.f32.mrb[0].mxu0
        %v1693 = vpop.f32.mrb[0].mxu0
        %v1694 = vpop.f32.mrb[0].mxu0
        %1695 = vdwg.mxu0
        %1696 = vrot.lane.b32.xlu0 %v821, 56
        %v1697 = vpop.permute.xlu0 %1696
        %v1699 = vsel %vm825, %v1551, 0
        %v1702 = vsel %vm1104, %v1697, 0
        %1704 = vmatprep.subr.bf16.mxu0 0
        %1705 = vmatpush1.bf16.msra.mxu0 %v1702
        %1706 = vmatprep.subr.bf16.mxu0 0
        %1707 = vmatpush1.bf16.msra.mxu0 0
        %1708 = vmatprep.subr.bf16.mxu0 0
        %1709 = vmatpush1.bf16.msra.mxu0 0
        %1710 = vmatprep.subr.bf16.mxu0 0
        %1711 = vmatpush1.bf16.msra.mxu0 0
        %1712 = vmatprep.subr.bf16.mxu0 0
        %1713 = vmatpush1.bf16.msra.mxu0 0
        %1714 = vmatprep.subr.bf16.mxu0 0
        %1715 = vmatpush1.bf16.msra.mxu0 0
        %1716 = vmatprep.subr.bf16.mxu0 0
        %1717 = vmatpush1.bf16.msra.mxu0 0
        %1718 = vmatprep.subr.bf16.mxu0 0
        %1719 = vmatpush1.bf16.msra.mxu0 0
        %1720 = vmatprep.subr.bf16.mxu0 0
        %1721 = vmatpush1.bf16.msra.mxu0 0
        %1722 = vmatprep.subr.bf16.mxu0 0
        %1723 = vmatpush1.bf16.msra.mxu0 0
        %1724 = vmatprep.subr.bf16.mxu0 0
        %1725 = vmatpush1.bf16.msra.mxu0 0
        %1726 = vmatprep.subr.bf16.mxu0 0
        %1727 = vmatpush1.bf16.msra.mxu0 0
        %1728 = vmatprep.subr.bf16.mxu0 0
        %1729 = vmatpush1.bf16.msra.mxu0 0
        %1730 = vmatprep.subr.bf16.mxu0 0
        %1731 = vmatpush1.bf16.msra.mxu0 0
        %1732 = vmatprep.subr.bf16.mxu0 0
        %1733 = vmatpush1.bf16.msra.mxu0 0
        %1734 = vmatprep.subr.bf16.mxu0 0
        %1735 = vmatpush1.bf16.msra.mxu0 0
        %1736 = vmatprep.mubr.bf16.mxu0 0
        %1737 = vmatmul.mubr.bf16.gmra.mrb[0].mxu0 %v1699
        %v1738 = vpop.f32.mrb[0].mxu0
        %v1739 = vadd.f32 0.0, %v1738
        %v1740 = vpop.f32.mrb[0].mxu0
        %v1741 = vpop.f32.mrb[0].mxu0
        %v1742 = vpop.f32.mrb[0].mxu0
        %1743 = vdwg.mxu0
        %1748 = vrot.lane.b32.xlu0 %v1595, 8
        %v1749 = vpop.permute.xlu0 %1748
        %1750 = vrot.lane.b32.xlu0 %v1643, 8
        %v1751 = vpop.permute.xlu0 %1750
        %1752 = vrot.lane.b32.xlu0 %v1691, 8
        %v1753 = vpop.permute.xlu0 %1752
        %1754 = vrot.lane.b32.xlu0 %v1739, 8
        %v1755 = vpop.permute.xlu0 %1754
        %vm1760 = vcmask 130112
        %1761 = vst.msk [vmem:[#allocation3] sm:$0xff] %vm1760, %v1749
        %1762 = vst.msk [vmem:[#allocation3 + $0x8] sm:$0xff] %vm1760, %v1751
        %1763 = vst.msk [vmem:[#allocation3 + $0x10] sm:$0xff] %vm1760, %v1753
        %1764 = vst.msk [vmem:[#allocation3 + $0x18] sm:$0xff] %vm1760, %v1755
        %1765 = vrot.lane.b32.xlu0 %v818, 112
        %v1766 = vpop.permute.xlu0 %1765
        %1767 = vrot.lane.b32.xlu0 %v818, 80
        %v1768 = vpop.permute.xlu0 %1767
        %v1770 = vsel %vm825, %v1766, 0
        %v1773 = vsel %vm825, %v1768, 0
        %1775 = vmatprep.subr.bf16.mxu0 0
        %1776 = vmatpush1.bf16.xpose.msra.mxu0 %v1773
        %1777 = vmatprep.subr.bf16.mxu0 0
        %1778 = vmatpush1.bf16.xpose.msra.mxu0 0
        %1779 = vmatprep.subr.bf16.mxu0 0
        %1780 = vmatpush1.bf16.xpose.msra.mxu0 0
        %1781 = vmatprep.subr.bf16.mxu0 0
        %1782 = vmatpush1.bf16.xpose.msra.mxu0 0
        %1783 = vmatprep.subr.bf16.mxu0 0
        %1784 = vmatpush1.bf16.xpose.msra.mxu0 0
        %1785 = vmatprep.subr.bf16.mxu0 0
        %1786 = vmatpush1.bf16.xpose.msra.mxu0 0
        %1787 = vmatprep.subr.bf16.mxu0 0
        %1788 = vmatpush1.bf16.xpose.msra.mxu0 0
        %1789 = vmatprep.subr.bf16.mxu0 0
        %1790 = vmatpush1.bf16.xpose.msra.mxu0 0
        %1791 = vmatprep.subr.bf16.mxu0 0
        %1792 = vmatpush1.bf16.xpose.msra.mxu0 0
        %1793 = vmatprep.subr.bf16.mxu0 0
        %1794 = vmatpush1.bf16.xpose.msra.mxu0 0
        %1795 = vmatprep.subr.bf16.mxu0 0
        %1796 = vmatpush1.bf16.xpose.msra.mxu0 0
        %1797 = vmatprep.subr.bf16.mxu0 0
        %1798 = vmatpush1.bf16.xpose.msra.mxu0 0
        %1799 = vmatprep.subr.bf16.mxu0 0
        %1800 = vmatpush1.bf16.xpose.msra.mxu0 0
        %1801 = vmatprep.subr.bf16.mxu0 0
        %1802 = vmatpush1.bf16.xpose.msra.mxu0 0
        %1803 = vmatprep.subr.bf16.mxu0 0
        %1804 = vmatpush1.bf16.xpose.msra.mxu0 0
        %1805 = vmatprep.subr.bf16.mxu0 0
        %1806 = vmatpush1.bf16.xpose.msra.mxu0 0
        %1807 = vmatprep.mubr.bf16.mxu0 0
        %1808 = vmatmul.mubr.bf16.gmra.mrb[0].mxu0 %v1770
        %v1809 = vpop.f32.mrb[0].mxu0
        %v1810 = vadd.f32 0.0, %v1809
        %v1811 = vpop.f32.mrb[0].mxu0
        %v1812 = vpop.f32.mrb[0].mxu0
        %v1813 = vpop.f32.mrb[0].mxu0
        %1814 = vdwg.mxu0
        %1815 = vrot.lane.b32.xlu0 %v819, 112
        %v1816 = vpop.permute.xlu0 %1815
        %1817 = vrot.lane.b32.xlu0 %v819, 80
        %v1818 = vpop.permute.xlu0 %1817
        %v1820 = vsel %vm825, %v1816, 0
        %v1823 = vsel %vm825, %v1818, 0
        %1825 = vmatprep.subr.bf16.mxu0 0
        %1826 = vmatpush1.bf16.xpose.msra.mxu0 %v1823
        %1827 = vmatprep.subr.bf16.mxu0 0
        %1828 = vmatpush1.bf16.xpose.msra.mxu0 0
        %1829 = vmatprep.subr.bf16.mxu0 0
        %1830 = vmatpush1.bf16.xpose.msra.mxu0 0
        %1831 = vmatprep.subr.bf16.mxu0 0
        %1832 = vmatpush1.bf16.xpose.msra.mxu0 0
        %1833 = vmatprep.subr.bf16.mxu0 0
        %1834 = vmatpush1.bf16.xpose.msra.mxu0 0
        %1835 = vmatprep.subr.bf16.mxu0 0
        %1836 = vmatpush1.bf16.xpose.msra.mxu0 0
        %1837 = vmatprep.subr.bf16.mxu0 0
        %1838 = vmatpush1.bf16.xpose.msra.mxu0 0
        %1839 = vmatprep.subr.bf16.mxu0 0
        %1840 = vmatpush1.bf16.xpose.msra.mxu0 0
        %1841 = vmatprep.subr.bf16.mxu0 0
        %1842 = vmatpush1.bf16.xpose.msra.mxu0 0
        %1843 = vmatprep.subr.bf16.mxu0 0
        %1844 = vmatpush1.bf16.xpose.msra.mxu0 0
        %1845 = vmatprep.subr.bf16.mxu0 0
        %1846 = vmatpush1.bf16.xpose.msra.mxu0 0
        %1847 = vmatprep.subr.bf16.mxu0 0
        %1848 = vmatpush1.bf16.xpose.msra.mxu0 0
        %1849 = vmatprep.subr.bf16.mxu0 0
        %1850 = vmatpush1.bf16.xpose.msra.mxu0 0
        %1851 = vmatprep.subr.bf16.mxu0 0
        %1852 = vmatpush1.bf16.xpose.msra.mxu0 0
        %1853 = vmatprep.subr.bf16.mxu0 0
        %1854 = vmatpush1.bf16.xpose.msra.mxu0 0
        %1855 = vmatprep.subr.bf16.mxu0 0
        %1856 = vmatpush1.bf16.xpose.msra.mxu0 0
        %1857 = vmatprep.mubr.bf16.mxu0 0
        %1858 = vmatmul.mubr.bf16.gmra.mrb[0].mxu0 %v1820
        %v1859 = vpop.f32.mrb[0].mxu0
        %v1860 = vadd.f32 0.0, %v1859
        %v1861 = vpop.f32.mrb[0].mxu0
        %v1862 = vpop.f32.mrb[0].mxu0
        %v1863 = vpop.f32.mrb[0].mxu0
        %1864 = vdwg.mxu0
        %1865 = vrot.lane.b32.xlu0 %v820, 112
        %v1866 = vpop.permute.xlu0 %1865
        %1867 = vrot.lane.b32.xlu0 %v820, 80
        %v1868 = vpop.permute.xlu0 %1867
        %v1870 = vsel %vm825, %v1866, 0
        %v1873 = vsel %vm825, %v1868, 0
        %1875 = vmatprep.subr.bf16.mxu0 0
        %1876 = vmatpush1.bf16.xpose.msra.mxu0 %v1873
        %1877 = vmatprep.subr.bf16.mxu0 0
        %1878 = vmatpush1.bf16.xpose.msra.mxu0 0
        %1879 = vmatprep.subr.bf16.mxu0 0
        %1880 = vmatpush1.bf16.xpose.msra.mxu0 0
        %1881 = vmatprep.subr.bf16.mxu0 0
        %1882 = vmatpush1.bf16.xpose.msra.mxu0 0
        %1883 = vmatprep.subr.bf16.mxu0 0
        %1884 = vmatpush1.bf16.xpose.msra.mxu0 0
        %1885 = vmatprep.subr.bf16.mxu0 0
        %1886 = vmatpush1.bf16.xpose.msra.mxu0 0
        %1887 = vmatprep.subr.bf16.mxu0 0
        %1888 = vmatpush1.bf16.xpose.msra.mxu0 0
        %1889 = vmatprep.subr.bf16.mxu0 0
        %1890 = vmatpush1.bf16.xpose.msra.mxu0 0
        %1891 = vmatprep.subr.bf16.mxu0 0
        %1892 = vmatpush1.bf16.xpose.msra.mxu0 0
        %1893 = vmatprep.subr.bf16.mxu0 0
        %1894 = vmatpush1.bf16.xpose.msra.mxu0 0
        %1895 = vmatprep.subr.bf16.mxu0 0
        %1896 = vmatpush1.bf16.xpose.msra.mxu0 0
        %1897 = vmatprep.subr.bf16.mxu0 0
        %1898 = vmatpush1.bf16.xpose.msra.mxu0 0
        %1899 = vmatprep.subr.bf16.mxu0 0
        %1900 = vmatpush1.bf16.xpose.msra.mxu0 0
        %1901 = vmatprep.subr.bf16.mxu0 0
        %1902 = vmatpush1.bf16.xpose.msra.mxu0 0
        %1903 = vmatprep.subr.bf16.mxu0 0
        %1904 = vmatpush1.bf16.xpose.msra.mxu0 0
        %1905 = vmatprep.subr.bf16.mxu0 0
        %1906 = vmatpush1.bf16.xpose.msra.mxu0 0
        %1907 = vmatprep.mubr.bf16.mxu0 0
        %1908 = vmatmul.mubr.bf16.gmra.mrb[0].mxu0 %v1870
        %v1909 = vpop.f32.mrb[0].mxu0
        %v1910 = vadd.f32 0.0, %v1909
        %v1911 = vpop.f32.mrb[0].mxu0
        %v1912 = vpop.f32.mrb[0].mxu0
        %v1913 = vpop.f32.mrb[0].mxu0
        %1914 = vdwg.mxu0
        %1915 = vrot.lane.b32.xlu0 %v821, 112
        %v1916 = vpop.permute.xlu0 %1915
        %1917 = vrot.lane.b32.xlu0 %v821, 80
        %v1918 = vpop.permute.xlu0 %1917
        %v1920 = vsel %vm825, %v1916, 0
        %v1923 = vsel %vm825, %v1918, 0
        %1925 = vmatprep.subr.bf16.mxu0 0
        %1926 = vmatpush1.bf16.xpose.msra.mxu0 %v1923
        %1927 = vmatprep.subr.bf16.mxu0 0
        %1928 = vmatpush1.bf16.xpose.msra.mxu0 0
        %1929 = vmatprep.subr.bf16.mxu0 0
        %1930 = vmatpush1.bf16.xpose.msra.mxu0 0
        %1931 = vmatprep.subr.bf16.mxu0 0
        %1932 = vmatpush1.bf16.xpose.msra.mxu0 0
        %1933 = vmatprep.subr.bf16.mxu0 0
        %1934 = vmatpush1.bf16.xpose.msra.mxu0 0
        %1935 = vmatprep.subr.bf16.mxu0 0
        %1936 = vmatpush1.bf16.xpose.msra.mxu0 0
        %1937 = vmatprep.subr.bf16.mxu0 0
        %1938 = vmatpush1.bf16.xpose.msra.mxu0 0
        %1939 = vmatprep.subr.bf16.mxu0 0
        %1940 = vmatpush1.bf16.xpose.msra.mxu0 0
        %1941 = vmatprep.subr.bf16.mxu0 0
        %1942 = vmatpush1.bf16.xpose.msra.mxu0 0
        %1943 = vmatprep.subr.bf16.mxu0 0
        %1944 = vmatpush1.bf16.xpose.msra.mxu0 0
        %1945 = vmatprep.subr.bf16.mxu0 0
        %1946 = vmatpush1.bf16.xpose.msra.mxu0 0
        %1947 = vmatprep.subr.bf16.mxu0 0
        %1948 = vmatpush1.bf16.xpose.msra.mxu0 0
        %1949 = vmatprep.subr.bf16.mxu0 0
        %1950 = vmatpush1.bf16.xpose.msra.mxu0 0
        %1951 = vmatprep.subr.bf16.mxu0 0
        %1952 = vmatpush1.bf16.xpose.msra.mxu0 0
        %1953 = vmatprep.subr.bf16.mxu0 0
        %1954 = vmatpush1.bf16.xpose.msra.mxu0 0
        %1955 = vmatprep.subr.bf16.mxu0 0
        %1956 = vmatpush1.bf16.xpose.msra.mxu0 0
        %1957 = vmatprep.mubr.bf16.mxu0 0
        %1958 = vmatmul.mubr.bf16.gmra.mrb[0].mxu0 %v1920
        %v1959 = vpop.f32.mrb[0].mxu0
        %v1960 = vadd.f32 0.0, %v1959
        %v1961 = vpop.f32.mrb[0].mxu0
        %v1962 = vpop.f32.mrb[0].mxu0
        %v1963 = vpop.f32.mrb[0].mxu0
        %1964 = vdwg.mxu0
        %v1965 = vmul.f32 %v1810, 0.35355338
        %v1966 = vmul.f32 %v1860, 0.35355338
        %v1967 = vmul.f32 %v1910, 0.35355338
        %v1968 = vmul.f32 %v1960, 0.35355338
        %v1969 = vadd.f32 %v1965, %v1030
        %v1970 = vadd.f32 %v1966, %v1034
        %v1971 = vadd.f32 %v1967, %v1038
        %v1972 = vadd.f32 %v1968, %v1042
        %v1973 = vsel %vm825, %v1969, -inf
        %1974 = vmax.xlane.f32.xlu0 %v1973
        %v1975 = vpop.xlane.xlu0 %1974
        %v1976 = vsel %vm825, %v1970, -inf
        %1977 = vmax.xlane.f32.xlu0 %v1976
        %v1978 = vpop.xlane.xlu0 %1977
        %v1979 = vsel %vm825, %v1971, -inf
        %1980 = vmax.xlane.f32.xlu0 %v1979
        %v1981 = vpop.xlane.xlu0 %1980
        %v1982 = vsel %vm825, %v1972, -inf
        %1983 = vmax.xlane.f32.xlu0 %v1982
        %v1984 = vpop.xlane.xlu0 %1983
        %v1985 = vsub.f32 %v1969, %v1975
        %v1986 = vsub.f32 %v1970, %v1978
        %v1987 = vsub.f32 %v1971, %v1981
        %v1988 = vsub.f32 %v1972, %v1984
        %v1989 = vmul.f32 %v1985, 1.442695
        %v1990 = vpow.pop %v1989
        %v1991 = vmul.f32 %v1986, 1.442695
        %v1992 = vpow.pop %v1991
        %v1993 = vmul.f32 %v1987, 1.442695
        %v1994 = vpow.pop %v1993
        %v1995 = vmul.f32 %v1988, 1.442695
        %v1996 = vpow.pop %v1995
        %v1997 = vsel %vm825, %v1990, 0.0
        %1998 = vadd.xlane.f32.xlu0 %v1997
        %v1999 = vpop.xlane.xlu0 %1998
        %v2000 = vsel %vm825, %v1992, 0.0
        %2001 = vadd.xlane.f32.xlu0 %v2000
        %v2002 = vpop.xlane.xlu0 %2001
        %v2003 = vsel %vm825, %v1994, 0.0
        %2004 = vadd.xlane.f32.xlu0 %v2003
        %v2005 = vpop.xlane.xlu0 %2004
        %v2006 = vsel %vm825, %v1996, 0.0
        %2007 = vadd.xlane.f32.xlu0 %v2006
        %v2008 = vpop.xlane.xlu0 %2007
        %v2009 = vrcp.pop %v1999
        %v2010 = vrcp.pop %v2002
        %v2011 = vrcp.pop %v2005
        %v2012 = vrcp.pop %v2008
        %v2013 = vmul.f32 %v1990, %v2009
        %v2014 = vmul.f32 %v1992, %v2010
        %v2015 = vmul.f32 %v1994, %v2011
        %v2016 = vmul.f32 %v1996, %v2012
        %v2017 = vpack.c.bf16 %v2013, %v2013
        %v2018 = vpack.c.bf16 %v2014, %v2014
        %v2019 = vpack.c.bf16 %v2015, %v2015
        %v2020 = vpack.c.bf16 %v2016, %v2016
        %2021 = vrot.lane.b32.xlu0 %v818, 48
        %v2022 = vpop.permute.xlu0 %2021
        %v2024 = vsel %vm825, %v2017, 0
        %v2027 = vsel %vm1104, %v2022, 0
        %2029 = vmatprep.subr.bf16.mxu0 0
        %2030 = vmatpush1.bf16.msra.mxu0 %v2027
        %2031 = vmatprep.subr.bf16.mxu0 0
        %2032 = vmatpush1.bf16.msra.mxu0 0
        %2033 = vmatprep.subr.bf16.mxu0 0
        %2034 = vmatpush1.bf16.msra.mxu0 0
        %2035 = vmatprep.subr.bf16.mxu0 0
        %2036 = vmatpush1.bf16.msra.mxu0 0
        %2037 = vmatprep.subr.bf16.mxu0 0
        %2038 = vmatpush1.bf16.msra.mxu0 0
        %2039 = vmatprep.subr.bf16.mxu0 0
        %2040 = vmatpush1.bf16.msra.mxu0 0
        %2041 = vmatprep.subr.bf16.mxu0 0
        %2042 = vmatpush1.bf16.msra.mxu0 0
        %2043 = vmatprep.subr.bf16.mxu0 0
        %2044 = vmatpush1.bf16.msra.mxu0 0
        %2045 = vmatprep.subr.bf16.mxu0 0
        %2046 = vmatpush1.bf16.msra.mxu0 0
        %2047 = vmatprep.subr.bf16.mxu0 0
        %2048 = vmatpush1.bf16.msra.mxu0 0
        %2049 = vmatprep.subr.bf16.mxu0 0
        %2050 = vmatpush1.bf16.msra.mxu0 0
        %2051 = vmatprep.subr.bf16.mxu0 0
        %2052 = vmatpush1.bf16.msra.mxu0 0
        %2053 = vmatprep.subr.bf16.mxu0 0
        %2054 = vmatpush1.bf16.msra.mxu0 0
        %2055 = vmatprep.subr.bf16.mxu0 0
        %2056 = vmatpush1.bf16.msra.mxu0 0
        %2057 = vmatprep.subr.bf16.mxu0 0
        %2058 = vmatpush1.bf16.msra.mxu0 0
        %2059 = vmatprep.subr.bf16.mxu0 0
        %2060 = vmatpush1.bf16.msra.mxu0 0
        %2061 = vmatprep.mubr.bf16.mxu0 0
        %2062 = vmatmul.mubr.bf16.gmra.mrb[0].mxu0 %v2024
        %v2063 = vpop.f32.mrb[0].mxu0
        %v2064 = vadd.f32 0.0, %v2063
        %v2065 = vpop.f32.mrb[0].mxu0
        %v2066 = vpop.f32.mrb[0].mxu0
        %v2067 = vpop.f32.mrb[0].mxu0
        %2068 = vdwg.mxu0
        %2069 = vrot.lane.b32.xlu0 %v819, 48
        %v2070 = vpop.permute.xlu0 %2069
        %v2072 = vsel %vm825, %v2018, 0
        %v2075 = vsel %vm1104, %v2070, 0
        %2077 = vmatprep.subr.bf16.mxu0 0
        %2078 = vmatpush1.bf16.msra.mxu0 %v2075
        %2079 = vmatprep.subr.bf16.mxu0 0
        %2080 = vmatpush1.bf16.msra.mxu0 0
        %2081 = vmatprep.subr.bf16.mxu0 0
        %2082 = vmatpush1.bf16.msra.mxu0 0
        %2083 = vmatprep.subr.bf16.mxu0 0
        %2084 = vmatpush1.bf16.msra.mxu0 0
        %2085 = vmatprep.subr.bf16.mxu0 0
        %2086 = vmatpush1.bf16.msra.mxu0 0
        %2087 = vmatprep.subr.bf16.mxu0 0
        %2088 = vmatpush1.bf16.msra.mxu0 0
        %2089 = vmatprep.subr.bf16.mxu0 0
        %2090 = vmatpush1.bf16.msra.mxu0 0
        %2091 = vmatprep.subr.bf16.mxu0 0
        %2092 = vmatpush1.bf16.msra.mxu0 0
        %2093 = vmatprep.subr.bf16.mxu0 0
        %2094 = vmatpush1.bf16.msra.mxu0 0
        %2095 = vmatprep.subr.bf16.mxu0 0
        %2096 = vmatpush1.bf16.msra.mxu0 0
        %2097 = vmatprep.subr.bf16.mxu0 0
        %2098 = vmatpush1.bf16.msra.mxu0 0
        %2099 = vmatprep.subr.bf16.mxu0 0
        %2100 = vmatpush1.bf16.msra.mxu0 0
        %2101 = vmatprep.subr.bf16.mxu0 0
        %2102 = vmatpush1.bf16.msra.mxu0 0
        %2103 = vmatprep.subr.bf16.mxu0 0
        %2104 = vmatpush1.bf16.msra.mxu0 0
        %2105 = vmatprep.subr.bf16.mxu0 0
        %2106 = vmatpush1.bf16.msra.mxu0 0
        %2107 = vmatprep.subr.bf16.mxu0 0
        %2108 = vmatpush1.bf16.msra.mxu0 0
        %2109 = vmatprep.mubr.bf16.mxu0 0
        %2110 = vmatmul.mubr.bf16.gmra.mrb[0].mxu0 %v2072
        %v2111 = vpop.f32.mrb[0].mxu0
        %v2112 = vadd.f32 0.0, %v2111
        %v2113 = vpop.f32.mrb[0].mxu0
        %v2114 = vpop.f32.mrb[0].mxu0
        %v2115 = vpop.f32.mrb[0].mxu0
        %2116 = vdwg.mxu0
        %2117 = vrot.lane.b32.xlu0 %v820, 48
        %v2118 = vpop.permute.xlu0 %2117
        %v2120 = vsel %vm825, %v2019, 0
        %v2123 = vsel %vm1104, %v2118, 0
        %2125 = vmatprep.subr.bf16.mxu0 0
        %2126 = vmatpush1.bf16.msra.mxu0 %v2123
        %2127 = vmatprep.subr.bf16.mxu0 0
        %2128 = vmatpush1.bf16.msra.mxu0 0
        %2129 = vmatprep.subr.bf16.mxu0 0
        %2130 = vmatpush1.bf16.msra.mxu0 0
        %2131 = vmatprep.subr.bf16.mxu0 0
        %2132 = vmatpush1.bf16.msra.mxu0 0
        %2133 = vmatprep.subr.bf16.mxu0 0
        %2134 = vmatpush1.bf16.msra.mxu0 0
        %2135 = vmatprep.subr.bf16.mxu0 0
        %2136 = vmatpush1.bf16.msra.mxu0 0
        %2137 = vmatprep.subr.bf16.mxu0 0
        %2138 = vmatpush1.bf16.msra.mxu0 0
        %2139 = vmatprep.subr.bf16.mxu0 0
        %2140 = vmatpush1.bf16.msra.mxu0 0
        %2141 = vmatprep.subr.bf16.mxu0 0
        %2142 = vmatpush1.bf16.msra.mxu0 0
        %2143 = vmatprep.subr.bf16.mxu0 0
        %2144 = vmatpush1.bf16.msra.mxu0 0
        %2145 = vmatprep.subr.bf16.mxu0 0
        %2146 = vmatpush1.bf16.msra.mxu0 0
        %2147 = vmatprep.subr.bf16.mxu0 0
        %2148 = vmatpush1.bf16.msra.mxu0 0
        %2149 = vmatprep.subr.bf16.mxu0 0
        %2150 = vmatpush1.bf16.msra.mxu0 0
        %2151 = vmatprep.subr.bf16.mxu0 0
        %2152 = vmatpush1.bf16.msra.mxu0 0
        %2153 = vmatprep.subr.bf16.mxu0 0
        %2154 = vmatpush1.bf16.msra.mxu0 0
        %2155 = vmatprep.subr.bf16.mxu0 0
        %2156 = vmatpush1.bf16.msra.mxu0 0
        %2157 = vmatprep.mubr.bf16.mxu0 0
        %2158 = vmatmul.mubr.bf16.gmra.mrb[0].mxu0 %v2120
        %v2159 = vpop.f32.mrb[0].mxu0
        %v2160 = vadd.f32 0.0, %v2159
        %v2161 = vpop.f32.mrb[0].mxu0
        %v2162 = vpop.f32.mrb[0].mxu0
        %v2163 = vpop.f32.mrb[0].mxu0
        %2164 = vdwg.mxu0
        %2165 = vrot.lane.b32.xlu0 %v821, 48
        %v2166 = vpop.permute.xlu0 %2165
        %v2168 = vsel %vm825, %v2020, 0
        %v2171 = vsel %vm1104, %v2166, 0
        %2173 = vmatprep.subr.bf16.mxu0 0
        %2174 = vmatpush1.bf16.msra.mxu0 %v2171
        %2175 = vmatprep.subr.bf16.mxu0 0
        %2176 = vmatpush1.bf16.msra.mxu0 0
        %2177 = vmatprep.subr.bf16.mxu0 0
        %2178 = vmatpush1.bf16.msra.mxu0 0
        %2179 = vmatprep.subr.bf16.mxu0 0
        %2180 = vmatpush1.bf16.msra.mxu0 0
        %2181 = vmatprep.subr.bf16.mxu0 0
        %2182 = vmatpush1.bf16.msra.mxu0 0
        %2183 = vmatprep.subr.bf16.mxu0 0
        %2184 = vmatpush1.bf16.msra.mxu0 0
        %2185 = vmatprep.subr.bf16.mxu0 0
        %2186 = vmatpush1.bf16.msra.mxu0 0
        %2187 = vmatprep.subr.bf16.mxu0 0
        %2188 = vmatpush1.bf16.msra.mxu0 0
        %2189 = vmatprep.subr.bf16.mxu0 0
        %2190 = vmatpush1.bf16.msra.mxu0 0
        %2191 = vmatprep.subr.bf16.mxu0 0
        %2192 = vmatpush1.bf16.msra.mxu0 0
        %2193 = vmatprep.subr.bf16.mxu0 0
        %2194 = vmatpush1.bf16.msra.mxu0 0
        %2195 = vmatprep.subr.bf16.mxu0 0
        %2196 = vmatpush1.bf16.msra.mxu0 0
        %2197 = vmatprep.subr.bf16.mxu0 0
        %2198 = vmatpush1.bf16.msra.mxu0 0
        %2199 = vmatprep.subr.bf16.mxu0 0
        %2200 = vmatpush1.bf16.msra.mxu0 0
        %2201 = vmatprep.subr.bf16.mxu0 0
        %2202 = vmatpush1.bf16.msra.mxu0 0
        %2203 = vmatprep.subr.bf16.mxu0 0
        %2204 = vmatpush1.bf16.msra.mxu0 0
        %2205 = vmatprep.mubr.bf16.mxu0 0
        %2206 = vmatmul.mubr.bf16.gmra.mrb[0].mxu0 %v2168
        %v2207 = vpop.f32.mrb[0].mxu0
        %v2208 = vadd.f32 0.0, %v2207
        %v2209 = vpop.f32.mrb[0].mxu0
        %v2210 = vpop.f32.mrb[0].mxu0
        %v2211 = vpop.f32.mrb[0].mxu0
        %2212 = vdwg.mxu0
        %2217 = vrot.lane.b32.xlu0 %v2064, 16
        %v2218 = vpop.permute.xlu0 %2217
        %2219 = vrot.lane.b32.xlu0 %v2112, 16
        %v2220 = vpop.permute.xlu0 %2219
        %2221 = vrot.lane.b32.xlu0 %v2160, 16
        %v2222 = vpop.permute.xlu0 %2221
        %2223 = vrot.lane.b32.xlu0 %v2208, 16
        %v2224 = vpop.permute.xlu0 %2223
        %vm2229 = vcmask 195712
        %2230 = vst.msk [vmem:[#allocation3] sm:$0xff] %vm2229, %v2218
        %2231 = vst.msk [vmem:[#allocation3 + $0x8] sm:$0xff] %vm2229, %v2220
        %2232 = vst.msk [vmem:[#allocation3 + $0x10] sm:$0xff] %vm2229, %v2222
        %2233 = vst.msk [vmem:[#allocation3 + $0x18] sm:$0xff] %vm2229, %v2224
        %2234 = vrot.lane.b32.xlu0 %v818, 104
        %v2235 = vpop.permute.xlu0 %2234
        %2236 = vrot.lane.b32.xlu0 %v818, 72
        %v2237 = vpop.permute.xlu0 %2236
        %v2239 = vsel %vm825, %v2235, 0
        %v2242 = vsel %vm825, %v2237, 0
        %2244 = vmatprep.subr.bf16.mxu0 0
        %2245 = vmatpush1.bf16.xpose.msra.mxu0 %v2242
        %2246 = vmatprep.subr.bf16.mxu0 0
        %2247 = vmatpush1.bf16.xpose.msra.mxu0 0
        %2248 = vmatprep.subr.bf16.mxu0 0
        %2249 = vmatpush1.bf16.xpose.msra.mxu0 0
        %2250 = vmatprep.subr.bf16.mxu0 0
        %2251 = vmatpush1.bf16.xpose.msra.mxu0 0
        %2252 = vmatprep.subr.bf16.mxu0 0
        %2253 = vmatpush1.bf16.xpose.msra.mxu0 0
        %2254 = vmatprep.subr.bf16.mxu0 0
        %2255 = vmatpush1.bf16.xpose.msra.mxu0 0
        %2256 = vmatprep.subr.bf16.mxu0 0
        %2257 = vmatpush1.bf16.xpose.msra.mxu0 0
        %2258 = vmatprep.subr.bf16.mxu0 0
        %2259 = vmatpush1.bf16.xpose.msra.mxu0 0
        %2260 = vmatprep.subr.bf16.mxu0 0
        %2261 = vmatpush1.bf16.xpose.msra.mxu0 0
        %2262 = vmatprep.subr.bf16.mxu0 0
        %2263 = vmatpush1.bf16.xpose.msra.mxu0 0
        %2264 = vmatprep.subr.bf16.mxu0 0
        %2265 = vmatpush1.bf16.xpose.msra.mxu0 0
        %2266 = vmatprep.subr.bf16.mxu0 0
        %2267 = vmatpush1.bf16.xpose.msra.mxu0 0
        %2268 = vmatprep.subr.bf16.mxu0 0
        %2269 = vmatpush1.bf16.xpose.msra.mxu0 0
        %2270 = vmatprep.subr.bf16.mxu0 0
        %2271 = vmatpush1.bf16.xpose.msra.mxu0 0
        %2272 = vmatprep.subr.bf16.mxu0 0
        %2273 = vmatpush1.bf16.xpose.msra.mxu0 0
        %2274 = vmatprep.subr.bf16.mxu0 0
        %2275 = vmatpush1.bf16.xpose.msra.mxu0 0
        %2276 = vmatprep.mubr.bf16.mxu0 0
        %2277 = vmatmul.mubr.bf16.gmra.mrb[0].mxu0 %v2239
        %v2278 = vpop.f32.mrb[0].mxu0
        %v2279 = vadd.f32 0.0, %v2278
        %v2280 = vpop.f32.mrb[0].mxu0
        %v2281 = vpop.f32.mrb[0].mxu0
        %v2282 = vpop.f32.mrb[0].mxu0
        %2283 = vdwg.mxu0
        %2284 = vrot.lane.b32.xlu0 %v819, 104
        %v2285 = vpop.permute.xlu0 %2284
        %2286 = vrot.lane.b32.xlu0 %v819, 72
        %v2287 = vpop.permute.xlu0 %2286
        %v2289 = vsel %vm825, %v2285, 0
        %v2292 = vsel %vm825, %v2287, 0
        %2294 = vmatprep.subr.bf16.mxu0 0
        %2295 = vmatpush1.bf16.xpose.msra.mxu0 %v2292
        %2296 = vmatprep.subr.bf16.mxu0 0
        %2297 = vmatpush1.bf16.xpose.msra.mxu0 0
        %2298 = vmatprep.subr.bf16.mxu0 0
        %2299 = vmatpush1.bf16.xpose.msra.mxu0 0
        %2300 = vmatprep.subr.bf16.mxu0 0
        %2301 = vmatpush1.bf16.xpose.msra.mxu0 0
        %2302 = vmatprep.subr.bf16.mxu0 0
        %2303 = vmatpush1.bf16.xpose.msra.mxu0 0
        %2304 = vmatprep.subr.bf16.mxu0 0
        %2305 = vmatpush1.bf16.xpose.msra.mxu0 0
        %2306 = vmatprep.subr.bf16.mxu0 0
        %2307 = vmatpush1.bf16.xpose.msra.mxu0 0
        %2308 = vmatprep.subr.bf16.mxu0 0
        %2309 = vmatpush1.bf16.xpose.msra.mxu0 0
        %2310 = vmatprep.subr.bf16.mxu0 0
        %2311 = vmatpush1.bf16.xpose.msra.mxu0 0
        %2312 = vmatprep.subr.bf16.mxu0 0
        %2313 = vmatpush1.bf16.xpose.msra.mxu0 0
        %2314 = vmatprep.subr.bf16.mxu0 0
        %2315 = vmatpush1.bf16.xpose.msra.mxu0 0
        %2316 = vmatprep.subr.bf16.mxu0 0
        %2317 = vmatpush1.bf16.xpose.msra.mxu0 0
        %2318 = vmatprep.subr.bf16.mxu0 0
        %2319 = vmatpush1.bf16.xpose.msra.mxu0 0
        %2320 = vmatprep.subr.bf16.mxu0 0
        %2321 = vmatpush1.bf16.xpose.msra.mxu0 0
        %2322 = vmatprep.subr.bf16.mxu0 0
        %2323 = vmatpush1.bf16.xpose.msra.mxu0 0
        %2324 = vmatprep.subr.bf16.mxu0 0
        %2325 = vmatpush1.bf16.xpose.msra.mxu0 0
        %2326 = vmatprep.mubr.bf16.mxu0 0
        %2327 = vmatmul.mubr.bf16.gmra.mrb[0].mxu0 %v2289
        %v2328 = vpop.f32.mrb[0].mxu0
        %v2329 = vadd.f32 0.0, %v2328
        %v2330 = vpop.f32.mrb[0].mxu0
        %v2331 = vpop.f32.mrb[0].mxu0
        %v2332 = vpop.f32.mrb[0].mxu0
        %2333 = vdwg.mxu0
        %2334 = vrot.lane.b32.xlu0 %v820, 104
        %v2335 = vpop.permute.xlu0 %2334
        %2336 = vrot.lane.b32.xlu0 %v820, 72
        %v2337 = vpop.permute.xlu0 %2336
        %v2339 = vsel %vm825, %v2335, 0
        %v2342 = vsel %vm825, %v2337, 0
        %2344 = vmatprep.subr.bf16.mxu0 0
        %2345 = vmatpush1.bf16.xpose.msra.mxu0 %v2342
        %2346 = vmatprep.subr.bf16.mxu0 0
        %2347 = vmatpush1.bf16.xpose.msra.mxu0 0
        %2348 = vmatprep.subr.bf16.mxu0 0
        %2349 = vmatpush1.bf16.xpose.msra.mxu0 0
        %2350 = vmatprep.subr.bf16.mxu0 0
        %2351 = vmatpush1.bf16.xpose.msra.mxu0 0
        %2352 = vmatprep.subr.bf16.mxu0 0
        %2353 = vmatpush1.bf16.xpose.msra.mxu0 0
        %2354 = vmatprep.subr.bf16.mxu0 0
        %2355 = vmatpush1.bf16.xpose.msra.mxu0 0
        %2356 = vmatprep.subr.bf16.mxu0 0
        %2357 = vmatpush1.bf16.xpose.msra.mxu0 0
        %2358 = vmatprep.subr.bf16.mxu0 0
        %2359 = vmatpush1.bf16.xpose.msra.mxu0 0
        %2360 = vmatprep.subr.bf16.mxu0 0
        %2361 = vmatpush1.bf16.xpose.msra.mxu0 0
        %2362 = vmatprep.subr.bf16.mxu0 0
        %2363 = vmatpush1.bf16.xpose.msra.mxu0 0
        %2364 = vmatprep.subr.bf16.mxu0 0
        %2365 = vmatpush1.bf16.xpose.msra.mxu0 0
        %2366 = vmatprep.subr.bf16.mxu0 0
        %2367 = vmatpush1.bf16.xpose.msra.mxu0 0
        %2368 = vmatprep.subr.bf16.mxu0 0
        %2369 = vmatpush1.bf16.xpose.msra.mxu0 0
        %2370 = vmatprep.subr.bf16.mxu0 0
        %2371 = vmatpush1.bf16.xpose.msra.mxu0 0
        %2372 = vmatprep.subr.bf16.mxu0 0
        %2373 = vmatpush1.bf16.xpose.msra.mxu0 0
        %2374 = vmatprep.subr.bf16.mxu0 0
        %2375 = vmatpush1.bf16.xpose.msra.mxu0 0
        %2376 = vmatprep.mubr.bf16.mxu0 0
        %2377 = vmatmul.mubr.bf16.gmra.mrb[0].mxu0 %v2339
        %v2378 = vpop.f32.mrb[0].mxu0
        %v2379 = vadd.f32 0.0, %v2378
        %v2380 = vpop.f32.mrb[0].mxu0
        %v2381 = vpop.f32.mrb[0].mxu0
        %v2382 = vpop.f32.mrb[0].mxu0
        %2383 = vdwg.mxu0
        %2384 = vrot.lane.b32.xlu0 %v821, 104
        %v2385 = vpop.permute.xlu0 %2384
        %2386 = vrot.lane.b32.xlu0 %v821, 72
        %v2387 = vpop.permute.xlu0 %2386
        %v2389 = vsel %vm825, %v2385, 0
        %v2392 = vsel %vm825, %v2387, 0
        %2394 = vmatprep.subr.bf16.mxu0 0
        %2395 = vmatpush1.bf16.xpose.msra.mxu0 %v2392
        %2396 = vmatprep.subr.bf16.mxu0 0
        %2397 = vmatpush1.bf16.xpose.msra.mxu0 0
        %2398 = vmatprep.subr.bf16.mxu0 0
        %2399 = vmatpush1.bf16.xpose.msra.mxu0 0
        %2400 = vmatprep.subr.bf16.mxu0 0
        %2401 = vmatpush1.bf16.xpose.msra.mxu0 0
        %2402 = vmatprep.subr.bf16.mxu0 0
        %2403 = vmatpush1.bf16.xpose.msra.mxu0 0
        %2404 = vmatprep.subr.bf16.mxu0 0
        %2405 = vmatpush1.bf16.xpose.msra.mxu0 0
        %2406 = vmatprep.subr.bf16.mxu0 0
        %2407 = vmatpush1.bf16.xpose.msra.mxu0 0
        %2408 = vmatprep.subr.bf16.mxu0 0
        %2409 = vmatpush1.bf16.xpose.msra.mxu0 0
        %2410 = vmatprep.subr.bf16.mxu0 0
        %2411 = vmatpush1.bf16.xpose.msra.mxu0 0
        %2412 = vmatprep.subr.bf16.mxu0 0
        %2413 = vmatpush1.bf16.xpose.msra.mxu0 0
        %2414 = vmatprep.subr.bf16.mxu0 0
        %2415 = vmatpush1.bf16.xpose.msra.mxu0 0
        %2416 = vmatprep.subr.bf16.mxu0 0
        %2417 = vmatpush1.bf16.xpose.msra.mxu0 0
        %2418 = vmatprep.subr.bf16.mxu0 0
        %2419 = vmatpush1.bf16.xpose.msra.mxu0 0
        %2420 = vmatprep.subr.bf16.mxu0 0
        %2421 = vmatpush1.bf16.xpose.msra.mxu0 0
        %2422 = vmatprep.subr.bf16.mxu0 0
        %2423 = vmatpush1.bf16.xpose.msra.mxu0 0
        %2424 = vmatprep.subr.bf16.mxu0 0
        %2425 = vmatpush1.bf16.xpose.msra.mxu0 0
        %2426 = vmatprep.mubr.bf16.mxu0 0
        %2427 = vmatmul.mubr.bf16.gmra.mrb[0].mxu0 %v2389
        %v2428 = vpop.f32.mrb[0].mxu0
        %v2429 = vadd.f32 0.0, %v2428
        %v2430 = vpop.f32.mrb[0].mxu0
        %v2431 = vpop.f32.mrb[0].mxu0
        %v2432 = vpop.f32.mrb[0].mxu0
        %2433 = vdwg.mxu0
        %v2434 = vmul.f32 %v2279, 0.35355338
        %v2435 = vmul.f32 %v2329, 0.35355338
        %v2436 = vmul.f32 %v2379, 0.35355338
        %v2437 = vmul.f32 %v2429, 0.35355338
        %v2438 = vadd.f32 %v2434, %v1030
        %v2439 = vadd.f32 %v2435, %v1034
        %v2440 = vadd.f32 %v2436, %v1038
        %v2441 = vadd.f32 %v2437, %v1042
        %v2442 = vsel %vm825, %v2438, -inf
        %2443 = vmax.xlane.f32.xlu0 %v2442
        %v2444 = vpop.xlane.xlu0 %2443
        %v2445 = vsel %vm825, %v2439, -inf
        %2446 = vmax.xlane.f32.xlu0 %v2445
        %v2447 = vpop.xlane.xlu0 %2446
        %v2448 = vsel %vm825, %v2440, -inf
        %2449 = vmax.xlane.f32.xlu0 %v2448
        %v2450 = vpop.xlane.xlu0 %2449
        %v2451 = vsel %vm825, %v2441, -inf
        %2452 = vmax.xlane.f32.xlu0 %v2451
        %v2453 = vpop.xlane.xlu0 %2452
        %v2454 = vsub.f32 %v2438, %v2444
        %v2455 = vsub.f32 %v2439, %v2447
        %v2456 = vsub.f32 %v2440, %v2450
        %v2457 = vsub.f32 %v2441, %v2453
        %v2458 = vmul.f32 %v2454, 1.442695
        %v2459 = vpow.pop %v2458
        %v2460 = vmul.f32 %v2455, 1.442695
        %v2461 = vpow.pop %v2460
        %v2462 = vmul.f32 %v2456, 1.442695
        %v2463 = vpow.pop %v2462
        %v2464 = vmul.f32 %v2457, 1.442695
        %v2465 = vpow.pop %v2464
        %v2466 = vsel %vm825, %v2459, 0.0
        %2467 = vadd.xlane.f32.xlu0 %v2466
        %v2468 = vpop.xlane.xlu0 %2467
        %v2469 = vsel %vm825, %v2461, 0.0
        %2470 = vadd.xlane.f32.xlu0 %v2469
        %v2471 = vpop.xlane.xlu0 %2470
        %v2472 = vsel %vm825, %v2463, 0.0
        %2473 = vadd.xlane.f32.xlu0 %v2472
        %v2474 = vpop.xlane.xlu0 %2473
        %v2475 = vsel %vm825, %v2465, 0.0
        %2476 = vadd.xlane.f32.xlu0 %v2475
        %v2477 = vpop.xlane.xlu0 %2476
        %v2478 = vrcp.pop %v2468
        %v2479 = vrcp.pop %v2471
        %v2480 = vrcp.pop %v2474
        %v2481 = vrcp.pop %v2477
        %v2482 = vmul.f32 %v2459, %v2478
        %v2483 = vmul.f32 %v2461, %v2479
        %v2484 = vmul.f32 %v2463, %v2480
        %v2485 = vmul.f32 %v2465, %v2481
        %v2486 = vpack.c.bf16 %v2482, %v2482
        %v2487 = vpack.c.bf16 %v2483, %v2483
        %v2488 = vpack.c.bf16 %v2484, %v2484
        %v2489 = vpack.c.bf16 %v2485, %v2485
        %2490 = vrot.lane.b32.xlu0 %v818, 40
        %v2491 = vpop.permute.xlu0 %2490
        %v2493 = vsel %vm825, %v2486, 0
        %v2496 = vsel %vm1104, %v2491, 0
        %2498 = vmatprep.subr.bf16.mxu0 0
        %2499 = vmatpush1.bf16.msra.mxu0 %v2496
        %2500 = vmatprep.subr.bf16.mxu0 0
        %2501 = vmatpush1.bf16.msra.mxu0 0
        %2502 = vmatprep.subr.bf16.mxu0 0
        %2503 = vmatpush1.bf16.msra.mxu0 0
        %2504 = vmatprep.subr.bf16.mxu0 0
        %2505 = vmatpush1.bf16.msra.mxu0 0
        %2506 = vmatprep.subr.bf16.mxu0 0
        %2507 = vmatpush1.bf16.msra.mxu0 0
        %2508 = vmatprep.subr.bf16.mxu0 0
        %2509 = vmatpush1.bf16.msra.mxu0 0
        %2510 = vmatprep.subr.bf16.mxu0 0
        %2511 = vmatpush1.bf16.msra.mxu0 0
        %2512 = vmatprep.subr.bf16.mxu0 0
        %2513 = vmatpush1.bf16.msra.mxu0 0
        %2514 = vmatprep.subr.bf16.mxu0 0
        %2515 = vmatpush1.bf16.msra.mxu0 0
        %2516 = vmatprep.subr.bf16.mxu0 0
        %2517 = vmatpush1.bf16.msra.mxu0 0
        %2518 = vmatprep.subr.bf16.mxu0 0
        %2519 = vmatpush1.bf16.msra.mxu0 0
        %2520 = vmatprep.subr.bf16.mxu0 0
        %2521 = vmatpush1.bf16.msra.mxu0 0
        %2522 = vmatprep.subr.bf16.mxu0 0
        %2523 = vmatpush1.bf16.msra.mxu0 0
        %2524 = vmatprep.subr.bf16.mxu0 0
        %2525 = vmatpush1.bf16.msra.mxu0 0
        %2526 = vmatprep.subr.bf16.mxu0 0
        %2527 = vmatpush1.bf16.msra.mxu0 0
        %2528 = vmatprep.subr.bf16.mxu0 0
        %2529 = vmatpush1.bf16.msra.mxu0 0
        %2530 = vmatprep.mubr.bf16.mxu0 0
        %2531 = vmatmul.mubr.bf16.gmra.mrb[0].mxu0 %v2493
        %v2532 = vpop.f32.mrb[0].mxu0
        %v2533 = vadd.f32 0.0, %v2532
        %v2534 = vpop.f32.mrb[0].mxu0
        %v2535 = vpop.f32.mrb[0].mxu0
        %v2536 = vpop.f32.mrb[0].mxu0
        %2537 = vdwg.mxu0
        %2538 = vrot.lane.b32.xlu0 %v819, 40
        %v2539 = vpop.permute.xlu0 %2538
        %v2541 = vsel %vm825, %v2487, 0
        %v2544 = vsel %vm1104, %v2539, 0
        %2546 = vmatprep.subr.bf16.mxu0 0
        %2547 = vmatpush1.bf16.msra.mxu0 %v2544
        %2548 = vmatprep.subr.bf16.mxu0 0
        %2549 = vmatpush1.bf16.msra.mxu0 0
        %2550 = vmatprep.subr.bf16.mxu0 0
        %2551 = vmatpush1.bf16.msra.mxu0 0
        %2552 = vmatprep.subr.bf16.mxu0 0
        %2553 = vmatpush1.bf16.msra.mxu0 0
        %2554 = vmatprep.subr.bf16.mxu0 0
        %2555 = vmatpush1.bf16.msra.mxu0 0
        %2556 = vmatprep.subr.bf16.mxu0 0
        %2557 = vmatpush1.bf16.msra.mxu0 0
        %2558 = vmatprep.subr.bf16.mxu0 0
        %2559 = vmatpush1.bf16.msra.mxu0 0
        %2560 = vmatprep.subr.bf16.mxu0 0
        %2561 = vmatpush1.bf16.msra.mxu0 0
        %2562 = vmatprep.subr.bf16.mxu0 0
        %2563 = vmatpush1.bf16.msra.mxu0 0
        %2564 = vmatprep.subr.bf16.mxu0 0
        %2565 = vmatpush1.bf16.msra.mxu0 0
        %2566 = vmatprep.subr.bf16.mxu0 0
        %2567 = vmatpush1.bf16.msra.mxu0 0
        %2568 = vmatprep.subr.bf16.mxu0 0
        %2569 = vmatpush1.bf16.msra.mxu0 0
        %2570 = vmatprep.subr.bf16.mxu0 0
        %2571 = vmatpush1.bf16.msra.mxu0 0
        %2572 = vmatprep.subr.bf16.mxu0 0
        %2573 = vmatpush1.bf16.msra.mxu0 0
        %2574 = vmatprep.subr.bf16.mxu0 0
        %2575 = vmatpush1.bf16.msra.mxu0 0
        %2576 = vmatprep.subr.bf16.mxu0 0
        %2577 = vmatpush1.bf16.msra.mxu0 0
        %2578 = vmatprep.mubr.bf16.mxu0 0
        %2579 = vmatmul.mubr.bf16.gmra.mrb[0].mxu0 %v2541
        %v2580 = vpop.f32.mrb[0].mxu0
        %v2581 = vadd.f32 0.0, %v2580
        %v2582 = vpop.f32.mrb[0].mxu0
        %v2583 = vpop.f32.mrb[0].mxu0
        %v2584 = vpop.f32.mrb[0].mxu0
        %2585 = vdwg.mxu0
        %2586 = vrot.lane.b32.xlu0 %v820, 40
        %v2587 = vpop.permute.xlu0 %2586
        %v2589 = vsel %vm825, %v2488, 0
        %v2592 = vsel %vm1104, %v2587, 0
        %2594 = vmatprep.subr.bf16.mxu0 0
        %2595 = vmatpush1.bf16.msra.mxu0 %v2592
        %2596 = vmatprep.subr.bf16.mxu0 0
        %2597 = vmatpush1.bf16.msra.mxu0 0
        %2598 = vmatprep.subr.bf16.mxu0 0
        %2599 = vmatpush1.bf16.msra.mxu0 0
        %2600 = vmatprep.subr.bf16.mxu0 0
        %2601 = vmatpush1.bf16.msra.mxu0 0
        %2602 = vmatprep.subr.bf16.mxu0 0
        %2603 = vmatpush1.bf16.msra.mxu0 0
        %2604 = vmatprep.subr.bf16.mxu0 0
        %2605 = vmatpush1.bf16.msra.mxu0 0
        %2606 = vmatprep.subr.bf16.mxu0 0
        %2607 = vmatpush1.bf16.msra.mxu0 0
        %2608 = vmatprep.subr.bf16.mxu0 0
        %2609 = vmatpush1.bf16.msra.mxu0 0
        %2610 = vmatprep.subr.bf16.mxu0 0
        %2611 = vmatpush1.bf16.msra.mxu0 0
        %2612 = vmatprep.subr.bf16.mxu0 0
        %2613 = vmatpush1.bf16.msra.mxu0 0
        %2614 = vmatprep.subr.bf16.mxu0 0
        %2615 = vmatpush1.bf16.msra.mxu0 0
        %2616 = vmatprep.subr.bf16.mxu0 0
        %2617 = vmatpush1.bf16.msra.mxu0 0
        %2618 = vmatprep.subr.bf16.mxu0 0
        %2619 = vmatpush1.bf16.msra.mxu0 0
        %2620 = vmatprep.subr.bf16.mxu0 0
        %2621 = vmatpush1.bf16.msra.mxu0 0
        %2622 = vmatprep.subr.bf16.mxu0 0
        %2623 = vmatpush1.bf16.msra.mxu0 0
        %2624 = vmatprep.subr.bf16.mxu0 0
        %2625 = vmatpush1.bf16.msra.mxu0 0
        %2626 = vmatprep.mubr.bf16.mxu0 0
        %2627 = vmatmul.mubr.bf16.gmra.mrb[0].mxu0 %v2589
        %v2628 = vpop.f32.mrb[0].mxu0
        %v2629 = vadd.f32 0.0, %v2628
        %v2630 = vpop.f32.mrb[0].mxu0
        %v2631 = vpop.f32.mrb[0].mxu0
        %v2632 = vpop.f32.mrb[0].mxu0
        %2633 = vdwg.mxu0
        %2634 = vrot.lane.b32.xlu0 %v821, 40
        %v2635 = vpop.permute.xlu0 %2634
        %v2637 = vsel %vm825, %v2489, 0
        %v2640 = vsel %vm1104, %v2635, 0
        %2642 = vmatprep.subr.bf16.mxu0 0
        %2643 = vmatpush1.bf16.msra.mxu0 %v2640
        %2644 = vmatprep.subr.bf16.mxu0 0
        %2645 = vmatpush1.bf16.msra.mxu0 0
        %2646 = vmatprep.subr.bf16.mxu0 0
        %2647 = vmatpush1.bf16.msra.mxu0 0
        %2648 = vmatprep.subr.bf16.mxu0 0
        %2649 = vmatpush1.bf16.msra.mxu0 0
        %2650 = vmatprep.subr.bf16.mxu0 0
        %2651 = vmatpush1.bf16.msra.mxu0 0
        %2652 = vmatprep.subr.bf16.mxu0 0
        %2653 = vmatpush1.bf16.msra.mxu0 0
        %2654 = vmatprep.subr.bf16.mxu0 0
        %2655 = vmatpush1.bf16.msra.mxu0 0
        %2656 = vmatprep.subr.bf16.mxu0 0
        %2657 = vmatpush1.bf16.msra.mxu0 0
        %2658 = vmatprep.subr.bf16.mxu0 0
        %2659 = vmatpush1.bf16.msra.mxu0 0
        %2660 = vmatprep.subr.bf16.mxu0 0
        %2661 = vmatpush1.bf16.msra.mxu0 0
        %2662 = vmatprep.subr.bf16.mxu0 0
        %2663 = vmatpush1.bf16.msra.mxu0 0
        %2664 = vmatprep.subr.bf16.mxu0 0
        %2665 = vmatpush1.bf16.msra.mxu0 0
        %2666 = vmatprep.subr.bf16.mxu0 0
        %2667 = vmatpush1.bf16.msra.mxu0 0
        %2668 = vmatprep.subr.bf16.mxu0 0
        %2669 = vmatpush1.bf16.msra.mxu0 0
        %2670 = vmatprep.subr.bf16.mxu0 0
        %2671 = vmatpush1.bf16.msra.mxu0 0
        %2672 = vmatprep.subr.bf16.mxu0 0
        %2673 = vmatpush1.bf16.msra.mxu0 0
        %2674 = vmatprep.mubr.bf16.mxu0 0
        %2675 = vmatmul.mubr.bf16.gmra.mrb[0].mxu0 %v2637
        %v2676 = vpop.f32.mrb[0].mxu0
        %v2677 = vadd.f32 0.0, %v2676
        %v2678 = vpop.f32.mrb[0].mxu0
        %v2679 = vpop.f32.mrb[0].mxu0
        %v2680 = vpop.f32.mrb[0].mxu0
        %2681 = vdwg.mxu0
        %2686 = vrot.lane.b32.xlu0 %v2533, 24
        %v2687 = vpop.permute.xlu0 %2686
        %2688 = vrot.lane.b32.xlu0 %v2581, 24
        %v2689 = vpop.permute.xlu0 %2688
        %2690 = vrot.lane.b32.xlu0 %v2629, 24
        %v2691 = vpop.permute.xlu0 %2690
        %2692 = vrot.lane.b32.xlu0 %v2677, 24
        %v2693 = vpop.permute.xlu0 %2692
        %vm2698 = vcmask 261312
        %2699 = vst.msk [vmem:[#allocation3] sm:$0xff] %vm2698, %v2687
        %2700 = vst.msk [vmem:[#allocation3 + $0x8] sm:$0xff] %vm2698, %v2689
        %2701 = vst.msk [vmem:[#allocation3 + $0x10] sm:$0xff] %vm2698, %v2691
        %2702 = vst.msk [vmem:[#allocation3 + $0x18] sm:$0xff] %vm2698, %v2693
        %v2703 = vld [vmem:[#allocation3] sm:$0xff]
        %v2704 = vld [vmem:[#allocation3 + $0x8] sm:$0xff]
        %v2705 = vld [vmem:[#allocation3 + $0x10] sm:$0xff]
        %v2706 = vld [vmem:[#allocation3 + $0x18] sm:$0xff]
        %v2707 = vpack.c.bf16 %v2704, %v2703
        %v2708 = vpack.c.bf16 %v2706, %v2705
        %v2709 = vld [vmem:[%s697] sm:$0xf]
        %v2710 = vld [vmem:[%s697 + $0x4] sm:$0xf]
        %v2711 = vld [vmem:[%s697 + $0x8] sm:$0xf]
        %v2712 = vld [vmem:[%s697 + $0xc] sm:$0xf]
        %v2713 = vld [vmem:[%s700] sm:$0x1]
        %v2715 = vlaneseq
        %v2716 = vshrl.u32 %v2715, 7
        %v2717 = vsub.s32 0, %v2716
        %v2718 = vrot.slane %v2713, %v2717
        %v2724 = vunpack.c.l.b16 %v2709
        %v2725 = vunpack.c.l.b16 %v2710
        %v2726 = vunpack.c.l.b16 %v2711
        %v2727 = vunpack.c.l.b16 %v2712
        %v2728 = vpack.c.b16 %v2725, %v2724
        %v2729 = vpack.c.b16 %v2727, %v2726
        %v2733 = vsel %vm762, %v2707, 0
        %v2736 = vsel %vm762, %v2708, 0
        %2738 = vmatprep.subr.bf16.mxu0 0
        %2739 = vmatpush1.bf16.msra.mxu0 %v2728
        %2740 = vmatprep.subr.bf16.mxu0 0
        %2741 = vmatpush1.bf16.msra.mxu0 %v2729
        %2742 = vmatprep.subr.bf16.mxu0 0
        %2743 = vmatpush1.bf16.msra.mxu0 0
        %2744 = vmatprep.subr.bf16.mxu0 0
        %2745 = vmatpush1.bf16.msra.mxu0 0
        %2746 = vmatprep.subr.bf16.mxu0 0
        %2747 = vmatpush1.bf16.msra.mxu0 0
        %2748 = vmatprep.subr.bf16.mxu0 0
        %2749 = vmatpush1.bf16.msra.mxu0 0
        %2750 = vmatprep.subr.bf16.mxu0 0
        %2751 = vmatpush1.bf16.msra.mxu0 0
        %2752 = vmatprep.subr.bf16.mxu0 0
        %2753 = vmatpush1.bf16.msra.mxu0 0
        %2754 = vmatprep.subr.bf16.mxu0 0
        %2755 = vmatpush1.bf16.msra.mxu0 0
        %2756 = vmatprep.subr.bf16.mxu0 0
        %2757 = vmatpush1.bf16.msra.mxu0 0
        %2758 = vmatprep.subr.bf16.mxu0 0
        %2759 = vmatpush1.bf16.msra.mxu0 0
        %2760 = vmatprep.subr.bf16.mxu0 0
        %2761 = vmatpush1.bf16.msra.mxu0 0
        %2762 = vmatprep.subr.bf16.mxu0 0
        %2763 = vmatpush1.bf16.msra.mxu0 0
        %2764 = vmatprep.subr.bf16.mxu0 0
        %2765 = vmatpush1.bf16.msra.mxu0 0
        %2766 = vmatprep.subr.bf16.mxu0 0
        %2767 = vmatpush1.bf16.msra.mxu0 0
        %2768 = vmatprep.subr.bf16.mxu0 0
        %2769 = vmatpush1.bf16.msra.mxu0 0
        %2770 = vmatprep.mubr.bf16.mxu0 0
        %2771 = vmatmul.mubr.bf16.gmra.mrb[0].mxu0 %v2733
        %v2772 = vpop.f32.mrb[0].mxu0
        %v2773 = vadd.f32 %v2718, %v2772
        %v2774 = vpop.f32.mrb[0].mxu0
        %v2775 = vpop.f32.mrb[0].mxu0
        %v2776 = vadd.f32 %v2718, %v2775
        %v2777 = vpop.f32.mrb[0].mxu0
        %2778 = vmatprep.mubr.bf16.mxu0 0
        %2779 = vmatmul.mubr.bf16.gmra.mrb[0].mxu0 %v2736
        %v2780 = vpop.f32.mrb[0].mxu0
        %v2781 = vadd.f32 %v2718, %v2780
        %v2782 = vpop.f32.mrb[0].mxu0
        %v2783 = vpop.f32.mrb[0].mxu0
        %v2784 = vadd.f32 %v2718, %v2783
        %v2785 = vpop.f32.mrb[0].mxu0
        %2786 = vdwg.mxu0
        %v2787 = vadd.f32 %v729, %v2773
        %v2788 = vadd.f32 %v730, %v2776
        %v2789 = vadd.f32 %v731, %v2781
        %v2790 = vadd.f32 %v732, %v2784
        %v2791 = vld [vmem:[%s578] sm:$0x1]
        %v2792 = vld [vmem:[%s586] sm:$0x1]
        %v2793 = vsel %vm762, %v2787, 0.0
        %2794 = vadd.xlane.f32.xlu0 %v2793
        %v2795 = vpop.xlane.xlu0 %2794
        %v2796 = vsel %vm762, %v2788, 0.0
        %2797 = vadd.xlane.f32.xlu0 %v2796
        %v2798 = vpop.xlane.xlu0 %2797
        %v2799 = vsel %vm762, %v2789, 0.0
        %2800 = vadd.xlane.f32.xlu0 %v2799
        %v2801 = vpop.xlane.xlu0 %2800
        %v2802 = vsel %vm762, %v2790, 0.0
        %2803 = vadd.xlane.f32.xlu0 %v2802
        %v2804 = vpop.xlane.xlu0 %2803
        %v2805 = vrcp.pop 32.0
        %v2806 = vmul.f32 %v2795, %v2805
        %v2807 = vmul.f32 %v2798, %v2805
        %v2808 = vmul.f32 %v2801, %v2805
        %v2809 = vmul.f32 %v2804, %v2805
        %v2810 = vsub.f32 %v2787, %v2806
        %v2811 = vsub.f32 %v2788, %v2807
        %v2812 = vsub.f32 %v2789, %v2808
        %v2813 = vsub.f32 %v2790, %v2809
        %v2814 = vmul.f32 %v2810, %v2810
        %v2815 = vmul.f32 %v2811, %v2811
        %v2816 = vmul.f32 %v2812, %v2812
        %v2817 = vmul.f32 %v2813, %v2813
        %v2818 = vsel %vm762, %v2814, 0.0
        %2819 = vadd.xlane.f32.xlu0 %v2818
        %v2820 = vpop.xlane.xlu0 %2819
        %v2821 = vsel %vm762, %v2815, 0.0
        %2822 = vadd.xlane.f32.xlu0 %v2821
        %v2823 = vpop.xlane.xlu0 %2822
        %v2824 = vsel %vm762, %v2816, 0.0
        %2825 = vadd.xlane.f32.xlu0 %v2824
        %v2826 = vpop.xlane.xlu0 %2825
        %v2827 = vsel %vm762, %v2817, 0.0
        %2828 = vadd.xlane.f32.xlu0 %v2827
        %v2829 = vpop.xlane.xlu0 %2828
        %v2830 = vmul.f32 %v2820, %v2805
        %v2831 = vmul.f32 %v2823, %v2805
        %v2832 = vmul.f32 %v2826, %v2805
        %v2833 = vmul.f32 %v2829, %v2805
        %v2834 = vadd.f32 %v2830, 1e-12
        %v2835 = vadd.f32 %v2831, 1e-12
        %v2836 = vadd.f32 %v2832, 1e-12
        %v2837 = vadd.f32 %v2833, 1e-12
        %v2838 = vrsqrt.pop %v2834
        %v2839 = vrsqrt.pop %v2835
        %v2840 = vrsqrt.pop %v2836
        %v2841 = vrsqrt.pop %v2837
        %v2842 = vmul.f32 %v2810, %v2838
        %v2843 = vmul.f32 %v2811, %v2839
        %v2844 = vmul.f32 %v2812, %v2840
        %v2845 = vmul.f32 %v2813, %v2841
        %v2847 = vlaneseq
        %v2848 = vshrl.u32 %v2847, 7
        %v2849 = vsub.s32 0, %v2848
        %v2850 = vrot.slane %v2791, %v2849
        %v2852 = vmul.f32 %v2842, %v2850
        %v2853 = vmul.f32 %v2843, %v2850
        %v2854 = vmul.f32 %v2844, %v2850
        %v2855 = vmul.f32 %v2845, %v2850
        %v2857 = vlaneseq
        %v2858 = vshrl.u32 %v2857, 7
        %v2859 = vsub.s32 0, %v2858
        %v2860 = vrot.slane %v2792, %v2859
        %v2862 = vadd.f32 %v2852, %v2860
        %v2863 = vadd.f32 %v2853, %v2860
        %v2864 = vadd.f32 %v2854, %v2860
        %v2865 = vadd.f32 %v2855, %v2860
        %v2866 = vpack.c.bf16 %v2863, %v2862
        %v2867 = vpack.c.bf16 %v2865, %v2864
        %v2868 = vld [vmem:[%s595] sm:$0xf]
        %v2869 = vld [vmem:[%s595 + $0x4] sm:$0xf]
        %v2870 = vld [vmem:[%s595 + $0x8] sm:$0xf]
        %v2871 = vld [vmem:[%s595 + $0xc] sm:$0xf]
        %v2872 = vld [vmem:[%s603] sm:$0x1]
        %v2874 = vlaneseq
        %v2875 = vshrl.u32 %v2874, 7
        %v2876 = vsub.s32 0, %v2875
        %v2877 = vrot.slane %v2872, %v2876
        %v2883 = vunpack.c.l.b16 %v2868
        %v2884 = vunpack.c.l.b16 %v2869
        %v2885 = vunpack.c.l.b16 %v2870
        %v2886 = vunpack.c.l.b16 %v2871
        %v2887 = vpack.c.b16 %v2884, %v2883
        %v2888 = vpack.c.b16 %v2886, %v2885
        %v2892 = vsel %vm762, %v2866, 0
        %v2895 = vsel %vm762, %v2867, 0
        %2897 = vmatprep.subr.bf16.mxu0 0
        %2898 = vmatpush1.bf16.msra.mxu0 %v2887
        %2899 = vmatprep.subr.bf16.mxu0 0
        %2900 = vmatpush1.bf16.msra.mxu0 %v2888
        %2901 = vmatprep.subr.bf16.mxu0 0
        %2902 = vmatpush1.bf16.msra.mxu0 0
        %2903 = vmatprep.subr.bf16.mxu0 0
        %2904 = vmatpush1.bf16.msra.mxu0 0
        %2905 = vmatprep.subr.bf16.mxu0 0
        %2906 = vmatpush1.bf16.msra.mxu0 0
        %2907 = vmatprep.subr.bf16.mxu0 0
        %2908 = vmatpush1.bf16.msra.mxu0 0
        %2909 = vmatprep.subr.bf16.mxu0 0
        %2910 = vmatpush1.bf16.msra.mxu0 0
        %2911 = vmatprep.subr.bf16.mxu0 0
        %2912 = vmatpush1.bf16.msra.mxu0 0
        %2913 = vmatprep.subr.bf16.mxu0 0
        %2914 = vmatpush1.bf16.msra.mxu0 0
        %2915 = vmatprep.subr.bf16.mxu0 0
        %2916 = vmatpush1.bf16.msra.mxu0 0
        %2917 = vmatprep.subr.bf16.mxu0 0
        %2918 = vmatpush1.bf16.msra.mxu0 0
        %2919 = vmatprep.subr.bf16.mxu0 0
        %2920 = vmatpush1.bf16.msra.mxu0 0
        %2921 = vmatprep.subr.bf16.mxu0 0
        %2922 = vmatpush1.bf16.msra.mxu0 0
        %2923 = vmatprep.subr.bf16.mxu0 0
        %2924 = vmatpush1.bf16.msra.mxu0 0
        %2925 = vmatprep.subr.bf16.mxu0 0
        %2926 = vmatpush1.bf16.msra.mxu0 0
        %2927 = vmatprep.subr.bf16.mxu0 0
        %2928 = vmatpush1.bf16.msra.mxu0 0
        %2929 = vmatprep.mubr.bf16.mxu0 0
        %2930 = vmatmul.mubr.bf16.gmra.mrb[0].mxu0 %v2892
        %v2931 = vpop.f32.mrb[0].mxu0
        %v2932 = vadd.f32 %v2877, %v2931
        %v2933 = vpop.f32.mrb[0].mxu0
        %v2934 = vpop.f32.mrb[0].mxu0
        %v2935 = vadd.f32 %v2877, %v2934
        %v2936 = vpop.f32.mrb[0].mxu0
        %2937 = vmatprep.mubr.bf16.mxu0 0
        %2938 = vmatmul.mubr.bf16.gmra.mrb[0].mxu0 %v2895
        %v2939 = vpop.f32.mrb[0].mxu0
        %v2940 = vadd.f32 %v2877, %v2939
        %v2941 = vpop.f32.mrb[0].mxu0
        %v2942 = vpop.f32.mrb[0].mxu0
        %v2943 = vadd.f32 %v2877, %v2942
        %v2944 = vpop.f32.mrb[0].mxu0
        %2945 = vdwg.mxu0
        %v2946 = vmul.f32 %v2932, 0.5
        %v2947 = vmul.f32 %v2935, 0.5
        %v2948 = vmul.f32 %v2940, 0.5
        %v2949 = vmul.f32 %v2943, 0.5
        %v2950 = vmul.f32 %v2932, 0.044715
        %v2951 = vmul.f32 %v2935, 0.044715
        %v2952 = vmul.f32 %v2940, 0.044715
        %v2953 = vmul.f32 %v2943, 0.044715
        %v2954 = vmul.f32 %v2950, %v2932
        %v2955 = vmul.f32 %v2951, %v2935
        %v2956 = vmul.f32 %v2952, %v2940
        %v2957 = vmul.f32 %v2953, %v2943
        %v2958 = vmul.f32 %v2954, %v2932
        %v2959 = vmul.f32 %v2955, %v2935
        %v2960 = vmul.f32 %v2956, %v2940
        %v2961 = vmul.f32 %v2957, %v2943
        %v2962 = vadd.f32 %v2932, %v2958
        %v2963 = vadd.f32 %v2935, %v2959
        %v2964 = vadd.f32 %v2940, %v2960
        %v2965 = vadd.f32 %v2943, %v2961
        %v2966 = vmul.f32 %v2962, 0.7978846
        %v2967 = vmul.f32 %v2963, 0.7978846
        %v2968 = vmul.f32 %v2964, 0.7978846
        %v2969 = vmul.f32 %v2965, 0.7978846
        %v2970 = vtanh.pop %v2966
        %v2971 = vtanh.pop %v2967
        %v2972 = vtanh.pop %v2968
        %v2973 = vtanh.pop %v2969
        %v2974 = vadd.f32 %v2970, 1.0
        %v2975 = vadd.f32 %v2971, 1.0
        %v2976 = vadd.f32 %v2972, 1.0
        %v2977 = vadd.f32 %v2973, 1.0
        %v2978 = vmul.f32 %v2946, %v2974
        %v2979 = vmul.f32 %v2947, %v2975
        %v2980 = vmul.f32 %v2948, %v2976
        %v2981 = vmul.f32 %v2949, %v2977
        %v2982 = vpack.c.bf16 %v2979, %v2978
        %v2983 = vpack.c.bf16 %v2981, %v2980
        %v2984 = vld [vmem:[%s705] sm:$0xf]
        %v2985 = vld [vmem:[%s705 + $0x4] sm:$0xf]
        %v2986 = vld [vmem:[%s705 + $0x8] sm:$0xf]
        %v2987 = vld [vmem:[%s705 + $0xc] sm:$0xf]
        %v2988 = vld [vmem:[%s705 + $0x10] sm:$0xf]
        %v2989 = vld [vmem:[%s705 + $0x14] sm:$0xf]
        %v2990 = vld [vmem:[%s705 + $0x18] sm:$0xf]
        %v2991 = vld [vmem:[%s705 + $0x1c] sm:$0xf]
        %v2992 = vld [vmem:[%s708] sm:$0x1]
        %v2994 = vlaneseq
        %v2995 = vshrl.u32 %v2994, 7
        %v2996 = vsub.s32 0, %v2995
        %v2997 = vrot.slane %v2992, %v2996
        %v3007 = vunpack.c.l.b16 %v2984
        %v3008 = vunpack.c.l.b16 %v2985
        %v3009 = vunpack.c.l.b16 %v2986
        %v3010 = vunpack.c.l.b16 %v2987
        %v3011 = vunpack.c.l.b16 %v2988
        %v3012 = vunpack.c.l.b16 %v2989
        %v3013 = vunpack.c.l.b16 %v2990
        %v3014 = vunpack.c.l.b16 %v2991
        %v3015 = vpack.c.b16 %v3008, %v3007
        %v3016 = vpack.c.b16 %v3010, %v3009
        %v3017 = vpack.c.b16 %v3012, %v3011
        %v3018 = vpack.c.b16 %v3014, %v3013
        %vm3023 = vcmask 523264
        %v3025 = vsel %vm3023, %v2982, 0
        %v3028 = vsel %vm3023, %v2983, 0
        %3030 = vmatprep.subr.bf16.mxu0 0
        %3031 = vmatpush1.bf16.msra.mxu0 %v3015
        %3032 = vmatprep.subr.bf16.mxu0 0
        %3033 = vmatpush1.bf16.msra.mxu0 %v3016
        %3034 = vmatprep.subr.bf16.mxu0 0
        %3035 = vmatpush1.bf16.msra.mxu0 %v3017
        %3036 = vmatprep.subr.bf16.mxu0 0
        %3037 = vmatpush1.bf16.msra.mxu0 %v3018
        %3038 = vmatprep.subr.bf16.mxu0 0
        %3039 = vmatpush1.bf16.msra.mxu0 0
        %3040 = vmatprep.subr.bf16.mxu0 0
        %3041 = vmatpush1.bf16.msra.mxu0 0
        %3042 = vmatprep.subr.bf16.mxu0 0
        %3043 = vmatpush1.bf16.msra.mxu0 0
        %3044 = vmatprep.subr.bf16.mxu0 0
        %3045 = vmatpush1.bf16.msra.mxu0 0
        %3046 = vmatprep.subr.bf16.mxu0 0
        %3047 = vmatpush1.bf16.msra.mxu0 0
        %3048 = vmatprep.subr.bf16.mxu0 0
        %3049 = vmatpush1.bf16.msra.mxu0 0
        %3050 = vmatprep.subr.bf16.mxu0 0
        %3051 = vmatpush1.bf16.msra.mxu0 0
        %3052 = vmatprep.subr.bf16.mxu0 0
        %3053 = vmatpush1.bf16.msra.mxu0 0
        %3054 = vmatprep.subr.bf16.mxu0 0
        %3055 = vmatpush1.bf16.msra.mxu0 0
        %3056 = vmatprep.subr.bf16.mxu0 0
        %3057 = vmatpush1.bf16.msra.mxu0 0
        %3058 = vmatprep.subr.bf16.mxu0 0
        %3059 = vmatpush1.bf16.msra.mxu0 0
        %3060 = vmatprep.subr.bf16.mxu0 0
        %3061 = vmatpush1.bf16.msra.mxu0 0
        %3062 = vmatprep.mubr.bf16.mxu0 0
        %3063 = vmatmul.mubr.bf16.gmra.mrb[0].mxu0 %v3025
        %v3064 = vpop.f32.mrb[0].mxu0
        %v3065 = vadd.f32 %v2997, %v3064
        %v3066 = vpop.f32.mrb[0].mxu0
        %v3067 = vpop.f32.mrb[0].mxu0
        %v3068 = vadd.f32 %v2997, %v3067
        %v3069 = vpop.f32.mrb[0].mxu0
        %3070 = vmatprep.mubr.bf16.mxu0 0
        %3071 = vmatmul.mubr.bf16.gmra.mrb[0].mxu0 %v3028
        %v3072 = vpop.f32.mrb[0].mxu0
        %v3073 = vadd.f32 %v2997, %v3072
        %v3074 = vpop.f32.mrb[0].mxu0
        %v3075 = vpop.f32.mrb[0].mxu0
        %v3076 = vadd.f32 %v2997, %v3075
        %v3077 = vpop.f32.mrb[0].mxu0
        %3078 = vdwg.mxu0
        %v3079 = vadd.f32 %v2862, %v3065
        %v3080 = vadd.f32 %v2863, %v3068
        %v3081 = vadd.f32 %v2864, %v3073
        %v3082 = vadd.f32 %v2865, %v3076
        %v3083 = vld [vmem:[%s711] sm:$0x1]
        %v3084 = vld [vmem:[%s714] sm:$0x1]
        %v3085 = vsel %vm762, %v3079, 0.0
        %3086 = vadd.xlane.f32.xlu0 %v3085
        %v3087 = vpop.xlane.xlu0 %3086
        %v3088 = vsel %vm762, %v3080, 0.0
        %3089 = vadd.xlane.f32.xlu0 %v3088
        %v3090 = vpop.xlane.xlu0 %3089
        %v3091 = vsel %vm762, %v3081, 0.0
        %3092 = vadd.xlane.f32.xlu0 %v3091
        %v3093 = vpop.xlane.xlu0 %3092
        %v3094 = vsel %vm762, %v3082, 0.0
        %3095 = vadd.xlane.f32.xlu0 %v3094
        %v3096 = vpop.xlane.xlu0 %3095
        %v3097 = vmul.f32 %v3087, %v2805
        %v3098 = vmul.f32 %v3090, %v2805
        %v3099 = vmul.f32 %v3093, %v2805
        %v3100 = vmul.f32 %v3096, %v2805
        %v3101 = vsub.f32 %v3079, %v3097
        %v3102 = vsub.f32 %v3080, %v3098
        %v3103 = vsub.f32 %v3081, %v3099
        %v3104 = vsub.f32 %v3082, %v3100
        %v3105 = vmul.f32 %v3101, %v3101
        %v3106 = vmul.f32 %v3102, %v3102
        %v3107 = vmul.f32 %v3103, %v3103
        %v3108 = vmul.f32 %v3104, %v3104
        %v3109 = vsel %vm762, %v3105, 0.0
        %3110 = vadd.xlane.f32.xlu0 %v3109
        %v3111 = vpop.xlane.xlu0 %3110
        %v3112 = vsel %vm762, %v3106, 0.0
        %3113 = vadd.xlane.f32.xlu0 %v3112
        %v3114 = vpop.xlane.xlu0 %3113
        %v3115 = vsel %vm762, %v3107, 0.0
        %3116 = vadd.xlane.f32.xlu0 %v3115
        %v3117 = vpop.xlane.xlu0 %3116
        %v3118 = vsel %vm762, %v3108, 0.0
        %3119 = vadd.xlane.f32.xlu0 %v3118
        %v3120 = vpop.xlane.xlu0 %3119
        %v3121 = vmul.f32 %v3111, %v2805
        %v3122 = vmul.f32 %v3114, %v2805
        %v3123 = vmul.f32 %v3117, %v2805
        %v3124 = vmul.f32 %v3120, %v2805
        %v3125 = vadd.f32 %v3121, 1e-12
        %v3126 = vadd.f32 %v3122, 1e-12
        %v3127 = vadd.f32 %v3123, 1e-12
        %v3128 = vadd.f32 %v3124, 1e-12
        %v3129 = vrsqrt.pop %v3125
        %v3130 = vrsqrt.pop %v3126
        %v3131 = vrsqrt.pop %v3127
        %v3132 = vrsqrt.pop %v3128
        %v3133 = vmul.f32 %v3101, %v3129
        %v3134 = vmul.f32 %v3102, %v3130
        %v3135 = vmul.f32 %v3103, %v3131
        %v3136 = vmul.f32 %v3104, %v3132
        %v3138 = vlaneseq
        %v3139 = vshrl.u32 %v3138, 7
        %v3140 = vsub.s32 0, %v3139
        %v3141 = vrot.slane %v3083, %v3140
        %v3143 = vmul.f32 %v3133, %v3141
        %v3144 = vmul.f32 %v3134, %v3141
        %v3145 = vmul.f32 %v3135, %v3141
        %v3146 = vmul.f32 %v3136, %v3141
        %v3148 = vlaneseq
        %v3149 = vshrl.u32 %v3148, 7
        %v3150 = vsub.s32 0, %v3149
        %v3151 = vrot.slane %v3084, %v3150
        %v3153 = vadd.f32 %v3143, %v3151
        %v3154 = vadd.f32 %v3144, %v3151
        %v3155 = vadd.f32 %v3145, %v3151
        %v3156 = vadd.f32 %v3146, %v3151
        %3157 = vst.msk [vmem:[#allocation2] sm:$0xff] %vm762, %v3153
        %3158 = vst.msk [vmem:[#allocation2 + $0x8] sm:$0xff] %vm762, %v3154
        %3159 = vst.msk [vmem:[#allocation2 + $0x10] sm:$0xff] %vm762, %v3155
        %3160 = vst.msk [vmem:[#allocation2 + $0x18] sm:$0xff] %vm762, %v3156
        %p3161 = scmp.eq.s32.totalorder %s33, 1
        // Predicated region
        $region101: #{tpu_custom_call.1} parent=75 // pred_check
          %p3162 = pneg %p3161
        $region102: #{tpu_custom_call.1} parent=75 // pred_check_branch
          %3164 = sbr.rel (%p3162) target = $region104
        $region103: #{tpu_custom_call.1} parent=75 // pred_region
          %3165 = vst.msk [vmem:[#allocation13] sm:$0xff] %vm762, %v3153
          %3166 = vst.msk [vmem:[#allocation13 + $0x8] sm:$0xff] %vm762, %v3154
          %3167 = vst.msk [vmem:[#allocation13 + $0x10] sm:$0xff] %vm762, %v3155
          %3168 = vst.msk [vmem:[#allocation13 + $0x18] sm:$0xff] %vm762, %v3156
        $region104: #{tpu_custom_call.1} parent=75 // pred_fallthru
          _
        // Predicated region
        $region105: #{tpu_custom_call.1} parent=75 // pred_check
          %p3169 = pneg %p400
        $region106: #{tpu_custom_call.1} parent=75 // pred_check_branch
          %3171 = sbr.rel (%p3169) target = $region108
        $region107: #{tpu_custom_call.1} parent=75 // pred_region
          %s3173 = ssub.s32 512, 512
          %3174 = vsyncadd [#allocation6], %s3173
          %s3175 = sshll.u32 [#allocation13], 4
          %s3176 = int_to_ptr.vmem [resolvable:$true] %s3175
          %3181 = dma.vmem_to_hbm [thread:$0]  %s3176, 512, %s14, [#allocation6], 128, 128, 8
        $region108: #{tpu_custom_call.1} parent=75 // pred_fallthru
          _
        // Predicated region
        $region109: #{tpu_custom_call.1} parent=75 // pred_check
          %p3182 = pneg %p400
        $region110: #{tpu_custom_call.1} parent=75 // pred_check_branch
          %3184 = sbr.rel (%p3182) target = $region112
        $region111: #{tpu_custom_call.1} parent=75 // pred_region
          %3185 = dma.done [#allocation6], 512
        $region112: #{tpu_custom_call.1} parent=75 // pred_fallthru
          _
      $region76: #{tpu_custom_call.1} parent=5 // pred_fallthru
        _
      %p3186 = scmp.le.s32.totalorder 2, %s28
      // Predicated region
      $region113: #{tpu_custom_call.1} parent=5 // pred_check
        %p3187 = pneg %p3186
      $region114: #{tpu_custom_call.1} parent=5 // pred_check_branch
        %3189 = sbr.rel (%p3187) target = $region116
      $region115: #{tpu_custom_call.1} parent=5 // pred_region
        %s3190 = ssub.s32 %s28, 2
      $region116: #{tpu_custom_call.1} parent=5 // pred_fallthru
        _
    $region6: #{tpu_custom_call.1} parent=1 // loop_footer
      %s32 = sadd.s32 1, %s28
    $region7: #{tpu_custom_call.1} parent=1 // loop_footer_branch
      %27 = sbr.rel target = $region3
    $region8: #{tpu_custom_call.1} parent=1 // loop_exit
      _
    %3191 = vsyncpa [#allocation5], 1
    %s3192 = scalar_lea.sflag [#allocation5], 1
    %3193 = vsyncpa %s3192, 1
    %3194 = vsyncpa [#allocation8], 1
    %s3195 = scalar_lea.sflag [#allocation8], 1
    %3196 = vsyncpa %s3195, 1
    %3197 = vsyncpa [#allocation11], 1
    %s3198 = scalar_lea.sflag [#allocation11], 1
    %3199 = vsyncpa %s3198, 1
    %3200 = vsyncpa [#allocation6], 1
    %s3201 = scalar_lea.sflag [#allocation6], 1
    %3202 = vsyncpa %s3201, 1

</llo_original>
